<compile_context>
chip_gen: v7x
topology: tpu7x:2x2x1
jax: 0.10.0
libtpu: 0.0.40
codegen_flags: <defaults>
</compile_context>

<pallas_src>
import numpy as np
import jax
import jax.numpy as jnp
from jax.experimental import pallas as pl
from jax.experimental.pallas import tpu as pltpu

EPS = 1e-5


def _make_resblock_kernel(N, H, W, C):
    L = W * C              # folded lane width: lane = w*C + c
    LP = L + 4 * C         # padded lanes: [dead C | reflect-left C | L | reflect-right C | dead C]
    NSHIFT = 4 * C - 1     # number of distinct lane shifts for a 3x3 conv in this layout
    inv_m = 1.0 / (N * H * W)

    def kernel(x_ref,
               g1_ref, b1_ref, wv1_ref, ws1_ref, cb1_ref,
               g2_ref, b2_ref, wv2_ref, ws2_ref, cb2_ref,
               o_ref):
        # channel selector sel[c, l] = 1.0 iff (lane l) % C == c, built from 2-D iota
        lane_ch = jax.lax.broadcasted_iota(jnp.int32, (C, L), 1) % C
        row_ch = jax.lax.broadcasted_iota(jnp.int32, (C, L), 0)
        sel = (lane_ch == row_ch).astype(jnp.float32)                       # (C, L)

        def layer(act, g_ref, b_ref, wv_ref, ws_ref, cb_ref):
            # act: (N, H, L) f32, folded NHWC.
            # ---- train-mode BN statistics (biased var), folded into scale/shift ----
            rs = jnp.sum(jnp.sum(act, axis=0), axis=0, keepdims=True)       # (1, L)
            rq = jnp.sum(jnp.sum(act * act, axis=0), axis=0, keepdims=True) # (1, L)
            csum = jnp.sum(sel * rs, axis=1, keepdims=True)                 # (C, 1)
            csq = jnp.sum(sel * rq, axis=1, keepdims=True)                  # (C, 1)
            mean = csum * inv_m
            var = csq * inv_m - mean * mean
            s_col = g_ref[...] * jax.lax.rsqrt(var + EPS)                   # (C, 1) BN scale
            t_col = b_ref[...] - mean * s_col                               # (C, 1) BN shift
            s_lane = jnp.sum(sel * s_col, axis=0, keepdims=True)            # (1, L)
            # conv bias with BN shift folded in: bias[o] = cb[o] + sum_{kh,kw,i} w*t[i]
            bias_lane = cb_ref[...] + jnp.sum(ws_ref[...] * t_col, axis=0, keepdims=True)

            # ---- BN scale folded into the activation (commutes with reflection pad) ----
            xs = act * s_lane                                               # (N, H, L)

            # ---- reflection pad (1 px), built functionally from in-register values ----
            left = xs[:, :, C:2 * C]                      # column w=1   (-> padded col 0)
            right = xs[:, :, (W - 2) * C:(W - 1) * C]     # column w=W-2 (-> padded col W+1)
            xw = jnp.concatenate([left, left, xs, right, right], axis=2)    # (N, H, LP)
            xp = jnp.concatenate([xw[:, 1:2, :], xw, xw[:, H - 2:H - 1, :]], axis=1)

            # ---- 3x3 conv: 3*(4C-1) masked-per-lane FMAs (pure VPU; no MXU at C=4) ----
            wv = wv_ref[...]                                                # (3, NSHIFT, L)
            acc = jnp.zeros((N, H, L), jnp.float32) + bias_lane
            for kh in range(3):
                rows = xp[:, kh:kh + H, :]                                  # (N, H, LP)
                for sidx in range(NSHIFT):
                    start = sidx + 1                      # lane window for this shift
                    w_vec = wv[kh:kh + 1, sidx:sidx + 1, :]                 # (1, 1, L)
                    acc = acc + w_vec * rows[:, :, start:start + L]
            return jnp.maximum(acc, 0.0)                                    # ReLU

        x = x_ref[...]
        y1 = layer(x, g1_ref, b1_ref, wv1_ref, ws1_ref, cb1_ref)
        y2 = layer(y1, g2_ref, b2_ref, wv2_ref, ws2_ref, cb2_ref)
        o_ref[...] = x + y2                               # residual add, lane-dense store

    return kernel


def _conv_constants(C, W):
    """Constant selector tensors (numpy) for the folded (w*C + c) lane layout."""
    L = W * C
    NSHIFT = 4 * C - 1
    # A[sidx, l, kw, i, o] = 1 iff l % C == o and kw*C + i - o == sidx - (C-1)
    A = np.zeros((NSHIFT, L, 3, C, C), np.float32)
    for l in range(L):
        o = l % C
        for kw in range(3):
            for i in range(C):
                sidx = kw * C + i - o + (C - 1)
                A[sidx, l, kw, i, o] = 1.0
    sel = np.zeros((C, L), np.float32)
    for l in range(L):
        sel[l % C, l] = 1.0
    return A, sel


def _layer_params(w_oihw, cb, A_np, sel_np):
    """Precompute per-lane conv weight vectors / bias helpers in the wrapper (pure XLA)."""
    C = w_oihw.shape[0]
    wk = jnp.transpose(w_oihw, (2, 3, 1, 0)).astype(jnp.float32)        # (3, 3, Cin, Cout)
    wv = jnp.einsum('slkio,hkio->hsl', A_np, wk)                        # (3, NSHIFT, L)
    wsum = jnp.sum(wk, axis=(0, 1))                                     # (Cin, Cout)
    ws_lane = wsum @ jnp.asarray(sel_np)                                # (Cin, L)
    cb_lane = cb.reshape(1, C) @ jnp.asarray(sel_np)                    # (1, L)
    return wv, ws_lane, cb_lane


def residual_block(x_nchw, params):
    """x_nchw: (N, C, H, W) float32 -> (N, C, H, W) float32."""
    x = jnp.transpose(x_nchw, (0, 2, 3, 1)).astype(jnp.float32)         # NCHW -> NHWC
    N, H, W, C = x.shape
    L = W * C
    NSHIFT = 4 * C - 1
    x3 = x.reshape(N, H, L)                                             # fold W into lanes

    A_np, sel_np = _conv_constants(C, W)
    wv1, ws1, cb1 = _layer_params(params["w1"], params["cb1"], A_np, sel_np)
    wv2, ws2, cb2 = _layer_params(params["w2"], params["cb2"], A_np, sel_np)
    g1 = params["g1"].reshape(C, 1).astype(jnp.float32)
    b1 = params["b1"].reshape(C, 1).astype(jnp.float32)
    g2 = params["g2"].reshape(C, 1).astype(jnp.float32)
    b2 = params["b2"].reshape(C, 1).astype(jnp.float32)

    kernel = _make_resblock_kernel(N, H, W, C)

    full3 = pl.BlockSpec((N, H, L), lambda i: (0, 0, 0))
    col_c = pl.BlockSpec((C, 1), lambda i: (0, 0))
    wv_spec = pl.BlockSpec((3, NSHIFT, L), lambda i: (0, 0, 0))
    lane_c = pl.BlockSpec((C, L), lambda i: (0, 0))
    lane_1 = pl.BlockSpec((1, L), lambda i: (0, 0))

    out = pl.pallas_call(
        kernel,
        out_shape=jax.ShapeDtypeStruct((N, H, L), jnp.float32),
        grid=(1,),
        in_specs=[full3,
                  col_c, col_c, wv_spec, lane_c, lane_1,
                  col_c, col_c, wv_spec, lane_c, lane_1],
        out_specs=full3,
        compiler_params=pltpu.CompilerParams(
            dimension_semantics=("arbitrary",)),
    )(x3, g1, b1, wv1, ws1, cb1, g2, b2, wv2, ws2, cb2)

    out = out.reshape(N, H, W, C)
    return jnp.transpose(out, (0, 3, 1, 2))                             # NHWC -> NCHW


def _reference(x, p):
    """Pure-JAX reference mirroring the PyTorch ResidualBlock (NCHW)."""
    def bn(v, g, b):
        mean = v.mean(axis=(0, 2, 3), keepdims=True)
        var = ((v - mean) ** 2).mean(axis=(0, 2, 3), keepdims=True)
        return (v - mean) * jax.lax.rsqrt(var + EPS) * g.reshape(1, -1, 1, 1) \
            + b.reshape(1, -1, 1, 1)

    def conv(v, w, b):
        vp = jnp.pad(v, ((0, 0), (0, 0), (1, 1), (1, 1)), mode="reflect")
        y = jax.lax.conv_general_dilated(
            vp, w, window_strides=(1, 1), padding="VALID",
            dimension_numbers=("NCHW", "OIHW", "NCHW"))
        return y + b.reshape(1, -1, 1, 1)

    y = jnp.maximum(conv(bn(x, p["g1"], p["b1"]), p["w1"], p["cb1"]), 0.0)
    y = jnp.maximum(conv(bn(y, p["g2"], p["b2"]), p["w2"], p["cb2"]), 0.0)
    return x + y


if __name__ == "__main__":
    key = jax.random.PRNGKey(0)
    N, C, H, W = 2, 4, 16, 16
    ks = jax.random.split(key, 9)

    x = jax.random.normal(ks[0], (N, C, H, W), jnp.float32)
    params = {
        "g1": 1.0 + 0.1 * jax.random.normal(ks[1], (C,), jnp.float32),
        "b1": 0.1 * jax.random.normal(ks[2], (C,), jnp.float32),
        "w1": 0.2 * jax.random.normal(ks[3], (C, C, 3, 3), jnp.float32),
        "cb1": 0.1 * jax.random.normal(ks[4], (C,), jnp.float32),
        "g2": 1.0 + 0.1 * jax.random.normal(ks[5], (C,), jnp.float32),
        "b2": 0.1 * jax.random.normal(ks[6], (C,), jnp.float32),
        "w2": 0.2 * jax.random.normal(ks[7], (C, C, 3, 3), jnp.float32),
        "cb2": 0.1 * jax.random.normal(ks[8], (C,), jnp.float32),
    }

    out = jax.block_until_ready(residual_block(x, params))
    ref = jax.block_until_ready(_reference(x, params))

    assert out.shape == x.shape and out.dtype == jnp.float32
    max_err = float(jnp.max(jnp.abs(out - ref)))
    if max_err < 1e-4:
        print("KERNEL_OK")
    else:
        print(f"MISMATCH max_abs_err={max_err}")
</pallas_src>

<mosaic_0001>
module attributes {stable_mosaic.version = 11 : i64} {
  func.func @kernel(%arg0: i32, %arg1: memref<2x16x64xf32, #tpu.memory_space<vmem>>, %arg2: memref<4x1xf32, #tpu.memory_space<vmem>>, %arg3: memref<4x1xf32, #tpu.memory_space<vmem>>, %arg4: memref<3x15x64xf32, #tpu.memory_space<vmem>>, %arg5: memref<4x64xf32, #tpu.memory_space<vmem>>, %arg6: memref<1x64xf32, #tpu.memory_space<vmem>>, %arg7: memref<4x1xf32, #tpu.memory_space<vmem>>, %arg8: memref<4x1xf32, #tpu.memory_space<vmem>>, %arg9: memref<3x15x64xf32, #tpu.memory_space<vmem>>, %arg10: memref<4x64xf32, #tpu.memory_space<vmem>>, %arg11: memref<1x64xf32, #tpu.memory_space<vmem>>, %arg12: memref<2x16x64xf32, #tpu.memory_space<vmem>>) attributes {dimension_semantics = [#tpu.dimension_semantics<arbitrary>], iteration_bounds = array<i64: 1>, scalar_prefetch = 0 : i64, scratch_operands = 0 : i64, tpu.core_type = #tpu.core_type<tc>, window_params = [{pipeline_mode = #tpu.pipeline_mode<synchronous>, transform_indices = @transform_0, window_bounds = array<i64: 2, 16, 64>}, {pipeline_mode = #tpu.pipeline_mode<synchronous>, transform_indices = @transform_1, window_bounds = array<i64: 4, 1>}, {pipeline_mode = #tpu.pipeline_mode<synchronous>, transform_indices = @transform_2, window_bounds = array<i64: 4, 1>}, {pipeline_mode = #tpu.pipeline_mode<synchronous>, transform_indices = @transform_3, window_bounds = array<i64: 3, 15, 64>}, {pipeline_mode = #tpu.pipeline_mode<synchronous>, transform_indices = @transform_4, window_bounds = array<i64: 4, 64>}, {pipeline_mode = #tpu.pipeline_mode<synchronous>, transform_indices = @transform_5, window_bounds = array<i64: 1, 64>}, {pipeline_mode = #tpu.pipeline_mode<synchronous>, transform_indices = @transform_6, window_bounds = array<i64: 4, 1>}, {pipeline_mode = #tpu.pipeline_mode<synchronous>, transform_indices = @transform_7, window_bounds = array<i64: 4, 1>}, {pipeline_mode = #tpu.pipeline_mode<synchronous>, transform_indices = @transform_8, window_bounds = array<i64: 3, 15, 64>}, {pipeline_mode = #tpu.pipeline_mode<synchronous>, transform_indices = @transform_9, window_bounds = array<i64: 4, 64>}, {pipeline_mode = #tpu.pipeline_mode<synchronous>, transform_indices = @transform_10, window_bounds = array<i64: 1, 64>}, {pipeline_mode = #tpu.pipeline_mode<synchronous>, transform_indices = @transform_11, window_bounds = array<i64: 2, 16, 64>}]} {
    %0 = tpu.iota {dimensions = array<i32: 1>} : vector<4x64xi32>
    %c4_i32 = arith.constant 4 : i32
    %c0_i32 = arith.constant 0 : i32
    %1 = arith.cmpi eq, %c4_i32, %c0_i32 : i32
    %c1_i32 = arith.constant 1 : i32
    %2 = arith.select %1, %c1_i32, %c4_i32 : i32
    %3 = vector.broadcast %2 : i32 to vector<4x64xi32>
    %4 = arith.remsi %0, %3 : vector<4x64xi32>
    %c0_i32_0 = arith.constant 0 : i32
    %5 = vector.broadcast %c0_i32_0 : i32 to vector<4x64xi32>
    %6 = arith.cmpi ne, %4, %5 : vector<4x64xi32>
    %c0_i32_1 = arith.constant 0 : i32
    %7 = vector.broadcast %c0_i32_1 : i32 to vector<4x64xi32>
    %8 = arith.cmpi slt, %4, %7 : vector<4x64xi32>
    %c0_i32_2 = arith.constant 0 : i32
    %9 = arith.cmpi slt, %2, %c0_i32_2 : i32
    %10 = vector.broadcast %9 : i1 to vector<4x64xi1>
    %11 = vector.broadcast %10 : vector<4x64xi1> to vector<4x64xi1>
    %12 = arith.xori %8, %11 : vector<4x64xi1>
    %13 = arith.andi %12, %6 : vector<4x64xi1>
    %14 = vector.broadcast %2 : i32 to vector<4x64xi32>
    %15 = arith.addi %4, %14 : vector<4x64xi32>
    %16 = arith.select %13, %15, %4 : vector<4x64xi1>, vector<4x64xi32>
    %17 = tpu.iota {dimensions = array<i32: 0>} : vector<4x64xi32>
    %18 = arith.cmpi eq, %16, %17 : vector<4x64xi32>
    %19 = arith.extui %18 : vector<4x64xi1> to vector<4x64xi32>
    %20 = arith.sitofp %19 : vector<4x64xi32> to vector<4x64xf32>
    %c0 = arith.constant 0 : index
    %c0_3 = arith.constant 0 : index
    %c0_4 = arith.constant 0 : index
    %21 = vector.load %arg1[%c0, %c0_3, %c0_4] : memref<2x16x64xf32, #tpu.memory_space<vmem>>, vector<2x16x64xf32>
    %cst = arith.constant dense<0.000000e+00> : vector<16x64xf32>
    %22 = vector.multi_reduction <add>, %21, %cst [0] : vector<2x16x64xf32> to vector<16x64xf32>
    %cst_5 = arith.constant dense<0.000000e+00> : vector<64xf32>
    %23 = vector.multi_reduction <add>, %22, %cst_5 [0] : vector<16x64xf32> to vector<64xf32>
    %24 = vector.shape_cast %23 : vector<64xf32> to vector<1x64xf32>
    %25 = arith.mulf %21, %21 : vector<2x16x64xf32>
    %cst_6 = arith.constant dense<0.000000e+00> : vector<16x64xf32>
    %26 = vector.multi_reduction <add>, %25, %cst_6 [0] : vector<2x16x64xf32> to vector<16x64xf32>
    %cst_7 = arith.constant dense<0.000000e+00> : vector<64xf32>
    %27 = vector.multi_reduction <add>, %26, %cst_7 [0] : vector<16x64xf32> to vector<64xf32>
    %28 = vector.shape_cast %27 : vector<64xf32> to vector<1x64xf32>
    %29 = vector.broadcast %24 : vector<1x64xf32> to vector<4x64xf32>
    %30 = arith.mulf %20, %29 : vector<4x64xf32>
    %cst_8 = arith.constant dense<0.000000e+00> : vector<4xf32>
    %31 = vector.multi_reduction <add>, %30, %cst_8 [1] : vector<4x64xf32> to vector<4xf32>
    %32 = vector.shape_cast %31 : vector<4xf32> to vector<4x1xf32>
    %33 = vector.broadcast %28 : vector<1x64xf32> to vector<4x64xf32>
    %34 = arith.mulf %20, %33 : vector<4x64xf32>
    %cst_9 = arith.constant dense<0.000000e+00> : vector<4xf32>
    %35 = vector.multi_reduction <add>, %34, %cst_9 [1] : vector<4x64xf32> to vector<4xf32>
    %36 = vector.shape_cast %35 : vector<4xf32> to vector<4x1xf32>
    %cst_10 = arith.constant 0.001953125 : f32
    %37 = vector.broadcast %cst_10 : f32 to vector<4x1xf32>
    %38 = arith.mulf %32, %37 : vector<4x1xf32>
    %cst_11 = arith.constant 0.001953125 : f32
    %39 = vector.broadcast %cst_11 : f32 to vector<4x1xf32>
    %40 = arith.mulf %36, %39 : vector<4x1xf32>
    %41 = arith.mulf %38, %38 : vector<4x1xf32>
    %42 = arith.subf %40, %41 : vector<4x1xf32>
    %c0_12 = arith.constant 0 : index
    %c0_13 = arith.constant 0 : index
    %43 = vector.load %arg2[%c0_12, %c0_13] : memref<4x1xf32, #tpu.memory_space<vmem>>, vector<4x1xf32>
    %cst_14 = arith.constant 9.99999974E-6 : f32
    %44 = vector.broadcast %cst_14 : f32 to vector<4x1xf32>
    %45 = arith.addf %42, %44 : vector<4x1xf32>
    %46 = math.rsqrt %45 : vector<4x1xf32>
    %47 = arith.mulf %43, %46 : vector<4x1xf32>
    %c0_15 = arith.constant 0 : index
    %c0_16 = arith.constant 0 : index
    %48 = vector.load %arg3[%c0_15, %c0_16] : memref<4x1xf32, #tpu.memory_space<vmem>>, vector<4x1xf32>
    %49 = arith.mulf %38, %47 : vector<4x1xf32>
    %50 = arith.subf %48, %49 : vector<4x1xf32>
    %51 = vector.broadcast %47 : vector<4x1xf32> to vector<4x64xf32>
    %52 = arith.mulf %20, %51 : vector<4x64xf32>
    %cst_17 = arith.constant dense<0.000000e+00> : vector<64xf32>
    %53 = vector.multi_reduction <add>, %52, %cst_17 [0] : vector<4x64xf32> to vector<64xf32>
    %54 = vector.shape_cast %53 : vector<64xf32> to vector<1x64xf32>
    %c0_18 = arith.constant 0 : index
    %c0_19 = arith.constant 0 : index
    %55 = vector.load %arg6[%c0_18, %c0_19] : memref<1x64xf32, #tpu.memory_space<vmem>>, vector<1x64xf32>
    %c0_20 = arith.constant 0 : index
    %c0_21 = arith.constant 0 : index
    %56 = vector.load %arg5[%c0_20, %c0_21] : memref<4x64xf32, #tpu.memory_space<vmem>>, vector<4x64xf32>
    %57 = vector.broadcast %50 : vector<4x1xf32> to vector<4x64xf32>
    %58 = arith.mulf %56, %57 : vector<4x64xf32>
    %cst_22 = arith.constant dense<0.000000e+00> : vector<64xf32>
    %59 = vector.multi_reduction <add>, %58, %cst_22 [0] : vector<4x64xf32> to vector<64xf32>
    %60 = vector.shape_cast %59 : vector<64xf32> to vector<1x64xf32>
    %61 = arith.addf %55, %60 : vector<1x64xf32>
    %62 = vector.shape_cast %54 : vector<1x64xf32> to vector<1x1x64xf32>
    %63 = vector.broadcast %62 : vector<1x1x64xf32> to vector<2x16x64xf32>
    %64 = arith.mulf %21, %63 : vector<2x16x64xf32>
    %65 = vector.extract_strided_slice %64 {offsets = [0, 0, 4], sizes = [2, 16, 4], strides = [1, 1, 1]} : vector<2x16x64xf32> to vector<2x16x4xf32>
    %66 = vector.extract_strided_slice %64 {offsets = [0, 0, 56], sizes = [2, 16, 4], strides = [1, 1, 1]} : vector<2x16x64xf32> to vector<2x16x4xf32>
    %67 = tpu.concatenate %65, %65, %64, %66, %66 in 2 : vector<2x16x4xf32>, vector<2x16x4xf32>, vector<2x16x64xf32>, vector<2x16x4xf32>, vector<2x16x4xf32> -> vector<2x16x80xf32>
    %68 = vector.extract_strided_slice %67 {offsets = [0, 1, 0], sizes = [2, 1, 80], strides = [1, 1, 1]} : vector<2x16x80xf32> to vector<2x1x80xf32>
    %69 = vector.extract_strided_slice %67 {offsets = [0, 14, 0], sizes = [2, 1, 80], strides = [1, 1, 1]} : vector<2x16x80xf32> to vector<2x1x80xf32>
    %70 = tpu.concatenate %68, %67, %69 in 1 : vector<2x1x80xf32>, vector<2x16x80xf32>, vector<2x1x80xf32> -> vector<2x18x80xf32>
    %c0_23 = arith.constant 0 : index
    %c0_24 = arith.constant 0 : index
    %c0_25 = arith.constant 0 : index
    %71 = vector.load %arg4[%c0_23, %c0_24, %c0_25] : memref<3x15x64xf32, #tpu.memory_space<vmem>>, vector<3x15x64xf32>
    %cst_26 = arith.constant 0.000000e+00 : f32
    %72 = vector.broadcast %cst_26 : f32 to vector<2x16x64xf32>
    %73 = vector.shape_cast %61 : vector<1x64xf32> to vector<1x1x64xf32>
    %74 = vector.broadcast %73 : vector<1x1x64xf32> to vector<2x16x64xf32>
    %75 = arith.addf %72, %74 : vector<2x16x64xf32>
    %76 = vector.extract_strided_slice %70 {offsets = [0, 0, 0], sizes = [2, 16, 80], strides = [1, 1, 1]} : vector<2x18x80xf32> to vector<2x16x80xf32>
    %77 = vector.extract_strided_slice %71 {offsets = [0, 0, 0], sizes = [1, 1, 64], strides = [1, 1, 1]} : vector<3x15x64xf32> to vector<1x1x64xf32>
    %78 = vector.extract_strided_slice %76 {offsets = [0, 0, 1], sizes = [2, 16, 64], strides = [1, 1, 1]} : vector<2x16x80xf32> to vector<2x16x64xf32>
    %79 = vector.broadcast %77 : vector<1x1x64xf32> to vector<2x16x64xf32>
    %80 = arith.mulf %79, %78 : vector<2x16x64xf32>
    %81 = arith.addf %75, %80 : vector<2x16x64xf32>
    %82 = vector.extract_strided_slice %71 {offsets = [0, 1, 0], sizes = [1, 1, 64], strides = [1, 1, 1]} : vector<3x15x64xf32> to vector<1x1x64xf32>
    %83 = vector.extract_strided_slice %76 {offsets = [0, 0, 2], sizes = [2, 16, 64], strides = [1, 1, 1]} : vector<2x16x80xf32> to vector<2x16x64xf32>
    %84 = vector.broadcast %82 : vector<1x1x64xf32> to vector<2x16x64xf32>
    %85 = arith.mulf %84, %83 : vector<2x16x64xf32>
    %86 = arith.addf %81, %85 : vector<2x16x64xf32>
    %87 = vector.extract_strided_slice %71 {offsets = [0, 2, 0], sizes = [1, 1, 64], strides = [1, 1, 1]} : vector<3x15x64xf32> to vector<1x1x64xf32>
    %88 = vector.extract_strided_slice %76 {offsets = [0, 0, 3], sizes = [2, 16, 64], strides = [1, 1, 1]} : vector<2x16x80xf32> to vector<2x16x64xf32>
    %89 = vector.broadcast %87 : vector<1x1x64xf32> to vector<2x16x64xf32>
    %90 = arith.mulf %89, %88 : vector<2x16x64xf32>
    %91 = arith.addf %86, %90 : vector<2x16x64xf32>
    %92 = vector.extract_strided_slice %71 {offsets = [0, 3, 0], sizes = [1, 1, 64], strides = [1, 1, 1]} : vector<3x15x64xf32> to vector<1x1x64xf32>
    %93 = vector.extract_strided_slice %76 {offsets = [0, 0, 4], sizes = [2, 16, 64], strides = [1, 1, 1]} : vector<2x16x80xf32> to vector<2x16x64xf32>
    %94 = vector.broadcast %92 : vector<1x1x64xf32> to vector<2x16x64xf32>
    %95 = arith.mulf %94, %93 : vector<2x16x64xf32>
    %96 = arith.addf %91, %95 : vector<2x16x64xf32>
    %97 = vector.extract_strided_slice %71 {offsets = [0, 4, 0], sizes = [1, 1, 64], strides = [1, 1, 1]} : vector<3x15x64xf32> to vector<1x1x64xf32>
    %98 = vector.extract_strided_slice %76 {offsets = [0, 0, 5], sizes = [2, 16, 64], strides = [1, 1, 1]} : vector<2x16x80xf32> to vector<2x16x64xf32>
    %99 = vector.broadcast %97 : vector<1x1x64xf32> to vector<2x16x64xf32>
    %100 = arith.mulf %99, %98 : vector<2x16x64xf32>
    %101 = arith.addf %96, %100 : vector<2x16x64xf32>
    %102 = vector.extract_strided_slice %71 {offsets = [0, 5, 0], sizes = [1, 1, 64], strides = [1, 1, 1]} : vector<3x15x64xf32> to vector<1x1x64xf32>
    %103 = vector.extract_strided_slice %76 {offsets = [0, 0, 6], sizes = [2, 16, 64], strides = [1, 1, 1]} : vector<2x16x80xf32> to vector<2x16x64xf32>
    %104 = vector.broadcast %102 : vector<1x1x64xf32> to vector<2x16x64xf32>
    %105 = arith.mulf %104, %103 : vector<2x16x64xf32>
    %106 = arith.addf %101, %105 : vector<2x16x64xf32>
    %107 = vector.extract_strided_slice %71 {offsets = [0, 6, 0], sizes = [1, 1, 64], strides = [1, 1, 1]} : vector<3x15x64xf32> to vector<1x1x64xf32>
    %108 = vector.extract_strided_slice %76 {offsets = [0, 0, 7], sizes = [2, 16, 64], strides = [1, 1, 1]} : vector<2x16x80xf32> to vector<2x16x64xf32>
    %109 = vector.broadcast %107 : vector<1x1x64xf32> to vector<2x16x64xf32>
    %110 = arith.mulf %109, %108 : vector<2x16x64xf32>
    %111 = arith.addf %106, %110 : vector<2x16x64xf32>
    %112 = vector.extract_strided_slice %71 {offsets = [0, 7, 0], sizes = [1, 1, 64], strides = [1, 1, 1]} : vector<3x15x64xf32> to vector<1x1x64xf32>
    %113 = vector.extract_strided_slice %76 {offsets = [0, 0, 8], sizes = [2, 16, 64], strides = [1, 1, 1]} : vector<2x16x80xf32> to vector<2x16x64xf32>
    %114 = vector.broadcast %112 : vector<1x1x64xf32> to vector<2x16x64xf32>
    %115 = arith.mulf %114, %113 : vector<2x16x64xf32>
    %116 = arith.addf %111, %115 : vector<2x16x64xf32>
    %117 = vector.extract_strided_slice %71 {offsets = [0, 8, 0], sizes = [1, 1, 64], strides = [1, 1, 1]} : vector<3x15x64xf32> to vector<1x1x64xf32>
    %118 = vector.extract_strided_slice %76 {offsets = [0, 0, 9], sizes = [2, 16, 64], strides = [1, 1, 1]} : vector<2x16x80xf32> to vector<2x16x64xf32>
    %119 = vector.broadcast %117 : vector<1x1x64xf32> to vector<2x16x64xf32>
    %120 = arith.mulf %119, %118 : vector<2x16x64xf32>
    %121 = arith.addf %116, %120 : vector<2x16x64xf32>
    %122 = vector.extract_strided_slice %71 {offsets = [0, 9, 0], sizes = [1, 1, 64], strides = [1, 1, 1]} : vector<3x15x64xf32> to vector<1x1x64xf32>
    %123 = vector.extract_strided_slice %76 {offsets = [0, 0, 10], sizes = [2, 16, 64], strides = [1, 1, 1]} : vector<2x16x80xf32> to vector<2x16x64xf32>
    %124 = vector.broadcast %122 : vector<1x1x64xf32> to vector<2x16x64xf32>
    %125 = arith.mulf %124, %123 : vector<2x16x64xf32>
    %126 = arith.addf %121, %125 : vector<2x16x64xf32>
    %127 = vector.extract_strided_slice %71 {offsets = [0, 10, 0], sizes = [1, 1, 64], strides = [1, 1, 1]} : vector<3x15x64xf32> to vector<1x1x64xf32>
    %128 = vector.extract_strided_slice %76 {offsets = [0, 0, 11], sizes = [2, 16, 64], strides = [1, 1, 1]} : vector<2x16x80xf32> to vector<2x16x64xf32>
    %129 = vector.broadcast %127 : vector<1x1x64xf32> to vector<2x16x64xf32>
    %130 = arith.mulf %129, %128 : vector<2x16x64xf32>
    %131 = arith.addf %126, %130 : vector<2x16x64xf32>
    %132 = vector.extract_strided_slice %71 {offsets = [0, 11, 0], sizes = [1, 1, 64], strides = [1, 1, 1]} : vector<3x15x64xf32> to vector<1x1x64xf32>
    %133 = vector.extract_strided_slice %76 {offsets = [0, 0, 12], sizes = [2, 16, 64], strides = [1, 1, 1]} : vector<2x16x80xf32> to vector<2x16x64xf32>
    %134 = vector.broadcast %132 : vector<1x1x64xf32> to vector<2x16x64xf32>
    %135 = arith.mulf %134, %133 : vector<2x16x64xf32>
    %136 = arith.addf %131, %135 : vector<2x16x64xf32>
    %137 = vector.extract_strided_slice %71 {offsets = [0, 12, 0], sizes = [1, 1, 64], strides = [1, 1, 1]} : vector<3x15x64xf32> to vector<1x1x64xf32>
    %138 = vector.extract_strided_slice %76 {offsets = [0, 0, 13], sizes = [2, 16, 64], strides = [1, 1, 1]} : vector<2x16x80xf32> to vector<2x16x64xf32>
    %139 = vector.broadcast %137 : vector<1x1x64xf32> to vector<2x16x64xf32>
    %140 = arith.mulf %139, %138 : vector<2x16x64xf32>
    %141 = arith.addf %136, %140 : vector<2x16x64xf32>
    %142 = vector.extract_strided_slice %71 {offsets = [0, 13, 0], sizes = [1, 1, 64], strides = [1, 1, 1]} : vector<3x15x64xf32> to vector<1x1x64xf32>
    %143 = vector.extract_strided_slice %76 {offsets = [0, 0, 14], sizes = [2, 16, 64], strides = [1, 1, 1]} : vector<2x16x80xf32> to vector<2x16x64xf32>
    %144 = vector.broadcast %142 : vector<1x1x64xf32> to vector<2x16x64xf32>
    %145 = arith.mulf %144, %143 : vector<2x16x64xf32>
    %146 = arith.addf %141, %145 : vector<2x16x64xf32>
    %147 = vector.extract_strided_slice %71 {offsets = [0, 14, 0], sizes = [1, 1, 64], strides = [1, 1, 1]} : vector<3x15x64xf32> to vector<1x1x64xf32>
    %148 = vector.extract_strided_slice %76 {offsets = [0, 0, 15], sizes = [2, 16, 64], strides = [1, 1, 1]} : vector<2x16x80xf32> to vector<2x16x64xf32>
    %149 = vector.broadcast %147 : vector<1x1x64xf32> to vector<2x16x64xf32>
    %150 = arith.mulf %149, %148 : vector<2x16x64xf32>
    %151 = arith.addf %146, %150 : vector<2x16x64xf32>
    %152 = vector.extract_strided_slice %70 {offsets = [0, 1, 0], sizes = [2, 16, 80], strides = [1, 1, 1]} : vector<2x18x80xf32> to vector<2x16x80xf32>
    %153 = vector.extract_strided_slice %71 {offsets = [1, 0, 0], sizes = [1, 1, 64], strides = [1, 1, 1]} : vector<3x15x64xf32> to vector<1x1x64xf32>
    %154 = vector.extract_strided_slice %152 {offsets = [0, 0, 1], sizes = [2, 16, 64], strides = [1, 1, 1]} : vector<2x16x80xf32> to vector<2x16x64xf32>
    %155 = vector.broadcast %153 : vector<1x1x64xf32> to vector<2x16x64xf32>
    %156 = arith.mulf %155, %154 : vector<2x16x64xf32>
    %157 = arith.addf %151, %156 : vector<2x16x64xf32>
    %158 = vector.extract_strided_slice %71 {offsets = [1, 1, 0], sizes = [1, 1, 64], strides = [1, 1, 1]} : vector<3x15x64xf32> to vector<1x1x64xf32>
    %159 = vector.extract_strided_slice %152 {offsets = [0, 0, 2], sizes = [2, 16, 64], strides = [1, 1, 1]} : vector<2x16x80xf32> to vector<2x16x64xf32>
    %160 = vector.broadcast %158 : vector<1x1x64xf32> to vector<2x16x64xf32>
    %161 = arith.mulf %160, %159 : vector<2x16x64xf32>
    %162 = arith.addf %157, %161 : vector<2x16x64xf32>
    %163 = vector.extract_strided_slice %71 {offsets = [1, 2, 0], sizes = [1, 1, 64], strides = [1, 1, 1]} : vector<3x15x64xf32> to vector<1x1x64xf32>
    %164 = vector.extract_strided_slice %152 {offsets = [0, 0, 3], sizes = [2, 16, 64], strides = [1, 1, 1]} : vector<2x16x80xf32> to vector<2x16x64xf32>
    %165 = vector.broadcast %163 : vector<1x1x64xf32> to vector<2x16x64xf32>
    %166 = arith.mulf %165, %164 : vector<2x16x64xf32>
    %167 = arith.addf %162, %166 : vector<2x16x64xf32>
    %168 = vector.extract_strided_slice %71 {offsets = [1, 3, 0], sizes = [1, 1, 64], strides = [1, 1, 1]} : vector<3x15x64xf32> to vector<1x1x64xf32>
    %169 = vector.extract_strided_slice %152 {offsets = [0, 0, 4], sizes = [2, 16, 64], strides = [1, 1, 1]} : vector<2x16x80xf32> to vector<2x16x64xf32>
    %170 = vector.broadcast %168 : vector<1x1x64xf32> to vector<2x16x64xf32>
    %171 = arith.mulf %170, %169 : vector<2x16x64xf32>
    %172 = arith.addf %167, %171 : vector<2x16x64xf32>
    %173 = vector.extract_strided_slice %71 {offsets = [1, 4, 0], sizes = [1, 1, 64], strides = [1, 1, 1]} : vector<3x15x64xf32> to vector<1x1x64xf32>
    %174 = vector.extract_strided_slice %152 {offsets = [0, 0, 5], sizes = [2, 16, 64], strides = [1, 1, 1]} : vector<2x16x80xf32> to vector<2x16x64xf32>
    %175 = vector.broadcast %173 : vector<1x1x64xf32> to vector<2x16x64xf32>
    %176 = arith.mulf %175, %174 : vector<2x16x64xf32>
    %177 = arith.addf %172, %176 : vector<2x16x64xf32>
    %178 = vector.extract_strided_slice %71 {offsets = [1, 5, 0], sizes = [1, 1, 64], strides = [1, 1, 1]} : vector<3x15x64xf32> to vector<1x1x64xf32>
    %179 = vector.extract_strided_slice %152 {offsets = [0, 0, 6], sizes = [2, 16, 64], strides = [1, 1, 1]} : vector<2x16x80xf32> to vector<2x16x64xf32>
    %180 = vector.broadcast %178 : vector<1x1x64xf32> to vector<2x16x64xf32>
    %181 = arith.mulf %180, %179 : vector<2x16x64xf32>
    %182 = arith.addf %177, %181 : vector<2x16x64xf32>
    %183 = vector.extract_strided_slice %71 {offsets = [1, 6, 0], sizes = [1, 1, 64], strides = [1, 1, 1]} : vector<3x15x64xf32> to vector<1x1x64xf32>
    %184 = vector.extract_strided_slice %152 {offsets = [0, 0, 7], sizes = [2, 16, 64], strides = [1, 1, 1]} : vector<2x16x80xf32> to vector<2x16x64xf32>
    %185 = vector.broadcast %183 : vector<1x1x64xf32> to vector<2x16x64xf32>
    %186 = arith.mulf %185, %184 : vector<2x16x64xf32>
    %187 = arith.addf %182, %186 : vector<2x16x64xf32>
    %188 = vector.extract_strided_slice %71 {offsets = [1, 7, 0], sizes = [1, 1, 64], strides = [1, 1, 1]} : vector<3x15x64xf32> to vector<1x1x64xf32>
    %189 = vector.extract_strided_slice %152 {offsets = [0, 0, 8], sizes = [2, 16, 64], strides = [1, 1, 1]} : vector<2x16x80xf32> to vector<2x16x64xf32>
    %190 = vector.broadcast %188 : vector<1x1x64xf32> to vector<2x16x64xf32>
    %191 = arith.mulf %190, %189 : vector<2x16x64xf32>
    %192 = arith.addf %187, %191 : vector<2x16x64xf32>
    %193 = vector.extract_strided_slice %71 {offsets = [1, 8, 0], sizes = [1, 1, 64], strides = [1, 1, 1]} : vector<3x15x64xf32> to vector<1x1x64xf32>
    %194 = vector.extract_strided_slice %152 {offsets = [0, 0, 9], sizes = [2, 16, 64], strides = [1, 1, 1]} : vector<2x16x80xf32> to vector<2x16x64xf32>
    %195 = vector.broadcast %193 : vector<1x1x64xf32> to vector<2x16x64xf32>
    %196 = arith.mulf %195, %194 : vector<2x16x64xf32>
    %197 = arith.addf %192, %196 : vector<2x16x64xf32>
    %198 = vector.extract_strided_slice %71 {offsets = [1, 9, 0], sizes = [1, 1, 64], strides = [1, 1, 1]} : vector<3x15x64xf32> to vector<1x1x64xf32>
    %199 = vector.extract_strided_slice %152 {offsets = [0, 0, 10], sizes = [2, 16, 64], strides = [1, 1, 1]} : vector<2x16x80xf32> to vector<2x16x64xf32>
    %200 = vector.broadcast %198 : vector<1x1x64xf32> to vector<2x16x64xf32>
    %201 = arith.mulf %200, %199 : vector<2x16x64xf32>
    %202 = arith.addf %197, %201 : vector<2x16x64xf32>
    %203 = vector.extract_strided_slice %71 {offsets = [1, 10, 0], sizes = [1, 1, 64], strides = [1, 1, 1]} : vector<3x15x64xf32> to vector<1x1x64xf32>
    %204 = vector.extract_strided_slice %152 {offsets = [0, 0, 11], sizes = [2, 16, 64], strides = [1, 1, 1]} : vector<2x16x80xf32> to vector<2x16x64xf32>
    %205 = vector.broadcast %203 : vector<1x1x64xf32> to vector<2x16x64xf32>
    %206 = arith.mulf %205, %204 : vector<2x16x64xf32>
    %207 = arith.addf %202, %206 : vector<2x16x64xf32>
    %208 = vector.extract_strided_slice %71 {offsets = [1, 11, 0], sizes = [1, 1, 64], strides = [1, 1, 1]} : vector<3x15x64xf32> to vector<1x1x64xf32>
    %209 = vector.extract_strided_slice %152 {offsets = [0, 0, 12], sizes = [2, 16, 64], strides = [1, 1, 1]} : vector<2x16x80xf32> to vector<2x16x64xf32>
    %210 = vector.broadcast %208 : vector<1x1x64xf32> to vector<2x16x64xf32>
    %211 = arith.mulf %210, %209 : vector<2x16x64xf32>
    %212 = arith.addf %207, %211 : vector<2x16x64xf32>
    %213 = vector.extract_strided_slice %71 {offsets = [1, 12, 0], sizes = [1, 1, 64], strides = [1, 1, 1]} : vector<3x15x64xf32> to vector<1x1x64xf32>
    %214 = vector.extract_strided_slice %152 {offsets = [0, 0, 13], sizes = [2, 16, 64], strides = [1, 1, 1]} : vector<2x16x80xf32> to vector<2x16x64xf32>
    %215 = vector.broadcast %213 : vector<1x1x64xf32> to vector<2x16x64xf32>
    %216 = arith.mulf %215, %214 : vector<2x16x64xf32>
    %217 = arith.addf %212, %216 : vector<2x16x64xf32>
    %218 = vector.extract_strided_slice %71 {offsets = [1, 13, 0], sizes = [1, 1, 64], strides = [1, 1, 1]} : vector<3x15x64xf32> to vector<1x1x64xf32>
    %219 = vector.extract_strided_slice %152 {offsets = [0, 0, 14], sizes = [2, 16, 64], strides = [1, 1, 1]} : vector<2x16x80xf32> to vector<2x16x64xf32>
    %220 = vector.broadcast %218 : vector<1x1x64xf32> to vector<2x16x64xf32>
    %221 = arith.mulf %220, %219 : vector<2x16x64xf32>
    %222 = arith.addf %217, %221 : vector<2x16x64xf32>
    %223 = vector.extract_strided_slice %71 {offsets = [1, 14, 0], sizes = [1, 1, 64], strides = [1, 1, 1]} : vector<3x15x64xf32> to vector<1x1x64xf32>
    %224 = vector.extract_strided_slice %152 {offsets = [0, 0, 15], sizes = [2, 16, 64], strides = [1, 1, 1]} : vector<2x16x80xf32> to vector<2x16x64xf32>
    %225 = vector.broadcast %223 : vector<1x1x64xf32> to vector<2x16x64xf32>
    %226 = arith.mulf %225, %224 : vector<2x16x64xf32>
    %227 = arith.addf %222, %226 : vector<2x16x64xf32>
    %228 = vector.extract_strided_slice %70 {offsets = [0, 2, 0], sizes = [2, 16, 80], strides = [1, 1, 1]} : vector<2x18x80xf32> to vector<2x16x80xf32>
    %229 = vector.extract_strided_slice %71 {offsets = [2, 0, 0], sizes = [1, 1, 64], strides = [1, 1, 1]} : vector<3x15x64xf32> to vector<1x1x64xf32>
    %230 = vector.extract_strided_slice %228 {offsets = [0, 0, 1], sizes = [2, 16, 64], strides = [1, 1, 1]} : vector<2x16x80xf32> to vector<2x16x64xf32>
    %231 = vector.broadcast %229 : vector<1x1x64xf32> to vector<2x16x64xf32>
    %232 = arith.mulf %231, %230 : vector<2x16x64xf32>
    %233 = arith.addf %227, %232 : vector<2x16x64xf32>
    %234 = vector.extract_strided_slice %71 {offsets = [2, 1, 0], sizes = [1, 1, 64], strides = [1, 1, 1]} : vector<3x15x64xf32> to vector<1x1x64xf32>
    %235 = vector.extract_strided_slice %228 {offsets = [0, 0, 2], sizes = [2, 16, 64], strides = [1, 1, 1]} : vector<2x16x80xf32> to vector<2x16x64xf32>
    %236 = vector.broadcast %234 : vector<1x1x64xf32> to vector<2x16x64xf32>
    %237 = arith.mulf %236, %235 : vector<2x16x64xf32>
    %238 = arith.addf %233, %237 : vector<2x16x64xf32>
    %239 = vector.extract_strided_slice %71 {offsets = [2, 2, 0], sizes = [1, 1, 64], strides = [1, 1, 1]} : vector<3x15x64xf32> to vector<1x1x64xf32>
    %240 = vector.extract_strided_slice %228 {offsets = [0, 0, 3], sizes = [2, 16, 64], strides = [1, 1, 1]} : vector<2x16x80xf32> to vector<2x16x64xf32>
    %241 = vector.broadcast %239 : vector<1x1x64xf32> to vector<2x16x64xf32>
    %242 = arith.mulf %241, %240 : vector<2x16x64xf32>
    %243 = arith.addf %238, %242 : vector<2x16x64xf32>
    %244 = vector.extract_strided_slice %71 {offsets = [2, 3, 0], sizes = [1, 1, 64], strides = [1, 1, 1]} : vector<3x15x64xf32> to vector<1x1x64xf32>
    %245 = vector.extract_strided_slice %228 {offsets = [0, 0, 4], sizes = [2, 16, 64], strides = [1, 1, 1]} : vector<2x16x80xf32> to vector<2x16x64xf32>
    %246 = vector.broadcast %244 : vector<1x1x64xf32> to vector<2x16x64xf32>
    %247 = arith.mulf %246, %245 : vector<2x16x64xf32>
    %248 = arith.addf %243, %247 : vector<2x16x64xf32>
    %249 = vector.extract_strided_slice %71 {offsets = [2, 4, 0], sizes = [1, 1, 64], strides = [1, 1, 1]} : vector<3x15x64xf32> to vector<1x1x64xf32>
    %250 = vector.extract_strided_slice %228 {offsets = [0, 0, 5], sizes = [2, 16, 64], strides = [1, 1, 1]} : vector<2x16x80xf32> to vector<2x16x64xf32>
    %251 = vector.broadcast %249 : vector<1x1x64xf32> to vector<2x16x64xf32>
    %252 = arith.mulf %251, %250 : vector<2x16x64xf32>
    %253 = arith.addf %248, %252 : vector<2x16x64xf32>
    %254 = vector.extract_strided_slice %71 {offsets = [2, 5, 0], sizes = [1, 1, 64], strides = [1, 1, 1]} : vector<3x15x64xf32> to vector<1x1x64xf32>
    %255 = vector.extract_strided_slice %228 {offsets = [0, 0, 6], sizes = [2, 16, 64], strides = [1, 1, 1]} : vector<2x16x80xf32> to vector<2x16x64xf32>
    %256 = vector.broadcast %254 : vector<1x1x64xf32> to vector<2x16x64xf32>
    %257 = arith.mulf %256, %255 : vector<2x16x64xf32>
    %258 = arith.addf %253, %257 : vector<2x16x64xf32>
    %259 = vector.extract_strided_slice %71 {offsets = [2, 6, 0], sizes = [1, 1, 64], strides = [1, 1, 1]} : vector<3x15x64xf32> to vector<1x1x64xf32>
    %260 = vector.extract_strided_slice %228 {offsets = [0, 0, 7], sizes = [2, 16, 64], strides = [1, 1, 1]} : vector<2x16x80xf32> to vector<2x16x64xf32>
    %261 = vector.broadcast %259 : vector<1x1x64xf32> to vector<2x16x64xf32>
    %262 = arith.mulf %261, %260 : vector<2x16x64xf32>
    %263 = arith.addf %258, %262 : vector<2x16x64xf32>
    %264 = vector.extract_strided_slice %71 {offsets = [2, 7, 0], sizes = [1, 1, 64], strides = [1, 1, 1]} : vector<3x15x64xf32> to vector<1x1x64xf32>
    %265 = vector.extract_strided_slice %228 {offsets = [0, 0, 8], sizes = [2, 16, 64], strides = [1, 1, 1]} : vector<2x16x80xf32> to vector<2x16x64xf32>
    %266 = vector.broadcast %264 : vector<1x1x64xf32> to vector<2x16x64xf32>
    %267 = arith.mulf %266, %265 : vector<2x16x64xf32>
    %268 = arith.addf %263, %267 : vector<2x16x64xf32>
    %269 = vector.extract_strided_slice %71 {offsets = [2, 8, 0], sizes = [1, 1, 64], strides = [1, 1, 1]} : vector<3x15x64xf32> to vector<1x1x64xf32>
    %270 = vector.extract_strided_slice %228 {offsets = [0, 0, 9], sizes = [2, 16, 64], strides = [1, 1, 1]} : vector<2x16x80xf32> to vector<2x16x64xf32>
    %271 = vector.broadcast %269 : vector<1x1x64xf32> to vector<2x16x64xf32>
    %272 = arith.mulf %271, %270 : vector<2x16x64xf32>
    %273 = arith.addf %268, %272 : vector<2x16x64xf32>
    %274 = vector.extract_strided_slice %71 {offsets = [2, 9, 0], sizes = [1, 1, 64], strides = [1, 1, 1]} : vector<3x15x64xf32> to vector<1x1x64xf32>
    %275 = vector.extract_strided_slice %228 {offsets = [0, 0, 10], sizes = [2, 16, 64], strides = [1, 1, 1]} : vector<2x16x80xf32> to vector<2x16x64xf32>
    %276 = vector.broadcast %274 : vector<1x1x64xf32> to vector<2x16x64xf32>
    %277 = arith.mulf %276, %275 : vector<2x16x64xf32>
    %278 = arith.addf %273, %277 : vector<2x16x64xf32>
    %279 = vector.extract_strided_slice %71 {offsets = [2, 10, 0], sizes = [1, 1, 64], strides = [1, 1, 1]} : vector<3x15x64xf32> to vector<1x1x64xf32>
    %280 = vector.extract_strided_slice %228 {offsets = [0, 0, 11], sizes = [2, 16, 64], strides = [1, 1, 1]} : vector<2x16x80xf32> to vector<2x16x64xf32>
    %281 = vector.broadcast %279 : vector<1x1x64xf32> to vector<2x16x64xf32>
    %282 = arith.mulf %281, %280 : vector<2x16x64xf32>
    %283 = arith.addf %278, %282 : vector<2x16x64xf32>
    %284 = vector.extract_strided_slice %71 {offsets = [2, 11, 0], sizes = [1, 1, 64], strides = [1, 1, 1]} : vector<3x15x64xf32> to vector<1x1x64xf32>
    %285 = vector.extract_strided_slice %228 {offsets = [0, 0, 12], sizes = [2, 16, 64], strides = [1, 1, 1]} : vector<2x16x80xf32> to vector<2x16x64xf32>
    %286 = vector.broadcast %284 : vector<1x1x64xf32> to vector<2x16x64xf32>
    %287 = arith.mulf %286, %285 : vector<2x16x64xf32>
    %288 = arith.addf %283, %287 : vector<2x16x64xf32>
    %289 = vector.extract_strided_slice %71 {offsets = [2, 12, 0], sizes = [1, 1, 64], strides = [1, 1, 1]} : vector<3x15x64xf32> to vector<1x1x64xf32>
    %290 = vector.extract_strided_slice %228 {offsets = [0, 0, 13], sizes = [2, 16, 64], strides = [1, 1, 1]} : vector<2x16x80xf32> to vector<2x16x64xf32>
    %291 = vector.broadcast %289 : vector<1x1x64xf32> to vector<2x16x64xf32>
    %292 = arith.mulf %291, %290 : vector<2x16x64xf32>
    %293 = arith.addf %288, %292 : vector<2x16x64xf32>
    %294 = vector.extract_strided_slice %71 {offsets = [2, 13, 0], sizes = [1, 1, 64], strides = [1, 1, 1]} : vector<3x15x64xf32> to vector<1x1x64xf32>
    %295 = vector.extract_strided_slice %228 {offsets = [0, 0, 14], sizes = [2, 16, 64], strides = [1, 1, 1]} : vector<2x16x80xf32> to vector<2x16x64xf32>
    %296 = vector.broadcast %294 : vector<1x1x64xf32> to vector<2x16x64xf32>
    %297 = arith.mulf %296, %295 : vector<2x16x64xf32>
    %298 = arith.addf %293, %297 : vector<2x16x64xf32>
    %299 = vector.extract_strided_slice %71 {offsets = [2, 14, 0], sizes = [1, 1, 64], strides = [1, 1, 1]} : vector<3x15x64xf32> to vector<1x1x64xf32>
    %300 = vector.extract_strided_slice %228 {offsets = [0, 0, 15], sizes = [2, 16, 64], strides = [1, 1, 1]} : vector<2x16x80xf32> to vector<2x16x64xf32>
    %301 = vector.broadcast %299 : vector<1x1x64xf32> to vector<2x16x64xf32>
    %302 = arith.mulf %301, %300 : vector<2x16x64xf32>
    %303 = arith.addf %298, %302 : vector<2x16x64xf32>
    %cst_27 = arith.constant 0.000000e+00 : f32
    %304 = vector.broadcast %cst_27 : f32 to vector<2x16x64xf32>
    %305 = arith.maximumf %303, %304 : vector<2x16x64xf32>
    %cst_28 = arith.constant dense<0.000000e+00> : vector<16x64xf32>
    %306 = vector.multi_reduction <add>, %305, %cst_28 [0] : vector<2x16x64xf32> to vector<16x64xf32>
    %cst_29 = arith.constant dense<0.000000e+00> : vector<64xf32>
    %307 = vector.multi_reduction <add>, %306, %cst_29 [0] : vector<16x64xf32> to vector<64xf32>
    %308 = vector.shape_cast %307 : vector<64xf32> to vector<1x64xf32>
    %309 = arith.mulf %305, %305 : vector<2x16x64xf32>
    %cst_30 = arith.constant dense<0.000000e+00> : vector<16x64xf32>
    %310 = vector.multi_reduction <add>, %309, %cst_30 [0] : vector<2x16x64xf32> to vector<16x64xf32>
    %cst_31 = arith.constant dense<0.000000e+00> : vector<64xf32>
    %311 = vector.multi_reduction <add>, %310, %cst_31 [0] : vector<16x64xf32> to vector<64xf32>
    %312 = vector.shape_cast %311 : vector<64xf32> to vector<1x64xf32>
    %313 = vector.broadcast %308 : vector<1x64xf32> to vector<4x64xf32>
    %314 = arith.mulf %20, %313 : vector<4x64xf32>
    %cst_32 = arith.constant dense<0.000000e+00> : vector<4xf32>
    %315 = vector.multi_reduction <add>, %314, %cst_32 [1] : vector<4x64xf32> to vector<4xf32>
    %316 = vector.shape_cast %315 : vector<4xf32> to vector<4x1xf32>
    %317 = vector.broadcast %312 : vector<1x64xf32> to vector<4x64xf32>
    %318 = arith.mulf %20, %317 : vector<4x64xf32>
    %cst_33 = arith.constant dense<0.000000e+00> : vector<4xf32>
    %319 = vector.multi_reduction <add>, %318, %cst_33 [1] : vector<4x64xf32> to vector<4xf32>
    %320 = vector.shape_cast %319 : vector<4xf32> to vector<4x1xf32>
    %cst_34 = arith.constant 0.001953125 : f32
    %321 = vector.broadcast %cst_34 : f32 to vector<4x1xf32>
    %322 = arith.mulf %316, %321 : vector<4x1xf32>
    %cst_35 = arith.constant 0.001953125 : f32
    %323 = vector.broadcast %cst_35 : f32 to vector<4x1xf32>
    %324 = arith.mulf %320, %323 : vector<4x1xf32>
    %325 = arith.mulf %322, %322 : vector<4x1xf32>
    %326 = arith.subf %324, %325 : vector<4x1xf32>
    %c0_36 = arith.constant 0 : index
    %c0_37 = arith.constant 0 : index
    %327 = vector.load %arg7[%c0_36, %c0_37] : memref<4x1xf32, #tpu.memory_space<vmem>>, vector<4x1xf32>
    %cst_38 = arith.constant 9.99999974E-6 : f32
    %328 = vector.broadcast %cst_38 : f32 to vector<4x1xf32>
    %329 = arith.addf %326, %328 : vector<4x1xf32>
    %330 = math.rsqrt %329 : vector<4x1xf32>
    %331 = arith.mulf %327, %330 : vector<4x1xf32>
    %c0_39 = arith.constant 0 : index
    %c0_40 = arith.constant 0 : index
    %332 = vector.load %arg8[%c0_39, %c0_40] : memref<4x1xf32, #tpu.memory_space<vmem>>, vector<4x1xf32>
    %333 = arith.mulf %322, %331 : vector<4x1xf32>
    %334 = arith.subf %332, %333 : vector<4x1xf32>
    %335 = vector.broadcast %331 : vector<4x1xf32> to vector<4x64xf32>
    %336 = arith.mulf %20, %335 : vector<4x64xf32>
    %cst_41 = arith.constant dense<0.000000e+00> : vector<64xf32>
    %337 = vector.multi_reduction <add>, %336, %cst_41 [0] : vector<4x64xf32> to vector<64xf32>
    %338 = vector.shape_cast %337 : vector<64xf32> to vector<1x64xf32>
    %c0_42 = arith.constant 0 : index
    %c0_43 = arith.constant 0 : index
    %339 = vector.load %arg11[%c0_42, %c0_43] : memref<1x64xf32, #tpu.memory_space<vmem>>, vector<1x64xf32>
    %c0_44 = arith.constant 0 : index
    %c0_45 = arith.constant 0 : index
    %340 = vector.load %arg10[%c0_44, %c0_45] : memref<4x64xf32, #tpu.memory_space<vmem>>, vector<4x64xf32>
    %341 = vector.broadcast %334 : vector<4x1xf32> to vector<4x64xf32>
    %342 = arith.mulf %340, %341 : vector<4x64xf32>
    %cst_46 = arith.constant dense<0.000000e+00> : vector<64xf32>
    %343 = vector.multi_reduction <add>, %342, %cst_46 [0] : vector<4x64xf32> to vector<64xf32>
    %344 = vector.shape_cast %343 : vector<64xf32> to vector<1x64xf32>
    %345 = arith.addf %339, %344 : vector<1x64xf32>
    %346 = vector.shape_cast %338 : vector<1x64xf32> to vector<1x1x64xf32>
    %347 = vector.broadcast %346 : vector<1x1x64xf32> to vector<2x16x64xf32>
    %348 = arith.mulf %305, %347 : vector<2x16x64xf32>
    %349 = vector.extract_strided_slice %348 {offsets = [0, 0, 4], sizes = [2, 16, 4], strides = [1, 1, 1]} : vector<2x16x64xf32> to vector<2x16x4xf32>
    %350 = vector.extract_strided_slice %348 {offsets = [0, 0, 56], sizes = [2, 16, 4], strides = [1, 1, 1]} : vector<2x16x64xf32> to vector<2x16x4xf32>
    %351 = tpu.concatenate %349, %349, %348, %350, %350 in 2 : vector<2x16x4xf32>, vector<2x16x4xf32>, vector<2x16x64xf32>, vector<2x16x4xf32>, vector<2x16x4xf32> -> vector<2x16x80xf32>
    %352 = vector.extract_strided_slice %351 {offsets = [0, 1, 0], sizes = [2, 1, 80], strides = [1, 1, 1]} : vector<2x16x80xf32> to vector<2x1x80xf32>
    %353 = vector.extract_strided_slice %351 {offsets = [0, 14, 0], sizes = [2, 1, 80], strides = [1, 1, 1]} : vector<2x16x80xf32> to vector<2x1x80xf32>
    %354 = tpu.concatenate %352, %351, %353 in 1 : vector<2x1x80xf32>, vector<2x16x80xf32>, vector<2x1x80xf32> -> vector<2x18x80xf32>
    %c0_47 = arith.constant 0 : index
    %c0_48 = arith.constant 0 : index
    %c0_49 = arith.constant 0 : index
    %355 = vector.load %arg9[%c0_47, %c0_48, %c0_49] : memref<3x15x64xf32, #tpu.memory_space<vmem>>, vector<3x15x64xf32>
    %cst_50 = arith.constant 0.000000e+00 : f32
    %356 = vector.broadcast %cst_50 : f32 to vector<2x16x64xf32>
    %357 = vector.shape_cast %345 : vector<1x64xf32> to vector<1x1x64xf32>
    %358 = vector.broadcast %357 : vector<1x1x64xf32> to vector<2x16x64xf32>
    %359 = arith.addf %356, %358 : vector<2x16x64xf32>
    %360 = vector.extract_strided_slice %354 {offsets = [0, 0, 0], sizes = [2, 16, 80], strides = [1, 1, 1]} : vector<2x18x80xf32> to vector<2x16x80xf32>
    %361 = vector.extract_strided_slice %355 {offsets = [0, 0, 0], sizes = [1, 1, 64], strides = [1, 1, 1]} : vector<3x15x64xf32> to vector<1x1x64xf32>
    %362 = vector.extract_strided_slice %360 {offsets = [0, 0, 1], sizes = [2, 16, 64], strides = [1, 1, 1]} : vector<2x16x80xf32> to vector<2x16x64xf32>
    %363 = vector.broadcast %361 : vector<1x1x64xf32> to vector<2x16x64xf32>
    %364 = arith.mulf %363, %362 : vector<2x16x64xf32>
    %365 = arith.addf %359, %364 : vector<2x16x64xf32>
    %366 = vector.extract_strided_slice %355 {offsets = [0, 1, 0], sizes = [1, 1, 64], strides = [1, 1, 1]} : vector<3x15x64xf32> to vector<1x1x64xf32>
    %367 = vector.extract_strided_slice %360 {offsets = [0, 0, 2], sizes = [2, 16, 64], strides = [1, 1, 1]} : vector<2x16x80xf32> to vector<2x16x64xf32>
    %368 = vector.broadcast %366 : vector<1x1x64xf32> to vector<2x16x64xf32>
    %369 = arith.mulf %368, %367 : vector<2x16x64xf32>
    %370 = arith.addf %365, %369 : vector<2x16x64xf32>
    %371 = vector.extract_strided_slice %355 {offsets = [0, 2, 0], sizes = [1, 1, 64], strides = [1, 1, 1]} : vector<3x15x64xf32> to vector<1x1x64xf32>
    %372 = vector.extract_strided_slice %360 {offsets = [0, 0, 3], sizes = [2, 16, 64], strides = [1, 1, 1]} : vector<2x16x80xf32> to vector<2x16x64xf32>
    %373 = vector.broadcast %371 : vector<1x1x64xf32> to vector<2x16x64xf32>
    %374 = arith.mulf %373, %372 : vector<2x16x64xf32>
    %375 = arith.addf %370, %374 : vector<2x16x64xf32>
    %376 = vector.extract_strided_slice %355 {offsets = [0, 3, 0], sizes = [1, 1, 64], strides = [1, 1, 1]} : vector<3x15x64xf32> to vector<1x1x64xf32>
    %377 = vector.extract_strided_slice %360 {offsets = [0, 0, 4], sizes = [2, 16, 64], strides = [1, 1, 1]} : vector<2x16x80xf32> to vector<2x16x64xf32>
    %378 = vector.broadcast %376 : vector<1x1x64xf32> to vector<2x16x64xf32>
    %379 = arith.mulf %378, %377 : vector<2x16x64xf32>
    %380 = arith.addf %375, %379 : vector<2x16x64xf32>
    %381 = vector.extract_strided_slice %355 {offsets = [0, 4, 0], sizes = [1, 1, 64], strides = [1, 1, 1]} : vector<3x15x64xf32> to vector<1x1x64xf32>
    %382 = vector.extract_strided_slice %360 {offsets = [0, 0, 5], sizes = [2, 16, 64], strides = [1, 1, 1]} : vector<2x16x80xf32> to vector<2x16x64xf32>
    %383 = vector.broadcast %381 : vector<1x1x64xf32> to vector<2x16x64xf32>
    %384 = arith.mulf %383, %382 : vector<2x16x64xf32>
    %385 = arith.addf %380, %384 : vector<2x16x64xf32>
    %386 = vector.extract_strided_slice %355 {offsets = [0, 5, 0], sizes = [1, 1, 64], strides = [1, 1, 1]} : vector<3x15x64xf32> to vector<1x1x64xf32>
    %387 = vector.extract_strided_slice %360 {offsets = [0, 0, 6], sizes = [2, 16, 64], strides = [1, 1, 1]} : vector<2x16x80xf32> to vector<2x16x64xf32>
    %388 = vector.broadcast %386 : vector<1x1x64xf32> to vector<2x16x64xf32>
    %389 = arith.mulf %388, %387 : vector<2x16x64xf32>
    %390 = arith.addf %385, %389 : vector<2x16x64xf32>
    %391 = vector.extract_strided_slice %355 {offsets = [0, 6, 0], sizes = [1, 1, 64], strides = [1, 1, 1]} : vector<3x15x64xf32> to vector<1x1x64xf32>
    %392 = vector.extract_strided_slice %360 {offsets = [0, 0, 7], sizes = [2, 16, 64], strides = [1, 1, 1]} : vector<2x16x80xf32> to vector<2x16x64xf32>
    %393 = vector.broadcast %391 : vector<1x1x64xf32> to vector<2x16x64xf32>
    %394 = arith.mulf %393, %392 : vector<2x16x64xf32>
    %395 = arith.addf %390, %394 : vector<2x16x64xf32>
    %396 = vector.extract_strided_slice %355 {offsets = [0, 7, 0], sizes = [1, 1, 64], strides = [1, 1, 1]} : vector<3x15x64xf32> to vector<1x1x64xf32>
    %397 = vector.extract_strided_slice %360 {offsets = [0, 0, 8], sizes = [2, 16, 64], strides = [1, 1, 1]} : vector<2x16x80xf32> to vector<2x16x64xf32>
    %398 = vector.broadcast %396 : vector<1x1x64xf32> to vector<2x16x64xf32>
    %399 = arith.mulf %398, %397 : vector<2x16x64xf32>
    %400 = arith.addf %395, %399 : vector<2x16x64xf32>
    %401 = vector.extract_strided_slice %355 {offsets = [0, 8, 0], sizes = [1, 1, 64], strides = [1, 1, 1]} : vector<3x15x64xf32> to vector<1x1x64xf32>
    %402 = vector.extract_strided_slice %360 {offsets = [0, 0, 9], sizes = [2, 16, 64], strides = [1, 1, 1]} : vector<2x16x80xf32> to vector<2x16x64xf32>
    %403 = vector.broadcast %401 : vector<1x1x64xf32> to vector<2x16x64xf32>
    %404 = arith.mulf %403, %402 : vector<2x16x64xf32>
    %405 = arith.addf %400, %404 : vector<2x16x64xf32>
    %406 = vector.extract_strided_slice %355 {offsets = [0, 9, 0], sizes = [1, 1, 64], strides = [1, 1, 1]} : vector<3x15x64xf32> to vector<1x1x64xf32>
    %407 = vector.extract_strided_slice %360 {offsets = [0, 0, 10], sizes = [2, 16, 64], strides = [1, 1, 1]} : vector<2x16x80xf32> to vector<2x16x64xf32>
    %408 = vector.broadcast %406 : vector<1x1x64xf32> to vector<2x16x64xf32>
    %409 = arith.mulf %408, %407 : vector<2x16x64xf32>
    %410 = arith.addf %405, %409 : vector<2x16x64xf32>
    %411 = vector.extract_strided_slice %355 {offsets = [0, 10, 0], sizes = [1, 1, 64], strides = [1, 1, 1]} : vector<3x15x64xf32> to vector<1x1x64xf32>
    %412 = vector.extract_strided_slice %360 {offsets = [0, 0, 11], sizes = [2, 16, 64], strides = [1, 1, 1]} : vector<2x16x80xf32> to vector<2x16x64xf32>
    %413 = vector.broadcast %411 : vector<1x1x64xf32> to vector<2x16x64xf32>
    %414 = arith.mulf %413, %412 : vector<2x16x64xf32>
    %415 = arith.addf %410, %414 : vector<2x16x64xf32>
    %416 = vector.extract_strided_slice %355 {offsets = [0, 11, 0], sizes = [1, 1, 64], strides = [1, 1, 1]} : vector<3x15x64xf32> to vector<1x1x64xf32>
    %417 = vector.extract_strided_slice %360 {offsets = [0, 0, 12], sizes = [2, 16, 64], strides = [1, 1, 1]} : vector<2x16x80xf32> to vector<2x16x64xf32>
    %418 = vector.broadcast %416 : vector<1x1x64xf32> to vector<2x16x64xf32>
    %419 = arith.mulf %418, %417 : vector<2x16x64xf32>
    %420 = arith.addf %415, %419 : vector<2x16x64xf32>
    %421 = vector.extract_strided_slice %355 {offsets = [0, 12, 0], sizes = [1, 1, 64], strides = [1, 1, 1]} : vector<3x15x64xf32> to vector<1x1x64xf32>
    %422 = vector.extract_strided_slice %360 {offsets = [0, 0, 13], sizes = [2, 16, 64], strides = [1, 1, 1]} : vector<2x16x80xf32> to vector<2x16x64xf32>
    %423 = vector.broadcast %421 : vector<1x1x64xf32> to vector<2x16x64xf32>
    %424 = arith.mulf %423, %422 : vector<2x16x64xf32>
    %425 = arith.addf %420, %424 : vector<2x16x64xf32>
    %426 = vector.extract_strided_slice %355 {offsets = [0, 13, 0], sizes = [1, 1, 64], strides = [1, 1, 1]} : vector<3x15x64xf32> to vector<1x1x64xf32>
    %427 = vector.extract_strided_slice %360 {offsets = [0, 0, 14], sizes = [2, 16, 64], strides = [1, 1, 1]} : vector<2x16x80xf32> to vector<2x16x64xf32>
    %428 = vector.broadcast %426 : vector<1x1x64xf32> to vector<2x16x64xf32>
    %429 = arith.mulf %428, %427 : vector<2x16x64xf32>
    %430 = arith.addf %425, %429 : vector<2x16x64xf32>
    %431 = vector.extract_strided_slice %355 {offsets = [0, 14, 0], sizes = [1, 1, 64], strides = [1, 1, 1]} : vector<3x15x64xf32> to vector<1x1x64xf32>
    %432 = vector.extract_strided_slice %360 {offsets = [0, 0, 15], sizes = [2, 16, 64], strides = [1, 1, 1]} : vector<2x16x80xf32> to vector<2x16x64xf32>
    %433 = vector.broadcast %431 : vector<1x1x64xf32> to vector<2x16x64xf32>
    %434 = arith.mulf %433, %432 : vector<2x16x64xf32>
    %435 = arith.addf %430, %434 : vector<2x16x64xf32>
    %436 = vector.extract_strided_slice %354 {offsets = [0, 1, 0], sizes = [2, 16, 80], strides = [1, 1, 1]} : vector<2x18x80xf32> to vector<2x16x80xf32>
    %437 = vector.extract_strided_slice %355 {offsets = [1, 0, 0], sizes = [1, 1, 64], strides = [1, 1, 1]} : vector<3x15x64xf32> to vector<1x1x64xf32>
    %438 = vector.extract_strided_slice %436 {offsets = [0, 0, 1], sizes = [2, 16, 64], strides = [1, 1, 1]} : vector<2x16x80xf32> to vector<2x16x64xf32>
    %439 = vector.broadcast %437 : vector<1x1x64xf32> to vector<2x16x64xf32>
    %440 = arith.mulf %439, %438 : vector<2x16x64xf32>
    %441 = arith.addf %435, %440 : vector<2x16x64xf32>
    %442 = vector.extract_strided_slice %355 {offsets = [1, 1, 0], sizes = [1, 1, 64], strides = [1, 1, 1]} : vector<3x15x64xf32> to vector<1x1x64xf32>
    %443 = vector.extract_strided_slice %436 {offsets = [0, 0, 2], sizes = [2, 16, 64], strides = [1, 1, 1]} : vector<2x16x80xf32> to vector<2x16x64xf32>
    %444 = vector.broadcast %442 : vector<1x1x64xf32> to vector<2x16x64xf32>
    %445 = arith.mulf %444, %443 : vector<2x16x64xf32>
    %446 = arith.addf %441, %445 : vector<2x16x64xf32>
    %447 = vector.extract_strided_slice %355 {offsets = [1, 2, 0], sizes = [1, 1, 64], strides = [1, 1, 1]} : vector<3x15x64xf32> to vector<1x1x64xf32>
    %448 = vector.extract_strided_slice %436 {offsets = [0, 0, 3], sizes = [2, 16, 64], strides = [1, 1, 1]} : vector<2x16x80xf32> to vector<2x16x64xf32>
    %449 = vector.broadcast %447 : vector<1x1x64xf32> to vector<2x16x64xf32>
    %450 = arith.mulf %449, %448 : vector<2x16x64xf32>
    %451 = arith.addf %446, %450 : vector<2x16x64xf32>
    %452 = vector.extract_strided_slice %355 {offsets = [1, 3, 0], sizes = [1, 1, 64], strides = [1, 1, 1]} : vector<3x15x64xf32> to vector<1x1x64xf32>
    %453 = vector.extract_strided_slice %436 {offsets = [0, 0, 4], sizes = [2, 16, 64], strides = [1, 1, 1]} : vector<2x16x80xf32> to vector<2x16x64xf32>
    %454 = vector.broadcast %452 : vector<1x1x64xf32> to vector<2x16x64xf32>
    %455 = arith.mulf %454, %453 : vector<2x16x64xf32>
    %456 = arith.addf %451, %455 : vector<2x16x64xf32>
    %457 = vector.extract_strided_slice %355 {offsets = [1, 4, 0], sizes = [1, 1, 64], strides = [1, 1, 1]} : vector<3x15x64xf32> to vector<1x1x64xf32>
    %458 = vector.extract_strided_slice %436 {offsets = [0, 0, 5], sizes = [2, 16, 64], strides = [1, 1, 1]} : vector<2x16x80xf32> to vector<2x16x64xf32>
    %459 = vector.broadcast %457 : vector<1x1x64xf32> to vector<2x16x64xf32>
    %460 = arith.mulf %459, %458 : vector<2x16x64xf32>
    %461 = arith.addf %456, %460 : vector<2x16x64xf32>
    %462 = vector.extract_strided_slice %355 {offsets = [1, 5, 0], sizes = [1, 1, 64], strides = [1, 1, 1]} : vector<3x15x64xf32> to vector<1x1x64xf32>
    %463 = vector.extract_strided_slice %436 {offsets = [0, 0, 6], sizes = [2, 16, 64], strides = [1, 1, 1]} : vector<2x16x80xf32> to vector<2x16x64xf32>
    %464 = vector.broadcast %462 : vector<1x1x64xf32> to vector<2x16x64xf32>
    %465 = arith.mulf %464, %463 : vector<2x16x64xf32>
    %466 = arith.addf %461, %465 : vector<2x16x64xf32>
    %467 = vector.extract_strided_slice %355 {offsets = [1, 6, 0], sizes = [1, 1, 64], strides = [1, 1, 1]} : vector<3x15x64xf32> to vector<1x1x64xf32>
    %468 = vector.extract_strided_slice %436 {offsets = [0, 0, 7], sizes = [2, 16, 64], strides = [1, 1, 1]} : vector<2x16x80xf32> to vector<2x16x64xf32>
    %469 = vector.broadcast %467 : vector<1x1x64xf32> to vector<2x16x64xf32>
    %470 = arith.mulf %469, %468 : vector<2x16x64xf32>
    %471 = arith.addf %466, %470 : vector<2x16x64xf32>
    %472 = vector.extract_strided_slice %355 {offsets = [1, 7, 0], sizes = [1, 1, 64], strides = [1, 1, 1]} : vector<3x15x64xf32> to vector<1x1x64xf32>
    %473 = vector.extract_strided_slice %436 {offsets = [0, 0, 8], sizes = [2, 16, 64], strides = [1, 1, 1]} : vector<2x16x80xf32> to vector<2x16x64xf32>
    %474 = vector.broadcast %472 : vector<1x1x64xf32> to vector<2x16x64xf32>
    %475 = arith.mulf %474, %473 : vector<2x16x64xf32>
    %476 = arith.addf %471, %475 : vector<2x16x64xf32>
    %477 = vector.extract_strided_slice %355 {offsets = [1, 8, 0], sizes = [1, 1, 64], strides = [1, 1, 1]} : vector<3x15x64xf32> to vector<1x1x64xf32>
    %478 = vector.extract_strided_slice %436 {offsets = [0, 0, 9], sizes = [2, 16, 64], strides = [1, 1, 1]} : vector<2x16x80xf32> to vector<2x16x64xf32>
    %479 = vector.broadcast %477 : vector<1x1x64xf32> to vector<2x16x64xf32>
    %480 = arith.mulf %479, %478 : vector<2x16x64xf32>
    %481 = arith.addf %476, %480 : vector<2x16x64xf32>
    %482 = vector.extract_strided_slice %355 {offsets = [1, 9, 0], sizes = [1, 1, 64], strides = [1, 1, 1]} : vector<3x15x64xf32> to vector<1x1x64xf32>
    %483 = vector.extract_strided_slice %436 {offsets = [0, 0, 10], sizes = [2, 16, 64], strides = [1, 1, 1]} : vector<2x16x80xf32> to vector<2x16x64xf32>
    %484 = vector.broadcast %482 : vector<1x1x64xf32> to vector<2x16x64xf32>
    %485 = arith.mulf %484, %483 : vector<2x16x64xf32>
    %486 = arith.addf %481, %485 : vector<2x16x64xf32>
    %487 = vector.extract_strided_slice %355 {offsets = [1, 10, 0], sizes = [1, 1, 64], strides = [1, 1, 1]} : vector<3x15x64xf32> to vector<1x1x64xf32>
    %488 = vector.extract_strided_slice %436 {offsets = [0, 0, 11], sizes = [2, 16, 64], strides = [1, 1, 1]} : vector<2x16x80xf32> to vector<2x16x64xf32>
    %489 = vector.broadcast %487 : vector<1x1x64xf32> to vector<2x16x64xf32>
    %490 = arith.mulf %489, %488 : vector<2x16x64xf32>
    %491 = arith.addf %486, %490 : vector<2x16x64xf32>
    %492 = vector.extract_strided_slice %355 {offsets = [1, 11, 0], sizes = [1, 1, 64], strides = [1, 1, 1]} : vector<3x15x64xf32> to vector<1x1x64xf32>
    %493 = vector.extract_strided_slice %436 {offsets = [0, 0, 12], sizes = [2, 16, 64], strides = [1, 1, 1]} : vector<2x16x80xf32> to vector<2x16x64xf32>
    %494 = vector.broadcast %492 : vector<1x1x64xf32> to vector<2x16x64xf32>
    %495 = arith.mulf %494, %493 : vector<2x16x64xf32>
    %496 = arith.addf %491, %495 : vector<2x16x64xf32>
    %497 = vector.extract_strided_slice %355 {offsets = [1, 12, 0], sizes = [1, 1, 64], strides = [1, 1, 1]} : vector<3x15x64xf32> to vector<1x1x64xf32>
    %498 = vector.extract_strided_slice %436 {offsets = [0, 0, 13], sizes = [2, 16, 64], strides = [1, 1, 1]} : vector<2x16x80xf32> to vector<2x16x64xf32>
    %499 = vector.broadcast %497 : vector<1x1x64xf32> to vector<2x16x64xf32>
    %500 = arith.mulf %499, %498 : vector<2x16x64xf32>
    %501 = arith.addf %496, %500 : vector<2x16x64xf32>
    %502 = vector.extract_strided_slice %355 {offsets = [1, 13, 0], sizes = [1, 1, 64], strides = [1, 1, 1]} : vector<3x15x64xf32> to vector<1x1x64xf32>
    %503 = vector.extract_strided_slice %436 {offsets = [0, 0, 14], sizes = [2, 16, 64], strides = [1, 1, 1]} : vector<2x16x80xf32> to vector<2x16x64xf32>
    %504 = vector.broadcast %502 : vector<1x1x64xf32> to vector<2x16x64xf32>
    %505 = arith.mulf %504, %503 : vector<2x16x64xf32>
    %506 = arith.addf %501, %505 : vector<2x16x64xf32>
    %507 = vector.extract_strided_slice %355 {offsets = [1, 14, 0], sizes = [1, 1, 64], strides = [1, 1, 1]} : vector<3x15x64xf32> to vector<1x1x64xf32>
    %508 = vector.extract_strided_slice %436 {offsets = [0, 0, 15], sizes = [2, 16, 64], strides = [1, 1, 1]} : vector<2x16x80xf32> to vector<2x16x64xf32>
    %509 = vector.broadcast %507 : vector<1x1x64xf32> to vector<2x16x64xf32>
    %510 = arith.mulf %509, %508 : vector<2x16x64xf32>
    %511 = arith.addf %506, %510 : vector<2x16x64xf32>
    %512 = vector.extract_strided_slice %354 {offsets = [0, 2, 0], sizes = [2, 16, 80], strides = [1, 1, 1]} : vector<2x18x80xf32> to vector<2x16x80xf32>
    %513 = vector.extract_strided_slice %355 {offsets = [2, 0, 0], sizes = [1, 1, 64], strides = [1, 1, 1]} : vector<3x15x64xf32> to vector<1x1x64xf32>
    %514 = vector.extract_strided_slice %512 {offsets = [0, 0, 1], sizes = [2, 16, 64], strides = [1, 1, 1]} : vector<2x16x80xf32> to vector<2x16x64xf32>
    %515 = vector.broadcast %513 : vector<1x1x64xf32> to vector<2x16x64xf32>
    %516 = arith.mulf %515, %514 : vector<2x16x64xf32>
    %517 = arith.addf %511, %516 : vector<2x16x64xf32>
    %518 = vector.extract_strided_slice %355 {offsets = [2, 1, 0], sizes = [1, 1, 64], strides = [1, 1, 1]} : vector<3x15x64xf32> to vector<1x1x64xf32>
    %519 = vector.extract_strided_slice %512 {offsets = [0, 0, 2], sizes = [2, 16, 64], strides = [1, 1, 1]} : vector<2x16x80xf32> to vector<2x16x64xf32>
    %520 = vector.broadcast %518 : vector<1x1x64xf32> to vector<2x16x64xf32>
    %521 = arith.mulf %520, %519 : vector<2x16x64xf32>
    %522 = arith.addf %517, %521 : vector<2x16x64xf32>
    %523 = vector.extract_strided_slice %355 {offsets = [2, 2, 0], sizes = [1, 1, 64], strides = [1, 1, 1]} : vector<3x15x64xf32> to vector<1x1x64xf32>
    %524 = vector.extract_strided_slice %512 {offsets = [0, 0, 3], sizes = [2, 16, 64], strides = [1, 1, 1]} : vector<2x16x80xf32> to vector<2x16x64xf32>
    %525 = vector.broadcast %523 : vector<1x1x64xf32> to vector<2x16x64xf32>
    %526 = arith.mulf %525, %524 : vector<2x16x64xf32>
    %527 = arith.addf %522, %526 : vector<2x16x64xf32>
    %528 = vector.extract_strided_slice %355 {offsets = [2, 3, 0], sizes = [1, 1, 64], strides = [1, 1, 1]} : vector<3x15x64xf32> to vector<1x1x64xf32>
    %529 = vector.extract_strided_slice %512 {offsets = [0, 0, 4], sizes = [2, 16, 64], strides = [1, 1, 1]} : vector<2x16x80xf32> to vector<2x16x64xf32>
    %530 = vector.broadcast %528 : vector<1x1x64xf32> to vector<2x16x64xf32>
    %531 = arith.mulf %530, %529 : vector<2x16x64xf32>
    %532 = arith.addf %527, %531 : vector<2x16x64xf32>
    %533 = vector.extract_strided_slice %355 {offsets = [2, 4, 0], sizes = [1, 1, 64], strides = [1, 1, 1]} : vector<3x15x64xf32> to vector<1x1x64xf32>
    %534 = vector.extract_strided_slice %512 {offsets = [0, 0, 5], sizes = [2, 16, 64], strides = [1, 1, 1]} : vector<2x16x80xf32> to vector<2x16x64xf32>
    %535 = vector.broadcast %533 : vector<1x1x64xf32> to vector<2x16x64xf32>
    %536 = arith.mulf %535, %534 : vector<2x16x64xf32>
    %537 = arith.addf %532, %536 : vector<2x16x64xf32>
    %538 = vector.extract_strided_slice %355 {offsets = [2, 5, 0], sizes = [1, 1, 64], strides = [1, 1, 1]} : vector<3x15x64xf32> to vector<1x1x64xf32>
    %539 = vector.extract_strided_slice %512 {offsets = [0, 0, 6], sizes = [2, 16, 64], strides = [1, 1, 1]} : vector<2x16x80xf32> to vector<2x16x64xf32>
    %540 = vector.broadcast %538 : vector<1x1x64xf32> to vector<2x16x64xf32>
    %541 = arith.mulf %540, %539 : vector<2x16x64xf32>
    %542 = arith.addf %537, %541 : vector<2x16x64xf32>
    %543 = vector.extract_strided_slice %355 {offsets = [2, 6, 0], sizes = [1, 1, 64], strides = [1, 1, 1]} : vector<3x15x64xf32> to vector<1x1x64xf32>
    %544 = vector.extract_strided_slice %512 {offsets = [0, 0, 7], sizes = [2, 16, 64], strides = [1, 1, 1]} : vector<2x16x80xf32> to vector<2x16x64xf32>
    %545 = vector.broadcast %543 : vector<1x1x64xf32> to vector<2x16x64xf32>
    %546 = arith.mulf %545, %544 : vector<2x16x64xf32>
    %547 = arith.addf %542, %546 : vector<2x16x64xf32>
    %548 = vector.extract_strided_slice %355 {offsets = [2, 7, 0], sizes = [1, 1, 64], strides = [1, 1, 1]} : vector<3x15x64xf32> to vector<1x1x64xf32>
    %549 = vector.extract_strided_slice %512 {offsets = [0, 0, 8], sizes = [2, 16, 64], strides = [1, 1, 1]} : vector<2x16x80xf32> to vector<2x16x64xf32>
    %550 = vector.broadcast %548 : vector<1x1x64xf32> to vector<2x16x64xf32>
    %551 = arith.mulf %550, %549 : vector<2x16x64xf32>
    %552 = arith.addf %547, %551 : vector<2x16x64xf32>
    %553 = vector.extract_strided_slice %355 {offsets = [2, 8, 0], sizes = [1, 1, 64], strides = [1, 1, 1]} : vector<3x15x64xf32> to vector<1x1x64xf32>
    %554 = vector.extract_strided_slice %512 {offsets = [0, 0, 9], sizes = [2, 16, 64], strides = [1, 1, 1]} : vector<2x16x80xf32> to vector<2x16x64xf32>
    %555 = vector.broadcast %553 : vector<1x1x64xf32> to vector<2x16x64xf32>
    %556 = arith.mulf %555, %554 : vector<2x16x64xf32>
    %557 = arith.addf %552, %556 : vector<2x16x64xf32>
    %558 = vector.extract_strided_slice %355 {offsets = [2, 9, 0], sizes = [1, 1, 64], strides = [1, 1, 1]} : vector<3x15x64xf32> to vector<1x1x64xf32>
    %559 = vector.extract_strided_slice %512 {offsets = [0, 0, 10], sizes = [2, 16, 64], strides = [1, 1, 1]} : vector<2x16x80xf32> to vector<2x16x64xf32>
    %560 = vector.broadcast %558 : vector<1x1x64xf32> to vector<2x16x64xf32>
    %561 = arith.mulf %560, %559 : vector<2x16x64xf32>
    %562 = arith.addf %557, %561 : vector<2x16x64xf32>
    %563 = vector.extract_strided_slice %355 {offsets = [2, 10, 0], sizes = [1, 1, 64], strides = [1, 1, 1]} : vector<3x15x64xf32> to vector<1x1x64xf32>
    %564 = vector.extract_strided_slice %512 {offsets = [0, 0, 11], sizes = [2, 16, 64], strides = [1, 1, 1]} : vector<2x16x80xf32> to vector<2x16x64xf32>
    %565 = vector.broadcast %563 : vector<1x1x64xf32> to vector<2x16x64xf32>
    %566 = arith.mulf %565, %564 : vector<2x16x64xf32>
    %567 = arith.addf %562, %566 : vector<2x16x64xf32>
    %568 = vector.extract_strided_slice %355 {offsets = [2, 11, 0], sizes = [1, 1, 64], strides = [1, 1, 1]} : vector<3x15x64xf32> to vector<1x1x64xf32>
    %569 = vector.extract_strided_slice %512 {offsets = [0, 0, 12], sizes = [2, 16, 64], strides = [1, 1, 1]} : vector<2x16x80xf32> to vector<2x16x64xf32>
    %570 = vector.broadcast %568 : vector<1x1x64xf32> to vector<2x16x64xf32>
    %571 = arith.mulf %570, %569 : vector<2x16x64xf32>
    %572 = arith.addf %567, %571 : vector<2x16x64xf32>
    %573 = vector.extract_strided_slice %355 {offsets = [2, 12, 0], sizes = [1, 1, 64], strides = [1, 1, 1]} : vector<3x15x64xf32> to vector<1x1x64xf32>
    %574 = vector.extract_strided_slice %512 {offsets = [0, 0, 13], sizes = [2, 16, 64], strides = [1, 1, 1]} : vector<2x16x80xf32> to vector<2x16x64xf32>
    %575 = vector.broadcast %573 : vector<1x1x64xf32> to vector<2x16x64xf32>
    %576 = arith.mulf %575, %574 : vector<2x16x64xf32>
    %577 = arith.addf %572, %576 : vector<2x16x64xf32>
    %578 = vector.extract_strided_slice %355 {offsets = [2, 13, 0], sizes = [1, 1, 64], strides = [1, 1, 1]} : vector<3x15x64xf32> to vector<1x1x64xf32>
    %579 = vector.extract_strided_slice %512 {offsets = [0, 0, 14], sizes = [2, 16, 64], strides = [1, 1, 1]} : vector<2x16x80xf32> to vector<2x16x64xf32>
    %580 = vector.broadcast %578 : vector<1x1x64xf32> to vector<2x16x64xf32>
    %581 = arith.mulf %580, %579 : vector<2x16x64xf32>
    %582 = arith.addf %577, %581 : vector<2x16x64xf32>
    %583 = vector.extract_strided_slice %355 {offsets = [2, 14, 0], sizes = [1, 1, 64], strides = [1, 1, 1]} : vector<3x15x64xf32> to vector<1x1x64xf32>
    %584 = vector.extract_strided_slice %512 {offsets = [0, 0, 15], sizes = [2, 16, 64], strides = [1, 1, 1]} : vector<2x16x80xf32> to vector<2x16x64xf32>
    %585 = vector.broadcast %583 : vector<1x1x64xf32> to vector<2x16x64xf32>
    %586 = arith.mulf %585, %584 : vector<2x16x64xf32>
    %587 = arith.addf %582, %586 : vector<2x16x64xf32>
    %cst_51 = arith.constant 0.000000e+00 : f32
    %588 = vector.broadcast %cst_51 : f32 to vector<2x16x64xf32>
    %589 = arith.maximumf %587, %588 : vector<2x16x64xf32>
    %590 = arith.addf %21, %589 : vector<2x16x64xf32>
    %c0_52 = arith.constant 0 : index
    %c0_53 = arith.constant 0 : index
    %c0_54 = arith.constant 0 : index
    %591 = vector.load %arg12[%c0_52, %c0_53, %c0_54] : memref<2x16x64xf32, #tpu.memory_space<vmem>>, vector<2x16x64xf32>
    tpu.vector_store %arg12[%c0_52, %c0_53, %c0_54], %590 {strides = array<i32>} : memref<2x16x64xf32, #tpu.memory_space<vmem>>, vector<2x16x64xf32>,
    return
  }
  func.func @transform_0(%arg0: i32) -> (i32, i32, i32) {
    %c0_i32 = arith.constant 0 : i32
    %c0_i32_0 = arith.constant 0 : i32
    %c0_i32_1 = arith.constant 0 : i32
    %c0_i32_2 = arith.constant 0 : i32
    return %c0_i32, %c0_i32_0, %c0_i32_1 : i32, i32, i32
  }
  func.func @transform_1(%arg0: i32) -> (i32, i32) {
    %c0_i32 = arith.constant 0 : i32
    %c0_i32_0 = arith.constant 0 : i32
    %c0_i32_1 = arith.constant 0 : i32
    return %c0_i32, %c0_i32_0 : i32, i32
  }
  func.func @transform_2(%arg0: i32) -> (i32, i32) {
    %c0_i32 = arith.constant 0 : i32
    %c0_i32_0 = arith.constant 0 : i32
    %c0_i32_1 = arith.constant 0 : i32
    return %c0_i32, %c0_i32_0 : i32, i32
  }
  func.func @transform_3(%arg0: i32) -> (i32, i32, i32) {
    %c0_i32 = arith.constant 0 : i32
    %c0_i32_0 = arith.constant 0 : i32
    %c0_i32_1 = arith.constant 0 : i32
    %c0_i32_2 = arith.constant 0 : i32
    return %c0_i32, %c0_i32_0, %c0_i32_1 : i32, i32, i32
  }
  func.func @transform_4(%arg0: i32) -> (i32, i32) {
    %c0_i32 = arith.constant 0 : i32
    %c0_i32_0 = arith.constant 0 : i32
    %c0_i32_1 = arith.constant 0 : i32
    return %c0_i32, %c0_i32_0 : i32, i32
  }
  func.func @transform_5(%arg0: i32) -> (i32, i32) {
    %c0_i32 = arith.constant 0 : i32
    %c0_i32_0 = arith.constant 0 : i32
    %c0_i32_1 = arith.constant 0 : i32
    return %c0_i32, %c0_i32_0 : i32, i32
  }
  func.func @transform_6(%arg0: i32) -> (i32, i32) {
    %c0_i32 = arith.constant 0 : i32
    %c0_i32_0 = arith.constant 0 : i32
    %c0_i32_1 = arith.constant 0 : i32
    return %c0_i32, %c0_i32_0 : i32, i32
  }
  func.func @transform_7(%arg0: i32) -> (i32, i32) {
    %c0_i32 = arith.constant 0 : i32
    %c0_i32_0 = arith.constant 0 : i32
    %c0_i32_1 = arith.constant 0 : i32
    return %c0_i32, %c0_i32_0 : i32, i32
  }
  func.func @transform_8(%arg0: i32) -> (i32, i32, i32) {
    %c0_i32 = arith.constant 0 : i32
    %c0_i32_0 = arith.constant 0 : i32
    %c0_i32_1 = arith.constant 0 : i32
    %c0_i32_2 = arith.constant 0 : i32
    return %c0_i32, %c0_i32_0, %c0_i32_1 : i32, i32, i32
  }
  func.func @transform_9(%arg0: i32) -> (i32, i32) {
    %c0_i32 = arith.constant 0 : i32
    %c0_i32_0 = arith.constant 0 : i32
    %c0_i32_1 = arith.constant 0 : i32
    return %c0_i32, %c0_i32_0 : i32, i32
  }
  func.func @transform_10(%arg0: i32) -> (i32, i32) {
    %c0_i32 = arith.constant 0 : i32
    %c0_i32_0 = arith.constant 0 : i32
    %c0_i32_1 = arith.constant 0 : i32
    return %c0_i32, %c0_i32_0 : i32, i32
  }
  func.func @transform_11(%arg0: i32) -> (i32, i32, i32) {
    %c0_i32 = arith.constant 0 : i32
    %c0_i32_0 = arith.constant 0 : i32
    %c0_i32_1 = arith.constant 0 : i32
    %c0_i32_2 = arith.constant 0 : i32
    return %c0_i32, %c0_i32_0, %c0_i32_1 : i32, i32, i32
  }
}

</mosaic_0001>

<llo_original>
// kernel: tpu_custom_call.1
$region0: #{tpu_custom_call.1}
  #allocation0 [shape = 'u32[]', space=smem, size = 0x4, offset = 0x4, fixed_abs, tag = 'smem constant byte address 0x4 - core index']
  #allocation1 [shape = 'u32[144,128]{1,0:T(1,128)}', space=vmem, size = 0x12000, scoped, tag = 'internal scratch']
  %s0 = inlined_call_operand.hbm [shape: f32[2,16,64], index: 0, kind: input, shape index: {}]
  %s1 = inlined_call_operand.vmem [shape: f32[4,1], index: 1, kind: input, shape index: {}]
  %s2 = inlined_call_operand.vmem [shape: f32[4,1], index: 2, kind: input, shape index: {}]
  %s3 = inlined_call_operand.hbm [shape: f32[3,15,64], index: 3, kind: input, shape index: {}]
  %s4 = inlined_call_operand.hbm [shape: f32[4,64], index: 4, kind: input, shape index: {}]
  %s5 = inlined_call_operand.vmem [shape: f32[1,64], index: 5, kind: input, shape index: {}]
  %s6 = inlined_call_operand.vmem [shape: f32[4,1], index: 6, kind: input, shape index: {}]
  %s7 = inlined_call_operand.vmem [shape: f32[4,1], index: 7, kind: input, shape index: {}]
  %s8 = inlined_call_operand.vmem [shape: f32[3,15,64], index: 8, kind: input, shape index: {}]
  %s9 = inlined_call_operand.vmem [shape: f32[4,64], index: 9, kind: input, shape index: {}]
  %s10 = inlined_call_operand.vmem [shape: f32[1,64], index: 10, kind: input, shape index: {}]
  %s11 = inlined_call_operand.hbm [shape: f32[2,16,64], index: 11, kind: output, shape index: {}]
  %s12 = sld [smem:[#allocation0]]
  $region66: #{tpu_custom_call.1} parent=0
    _
  %s14 = ssub.s32 1, %s12
  %s15 = scalar_select 0, %s14, %s12
  $region1: #{tpu_custom_call.1} parent=0
    #allocation2 [shape = 'u8[16384]{0}', space=vmem, size = 0x4000, scoped, tag = 'input window, operand 0, single buffered']
    #allocation3 [shape = 's32[1]{0}', space=sflag, size = 0x4, scoped, tag = 'scoped memory for tpu_custom_call.1']
    #allocation4 [shape = 's32[1]{0}', space=sflag, size = 0x4, scoped, tag = 'scoped memory for tpu_custom_call.1']
    #allocation5 [shape = 'u8[24576]{0}', space=vmem, size = 0x6000, scoped, tag = 'input window, operand 3, single buffered']
    #allocation6 [shape = 's32[1]{0}', space=sflag, size = 0x4, scoped, tag = 'scoped memory for tpu_custom_call.1']
    #allocation7 [shape = 'u8[2048]{0}', space=vmem, size = 0x800, scoped, tag = 'input window, operand 4, single buffered']
    #allocation8 [shape = 'u8[16384]{0}', space=vmem, size = 0x4000, scoped, tag = 'output window, operand 0, single buffered']
    %16 = vsyncpa [#allocation3], 0
    %17 = vsyncpa [#allocation6], 0
    %18 = vsyncpa [#allocation4], 0
    // Predicated region
    $region2: #{tpu_custom_call.1} parent=1 // pred_check
      _
    $region3: #{tpu_custom_call.1} parent=1 // pred_check_branch
      %20 = sbr.rel (0) target = $region5
    $region4: #{tpu_custom_call.1} parent=1 // pred_region
      %s22 = ssub.s32 512, 512
      %23 = vsyncadd [#allocation3], %s22
      %s24 = sshll.u32 [#allocation2], 4
      %s25 = int_to_ptr.vmem [resolvable:$true] %s24
      %30 = dma.hbm_to_vmem [thread:$0]  %s0, 512, %s25, [#allocation3], 128, 128, 8
    $region5: #{tpu_custom_call.1} parent=1 // pred_fallthru
      _
    // Predicated region
    $region6: #{tpu_custom_call.1} parent=1 // pred_check
      _
    $region7: #{tpu_custom_call.1} parent=1 // pred_check_branch
      %32 = sbr.rel (0) target = $region9
    $region8: #{tpu_custom_call.1} parent=1 // pred_region
      _
    $region9: #{tpu_custom_call.1} parent=1 // pred_fallthru
      _
    // Predicated region
    $region10: #{tpu_custom_call.1} parent=1 // pred_check
      _
    $region11: #{tpu_custom_call.1} parent=1 // pred_check_branch
      %34 = sbr.rel (0) target = $region13
    $region12: #{tpu_custom_call.1} parent=1 // pred_region
      _
    $region13: #{tpu_custom_call.1} parent=1 // pred_fallthru
      _
    // Predicated region
    $region14: #{tpu_custom_call.1} parent=1 // pred_check
      _
    $region15: #{tpu_custom_call.1} parent=1 // pred_check_branch
      %36 = sbr.rel (0) target = $region17
    $region16: #{tpu_custom_call.1} parent=1 // pred_region
      %s38 = ssub.s32 768, 768
      %39 = vsyncadd [#allocation6], %s38
      %s40 = sshll.u32 [#allocation5], 4
      %s41 = int_to_ptr.vmem [resolvable:$true] %s40
      %46 = dma.hbm_to_vmem [thread:$0]  %s3, 768, %s41, [#allocation6], 128, 128, 8
    $region17: #{tpu_custom_call.1} parent=1 // pred_fallthru
      _
    // Predicated region
    $region18: #{tpu_custom_call.1} parent=1 // pred_check
      _
    $region19: #{tpu_custom_call.1} parent=1 // pred_check_branch
      %48 = sbr.rel (0) target = $region21
    $region20: #{tpu_custom_call.1} parent=1 // pred_region
      %s50 = ssub.s32 64, 64
      %51 = vsyncadd [#allocation6], %s50
      %s53 = sshll.u32 [#allocation7], 4
      %s54 = int_to_ptr.vmem [resolvable:$true] %s53
      %56 = dma.hbm_to_vmem [thread:$0]  %s4, 64, %s54, [#allocation6]
    $region21: #{tpu_custom_call.1} parent=1 // pred_fallthru
      _
    // Predicated region
    $region22: #{tpu_custom_call.1} parent=1 // pred_check
      _
    $region23: #{tpu_custom_call.1} parent=1 // pred_check_branch
      %58 = sbr.rel (0) target = $region25
    $region24: #{tpu_custom_call.1} parent=1 // pred_region
      _
    $region25: #{tpu_custom_call.1} parent=1 // pred_fallthru
      _
    // Predicated region
    $region26: #{tpu_custom_call.1} parent=1 // pred_check
      _
    $region27: #{tpu_custom_call.1} parent=1 // pred_check_branch
      %60 = sbr.rel (0) target = $region29
    $region28: #{tpu_custom_call.1} parent=1 // pred_region
      _
    $region29: #{tpu_custom_call.1} parent=1 // pred_fallthru
      _
    // Predicated region
    $region30: #{tpu_custom_call.1} parent=1 // pred_check
      _
    $region31: #{tpu_custom_call.1} parent=1 // pred_check_branch
      %62 = sbr.rel (0) target = $region33
    $region32: #{tpu_custom_call.1} parent=1 // pred_region
      _
    $region33: #{tpu_custom_call.1} parent=1 // pred_fallthru
      _
    // Predicated region
    $region34: #{tpu_custom_call.1} parent=1 // pred_check
      _
    $region35: #{tpu_custom_call.1} parent=1 // pred_check_branch
      %64 = sbr.rel (0) target = $region37
    $region36: #{tpu_custom_call.1} parent=1 // pred_region
      _
    $region37: #{tpu_custom_call.1} parent=1 // pred_fallthru
      _
    // Predicated region
    $region38: #{tpu_custom_call.1} parent=1 // pred_check
      _
    $region39: #{tpu_custom_call.1} parent=1 // pred_check_branch
      %66 = sbr.rel (0) target = $region41
    $region40: #{tpu_custom_call.1} parent=1 // pred_region
      _
    $region41: #{tpu_custom_call.1} parent=1 // pred_fallthru
      _
    // Predicated region
    $region42: #{tpu_custom_call.1} parent=1 // pred_check
      _
    $region43: #{tpu_custom_call.1} parent=1 // pred_check_branch
      %68 = sbr.rel (0) target = $region45
    $region44: #{tpu_custom_call.1} parent=1 // pred_region
      _
    $region45: #{tpu_custom_call.1} parent=1 // pred_fallthru
      _
    // Predicated region
    $region46: #{tpu_custom_call.1} parent=1 // pred_check
      _
    $region47: #{tpu_custom_call.1} parent=1 // pred_check_branch
      %70 = sbr.rel (0) target = $region49
    $region48: #{tpu_custom_call.1} parent=1 // pred_region
      %71 = dma.done [#allocation3], 512
    $region49: #{tpu_custom_call.1} parent=1 // pred_fallthru
      _
    // Predicated region
    $region50: #{tpu_custom_call.1} parent=1 // pred_check
      _
    $region51: #{tpu_custom_call.1} parent=1 // pred_check_branch
      %73 = sbr.rel (0) target = $region53
    $region52: #{tpu_custom_call.1} parent=1 // pred_region
      %74 = dma.done [#allocation6], 768
    $region53: #{tpu_custom_call.1} parent=1 // pred_fallthru
      _
    // Predicated region
    $region54: #{tpu_custom_call.1} parent=1 // pred_check
      _
    $region55: #{tpu_custom_call.1} parent=1 // pred_check_branch
      %76 = sbr.rel (0) target = $region57
    $region56: #{tpu_custom_call.1} parent=1 // pred_region
      %77 = dma.done [#allocation6], 64
    $region57: #{tpu_custom_call.1} parent=1 // pred_fallthru
      _
    %v78 = vlaneseq
    %v79 = vand.u32 %v78, 127
    %vm80 = vcmp.lt.s32.totalorder %v79, 0
    %v81 = vsub.s32 0, %v79
    %v82 = vsel %vm80, %v81, %v79
    %v83 = vshrl.u32 %v82, 2
    %v84 = vand.u32 %v82, 3
    %v85 = vsub.s32 0, %v84
    %v86 = vsel %vm80, %v85, %v84
    %vm87 = vcmp.ne.s32.totalorder %v86, 0
    %vm88 = vcmp.lt.s32.totalorder %v86, 0
    %vm89 = vmand %vm88, %vm87
    %v90 = vadd.s32 %v86, 4
    %v91 = vsel %vm89, %v90, %v86
    %v92 = vlaneseq
    %v93 = vshrl.u32 %v92, 7
    %vm94 = vcmp.eq.s32.totalorder %v91, %v93
    %v95 = vsel %vm94, 1, 0
    %v96 = vcvt.s32.f32 %v95
    %v97 = vld [vmem:[#allocation2] sm:$0xff]
    %v98 = vld [vmem:[#allocation2 + $0x8] sm:$0xff]
    %v99 = vld [vmem:[#allocation2 + $0x10] sm:$0xff]
    %v100 = vld [vmem:[#allocation2 + $0x18] sm:$0xff]
    %vm101 = vcmask 523264
    %v102 = vsel %vm101, %v97, 0.0
    %v103 = vsel %vm101, %v99, 0.0
    %v104 = vadd.f32 %v102, %v103
    %v105 = vsel %vm101, %v98, 0.0
    %v106 = vsel %vm101, %v100, 0.0
    %v107 = vadd.f32 %v105, %v106
    %v108 = vsel %vm101, %v104, 0.0
    %v109 = vsel %vm101, %v107, 0.0
    %v110 = vadd.f32 %v108, %v109
    %v111 = vrot.slane %v110, 4
    %v112 = vadd.f32 %v110, %v111
    %v113 = vrot.slane %v112, 2
    %v114 = vadd.f32 %v112, %v113
    %v115 = vrot.slane %v114, 1
    %v116 = vadd.f32 %v114, %v115
    %v117 = vmul.f32 %v97, %v97
    %v118 = vmul.f32 %v98, %v98
    %v119 = vmul.f32 %v99, %v99
    %v120 = vmul.f32 %v100, %v100
    %v121 = vsel %vm101, %v117, 0.0
    %v122 = vsel %vm101, %v119, 0.0
    %v123 = vadd.f32 %v121, %v122
    %v124 = vsel %vm101, %v118, 0.0
    %v125 = vsel %vm101, %v120, 0.0
    %v126 = vadd.f32 %v124, %v125
    %v127 = vsel %vm101, %v123, 0.0
    %v128 = vsel %vm101, %v126, 0.0
    %v129 = vadd.f32 %v127, %v128
    %v130 = vrot.slane %v129, 4
    %v131 = vadd.f32 %v129, %v130
    %v132 = vrot.slane %v131, 2
    %v133 = vadd.f32 %v131, %v132
    %v134 = vrot.slane %v133, 1
    %v135 = vadd.f32 %v133, %v134
    %v136 = vmul.f32 %v96, %v116
    %vm137 = vcmask 519168
    %v138 = vsel %vm137, %v136, 0.0
    %139 = vadd.xlane.f32.xlu0 %v138
    %v140 = vpop.xlane.xlu0 %139
    %v141 = vmul.f32 %v96, %v135
    %v142 = vsel %vm137, %v141, 0.0
    %143 = vadd.xlane.f32.xlu0 %v142
    %v144 = vpop.xlane.xlu0 %143
    %v145 = vmul.f32 %v140, 0.001953125
    %v146 = vmul.f32 %v144, 0.001953125
    %v147 = vmul.f32 %v145, %v145
    %v148 = vsub.f32 %v146, %v147
    %v149 = vld [vmem:[%s1] sm:$0xf]
    %v150 = vadd.f32 %v148, 1e-05
    %v151 = vrsqrt.pop %v150
    %v152 = vmul.f32 %v149, %v151
    %v153 = vld [vmem:[%s2] sm:$0xf]
    %v154 = vmul.f32 %v145, %v152
    %v155 = vsub.f32 %v153, %v154
    %157 = vset.pattern.permute.xlu0 0
    %158 = vperm.xlu0 %157, %v152
    %v159 = vpop.permute.xlu0 %158
    %v161 = vmul.f32 %v96, %v159
    %v162 = vsel %vm137, %v161, 0.0
    %v163 = vrot.slane %v162, 4
    %v164 = vadd.f32 %v162, %v163
    %v165 = vrot.slane %v164, 2
    %v166 = vadd.f32 %v164, %v165
    %v167 = vrot.slane %v166, 1
    %v168 = vadd.f32 %v166, %v167
    %v169 = vld [vmem:[%s5] sm:$0x1]
    %v170 = vld [vmem:[#allocation7] sm:$0xf]
    %172 = vset.pattern.permute.xlu0 0
    %173 = vperm.xlu0 %172, %v155
    %v174 = vpop.permute.xlu0 %173
    %v176 = vmul.f32 %v170, %v174
    %v177 = vsel %vm137, %v176, 0.0
    %v178 = vrot.slane %v177, 4
    %v179 = vadd.f32 %v177, %v178
    %v180 = vrot.slane %v179, 2
    %v181 = vadd.f32 %v179, %v180
    %v182 = vrot.slane %v181, 1
    %v183 = vadd.f32 %v181, %v182
    %v184 = vadd.f32 %v169, %v183
    %v185 = vmul.f32 %v97, %v168
    %v186 = vmul.f32 %v98, %v168
    %v187 = vmul.f32 %v99, %v168
    %v188 = vmul.f32 %v100, %v168
    %193 = vrot.lane.b32.xlu0 %v185, 124
    %v194 = vpop.permute.xlu0 %193
    %195 = vrot.lane.b32.xlu0 %v186, 124
    %v196 = vpop.permute.xlu0 %195
    %197 = vrot.lane.b32.xlu0 %v187, 124
    %v198 = vpop.permute.xlu0 %197
    %199 = vrot.lane.b32.xlu0 %v188, 124
    %v200 = vpop.permute.xlu0 %199
    %205 = vrot.lane.b32.xlu0 %v185, 8
    %v206 = vpop.permute.xlu0 %205
    %207 = vrot.lane.b32.xlu0 %v186, 8
    %v208 = vpop.permute.xlu0 %207
    %209 = vrot.lane.b32.xlu0 %v187, 8
    %v210 = vpop.permute.xlu0 %209
    %211 = vrot.lane.b32.xlu0 %v188, 8
    %v212 = vpop.permute.xlu0 %211
    %217 = vrot.lane.b32.xlu0 %v185, 16
    %v218 = vpop.permute.xlu0 %217
    %219 = vrot.lane.b32.xlu0 %v186, 16
    %v220 = vpop.permute.xlu0 %219
    %221 = vrot.lane.b32.xlu0 %v187, 16
    %v222 = vpop.permute.xlu0 %221
    %223 = vrot.lane.b32.xlu0 %v188, 16
    %v224 = vpop.permute.xlu0 %223
    %229 = vrot.lane.b32.xlu0 %v185, 20
    %v230 = vpop.permute.xlu0 %229
    %231 = vrot.lane.b32.xlu0 %v186, 20
    %v232 = vpop.permute.xlu0 %231
    %233 = vrot.lane.b32.xlu0 %v187, 20
    %v234 = vpop.permute.xlu0 %233
    %235 = vrot.lane.b32.xlu0 %v188, 20
    %v236 = vpop.permute.xlu0 %235
    %vm241 = vcmask 31744
    %v242 = vsel %vm241, %v194, %v185
    %v243 = vsel %vm241, %v196, %v186
    %v244 = vsel %vm241, %v198, %v187
    %v245 = vsel %vm241, %v200, %v188
    %vm246 = vcmask 64512
    %v247 = vsel %vm246, %v242, %v206
    %v248 = vsel %vm246, %v243, %v208
    %v249 = vsel %vm246, %v244, %v210
    %v250 = vsel %vm246, %v245, %v212
    %vm251 = vcmask 588800
    %v252 = vsel %vm251, %v247, %v218
    %v253 = vsel %vm251, %v248, %v220
    %v254 = vsel %vm251, %v249, %v222
    %v255 = vsel %vm251, %v250, %v224
    %vm256 = vcmask 621568
    %v257 = vsel %vm256, %v252, %v230
    %v258 = vsel %vm256, %v253, %v232
    %v259 = vsel %vm256, %v254, %v234
    %v260 = vsel %vm256, %v255, %v236
    %v263 = vrot.slane %v257, 1
    %v264 = vrot.slane %v259, 1
    %vm269 = vcmask 1040384
    %v270 = vrot.slane %v257, 7
    %v271 = vrot.slane %v258, 7
    %v272 = vsel %vm269, %v270, %v271
    %v273 = vrot.slane %v259, 7
    %v274 = vrot.slane %v260, 7
    %v275 = vsel %vm269, %v273, %v274
    %v280 = vrot.slane %v258, 5
    %v281 = vrot.slane %v260, 5
    %v284 = vsel %vm269, %v263, %v270
    %v285 = vsel %vm269, %v264, %v273
    %v286 = vsel %vm269, %v271, %v280
    %v287 = vsel %vm269, %v274, %v281
    %v288 = vld [vmem:[#allocation5] sm:$0xff]
    %v289 = vld [vmem:[#allocation5 + $0x8] sm:$0x7f]
    %v290 = vld [vmem:[#allocation5 + $0x10] sm:$0xff]
    %v291 = vld [vmem:[#allocation5 + $0x18] sm:$0x7f]
    %v292 = vld [vmem:[#allocation5 + $0x20] sm:$0xff]
    %v293 = vld [vmem:[#allocation5 + $0x28] sm:$0x7f]
    %v295 = vlaneseq
    %v296 = vshrl.u32 %v295, 7
    %v297 = vsub.s32 0, %v296
    %v298 = vrot.slane %v184, %v297
    %v300 = vadd.f32 %v298, 0.0
    %v301 = vlaneseq
    %v302 = vshrl.u32 %v301, 7
    %v303 = vsub.s32 0, %v302
    %v304 = vrot.slane %v288, %v303
    %307 = vrot.lane.b32.xlu0 %v284, 127
    %v308 = vpop.permute.xlu0 %307
    %309 = vrot.lane.b32.xlu0 %v272, 127
    %v310 = vpop.permute.xlu0 %309
    %311 = vrot.lane.b32.xlu0 %v285, 127
    %v312 = vpop.permute.xlu0 %311
    %313 = vrot.lane.b32.xlu0 %v275, 127
    %v314 = vpop.permute.xlu0 %313
    %v319 = vmul.f32 %v304, %v308
    %v320 = vmul.f32 %v304, %v310
    %v321 = vmul.f32 %v304, %v312
    %v322 = vmul.f32 %v304, %v314
    %v323 = vadd.f32 %v300, %v319
    %v324 = vadd.f32 %v300, %v320
    %v325 = vadd.f32 %v300, %v321
    %v326 = vadd.f32 %v300, %v322
    %v327 = vlaneseq
    %v328 = vshrl.u32 %v327, 7
    %v329 = vsub.s32 1, %v328
    %v330 = vrot.slane %v288, %v329
    %331 = vrot.lane.b32.xlu0 %v284, 126
    %v332 = vpop.permute.xlu0 %331
    %333 = vrot.lane.b32.xlu0 %v272, 126
    %v334 = vpop.permute.xlu0 %333
    %335 = vrot.lane.b32.xlu0 %v285, 126
    %v336 = vpop.permute.xlu0 %335
    %337 = vrot.lane.b32.xlu0 %v275, 126
    %v338 = vpop.permute.xlu0 %337
    %v343 = vmul.f32 %v330, %v332
    %v344 = vmul.f32 %v330, %v334
    %v345 = vmul.f32 %v330, %v336
    %v346 = vmul.f32 %v330, %v338
    %v347 = vadd.f32 %v323, %v343
    %v348 = vadd.f32 %v324, %v344
    %v349 = vadd.f32 %v325, %v345
    %v350 = vadd.f32 %v326, %v346
    %v351 = vlaneseq
    %v352 = vshrl.u32 %v351, 7
    %v353 = vsub.s32 2, %v352
    %v354 = vrot.slane %v288, %v353
    %355 = vrot.lane.b32.xlu0 %v284, 125
    %v356 = vpop.permute.xlu0 %355
    %357 = vrot.lane.b32.xlu0 %v272, 125
    %v358 = vpop.permute.xlu0 %357
    %359 = vrot.lane.b32.xlu0 %v285, 125
    %v360 = vpop.permute.xlu0 %359
    %361 = vrot.lane.b32.xlu0 %v275, 125
    %v362 = vpop.permute.xlu0 %361
    %v367 = vmul.f32 %v354, %v356
    %v368 = vmul.f32 %v354, %v358
    %v369 = vmul.f32 %v354, %v360
    %v370 = vmul.f32 %v354, %v362
    %v371 = vadd.f32 %v347, %v367
    %v372 = vadd.f32 %v348, %v368
    %v373 = vadd.f32 %v349, %v369
    %v374 = vadd.f32 %v350, %v370
    %v375 = vlaneseq
    %v376 = vshrl.u32 %v375, 7
    %v377 = vsub.s32 3, %v376
    %v378 = vrot.slane %v288, %v377
    %379 = vrot.lane.b32.xlu0 %v284, 124
    %v380 = vpop.permute.xlu0 %379
    %381 = vrot.lane.b32.xlu0 %v272, 124
    %v382 = vpop.permute.xlu0 %381
    %383 = vrot.lane.b32.xlu0 %v285, 124
    %v384 = vpop.permute.xlu0 %383
    %385 = vrot.lane.b32.xlu0 %v275, 124
    %v386 = vpop.permute.xlu0 %385
    %v391 = vmul.f32 %v378, %v380
    %v392 = vmul.f32 %v378, %v382
    %v393 = vmul.f32 %v378, %v384
    %v394 = vmul.f32 %v378, %v386
    %v395 = vadd.f32 %v371, %v391
    %v396 = vadd.f32 %v372, %v392
    %v397 = vadd.f32 %v373, %v393
    %v398 = vadd.f32 %v374, %v394
    %v399 = vlaneseq
    %v400 = vshrl.u32 %v399, 7
    %v401 = vsub.s32 4, %v400
    %v402 = vrot.slane %v288, %v401
    %403 = vrot.lane.b32.xlu0 %v284, 123
    %v404 = vpop.permute.xlu0 %403
    %405 = vrot.lane.b32.xlu0 %v272, 123
    %v406 = vpop.permute.xlu0 %405
    %407 = vrot.lane.b32.xlu0 %v285, 123
    %v408 = vpop.permute.xlu0 %407
    %409 = vrot.lane.b32.xlu0 %v275, 123
    %v410 = vpop.permute.xlu0 %409
    %v415 = vmul.f32 %v402, %v404
    %v416 = vmul.f32 %v402, %v406
    %v417 = vmul.f32 %v402, %v408
    %v418 = vmul.f32 %v402, %v410
    %v419 = vadd.f32 %v395, %v415
    %v420 = vadd.f32 %v396, %v416
    %v421 = vadd.f32 %v397, %v417
    %v422 = vadd.f32 %v398, %v418
    %v423 = vlaneseq
    %v424 = vshrl.u32 %v423, 7
    %v425 = vsub.s32 5, %v424
    %v426 = vrot.slane %v288, %v425
    %427 = vrot.lane.b32.xlu0 %v284, 122
    %v428 = vpop.permute.xlu0 %427
    %429 = vrot.lane.b32.xlu0 %v272, 122
    %v430 = vpop.permute.xlu0 %429
    %431 = vrot.lane.b32.xlu0 %v285, 122
    %v432 = vpop.permute.xlu0 %431
    %433 = vrot.lane.b32.xlu0 %v275, 122
    %v434 = vpop.permute.xlu0 %433
    %v439 = vmul.f32 %v426, %v428
    %v440 = vmul.f32 %v426, %v430
    %v441 = vmul.f32 %v426, %v432
    %v442 = vmul.f32 %v426, %v434
    %v443 = vadd.f32 %v419, %v439
    %v444 = vadd.f32 %v420, %v440
    %v445 = vadd.f32 %v421, %v441
    %v446 = vadd.f32 %v422, %v442
    %v447 = vlaneseq
    %v448 = vshrl.u32 %v447, 7
    %v449 = vsub.s32 6, %v448
    %v450 = vrot.slane %v288, %v449
    %451 = vrot.lane.b32.xlu0 %v284, 121
    %v452 = vpop.permute.xlu0 %451
    %453 = vrot.lane.b32.xlu0 %v272, 121
    %v454 = vpop.permute.xlu0 %453
    %455 = vrot.lane.b32.xlu0 %v285, 121
    %v456 = vpop.permute.xlu0 %455
    %457 = vrot.lane.b32.xlu0 %v275, 121
    %v458 = vpop.permute.xlu0 %457
    %v463 = vmul.f32 %v450, %v452
    %v464 = vmul.f32 %v450, %v454
    %v465 = vmul.f32 %v450, %v456
    %v466 = vmul.f32 %v450, %v458
    %v467 = vadd.f32 %v443, %v463
    %v468 = vadd.f32 %v444, %v464
    %v469 = vadd.f32 %v445, %v465
    %v470 = vadd.f32 %v446, %v466
    %v471 = vlaneseq
    %v472 = vshrl.u32 %v471, 7
    %v473 = vsub.s32 7, %v472
    %v474 = vrot.slane %v288, %v473
    %475 = vrot.lane.b32.xlu0 %v284, 120
    %v476 = vpop.permute.xlu0 %475
    %477 = vrot.lane.b32.xlu0 %v272, 120
    %v478 = vpop.permute.xlu0 %477
    %479 = vrot.lane.b32.xlu0 %v285, 120
    %v480 = vpop.permute.xlu0 %479
    %481 = vrot.lane.b32.xlu0 %v275, 120
    %v482 = vpop.permute.xlu0 %481
    %v487 = vmul.f32 %v474, %v476
    %v488 = vmul.f32 %v474, %v478
    %v489 = vmul.f32 %v474, %v480
    %v490 = vmul.f32 %v474, %v482
    %v491 = vadd.f32 %v467, %v487
    %v492 = vadd.f32 %v468, %v488
    %v493 = vadd.f32 %v469, %v489
    %v494 = vadd.f32 %v470, %v490
    %v495 = vlaneseq
    %v496 = vshrl.u32 %v495, 7
    %v497 = vsub.s32 0, %v496
    %v498 = vrot.slane %v289, %v497
    %499 = vrot.lane.b32.xlu0 %v284, 119
    %v500 = vpop.permute.xlu0 %499
    %501 = vrot.lane.b32.xlu0 %v272, 119
    %v502 = vpop.permute.xlu0 %501
    %503 = vrot.lane.b32.xlu0 %v285, 119
    %v504 = vpop.permute.xlu0 %503
    %505 = vrot.lane.b32.xlu0 %v275, 119
    %v506 = vpop.permute.xlu0 %505
    %v511 = vmul.f32 %v498, %v500
    %v512 = vmul.f32 %v498, %v502
    %v513 = vmul.f32 %v498, %v504
    %v514 = vmul.f32 %v498, %v506
    %v515 = vadd.f32 %v491, %v511
    %v516 = vadd.f32 %v492, %v512
    %v517 = vadd.f32 %v493, %v513
    %v518 = vadd.f32 %v494, %v514
    %v519 = vlaneseq
    %v520 = vshrl.u32 %v519, 7
    %v521 = vsub.s32 1, %v520
    %v522 = vrot.slane %v289, %v521
    %523 = vrot.lane.b32.xlu0 %v284, 118
    %v524 = vpop.permute.xlu0 %523
    %525 = vrot.lane.b32.xlu0 %v272, 118
    %v526 = vpop.permute.xlu0 %525
    %527 = vrot.lane.b32.xlu0 %v285, 118
    %v528 = vpop.permute.xlu0 %527
    %529 = vrot.lane.b32.xlu0 %v275, 118
    %v530 = vpop.permute.xlu0 %529
    %v535 = vmul.f32 %v522, %v524
    %v536 = vmul.f32 %v522, %v526
    %v537 = vmul.f32 %v522, %v528
    %v538 = vmul.f32 %v522, %v530
    %v539 = vadd.f32 %v515, %v535
    %v540 = vadd.f32 %v516, %v536
    %v541 = vadd.f32 %v517, %v537
    %v542 = vadd.f32 %v518, %v538
    %v543 = vlaneseq
    %v544 = vshrl.u32 %v543, 7
    %v545 = vsub.s32 2, %v544
    %v546 = vrot.slane %v289, %v545
    %547 = vrot.lane.b32.xlu0 %v284, 117
    %v548 = vpop.permute.xlu0 %547
    %549 = vrot.lane.b32.xlu0 %v272, 117
    %v550 = vpop.permute.xlu0 %549
    %551 = vrot.lane.b32.xlu0 %v285, 117
    %v552 = vpop.permute.xlu0 %551
    %553 = vrot.lane.b32.xlu0 %v275, 117
    %v554 = vpop.permute.xlu0 %553
    %v559 = vmul.f32 %v546, %v548
    %v560 = vmul.f32 %v546, %v550
    %v561 = vmul.f32 %v546, %v552
    %v562 = vmul.f32 %v546, %v554
    %v563 = vadd.f32 %v539, %v559
    %v564 = vadd.f32 %v540, %v560
    %v565 = vadd.f32 %v541, %v561
    %v566 = vadd.f32 %v542, %v562
    %v567 = vlaneseq
    %v568 = vshrl.u32 %v567, 7
    %v569 = vsub.s32 3, %v568
    %v570 = vrot.slane %v289, %v569
    %571 = vrot.lane.b32.xlu0 %v284, 116
    %v572 = vpop.permute.xlu0 %571
    %573 = vrot.lane.b32.xlu0 %v272, 116
    %v574 = vpop.permute.xlu0 %573
    %575 = vrot.lane.b32.xlu0 %v285, 116
    %v576 = vpop.permute.xlu0 %575
    %577 = vrot.lane.b32.xlu0 %v275, 116
    %v578 = vpop.permute.xlu0 %577
    %v583 = vmul.f32 %v570, %v572
    %v584 = vmul.f32 %v570, %v574
    %v585 = vmul.f32 %v570, %v576
    %v586 = vmul.f32 %v570, %v578
    %v587 = vadd.f32 %v563, %v583
    %v588 = vadd.f32 %v564, %v584
    %v589 = vadd.f32 %v565, %v585
    %v590 = vadd.f32 %v566, %v586
    %v591 = vlaneseq
    %v592 = vshrl.u32 %v591, 7
    %v593 = vsub.s32 4, %v592
    %v594 = vrot.slane %v289, %v593
    %595 = vrot.lane.b32.xlu0 %v284, 115
    %v596 = vpop.permute.xlu0 %595
    %597 = vrot.lane.b32.xlu0 %v272, 115
    %v598 = vpop.permute.xlu0 %597
    %599 = vrot.lane.b32.xlu0 %v285, 115
    %v600 = vpop.permute.xlu0 %599
    %601 = vrot.lane.b32.xlu0 %v275, 115
    %v602 = vpop.permute.xlu0 %601
    %v607 = vmul.f32 %v594, %v596
    %v608 = vmul.f32 %v594, %v598
    %v609 = vmul.f32 %v594, %v600
    %v610 = vmul.f32 %v594, %v602
    %v611 = vadd.f32 %v587, %v607
    %v612 = vadd.f32 %v588, %v608
    %v613 = vadd.f32 %v589, %v609
    %v614 = vadd.f32 %v590, %v610
    %v615 = vlaneseq
    %v616 = vshrl.u32 %v615, 7
    %v617 = vsub.s32 5, %v616
    %v618 = vrot.slane %v289, %v617
    %619 = vrot.lane.b32.xlu0 %v284, 114
    %v620 = vpop.permute.xlu0 %619
    %621 = vrot.lane.b32.xlu0 %v272, 114
    %v622 = vpop.permute.xlu0 %621
    %623 = vrot.lane.b32.xlu0 %v285, 114
    %v624 = vpop.permute.xlu0 %623
    %625 = vrot.lane.b32.xlu0 %v275, 114
    %v626 = vpop.permute.xlu0 %625
    %v631 = vmul.f32 %v618, %v620
    %v632 = vmul.f32 %v618, %v622
    %v633 = vmul.f32 %v618, %v624
    %v634 = vmul.f32 %v618, %v626
    %v635 = vadd.f32 %v611, %v631
    %v636 = vadd.f32 %v612, %v632
    %v637 = vadd.f32 %v613, %v633
    %v638 = vadd.f32 %v614, %v634
    %v639 = vlaneseq
    %v640 = vshrl.u32 %v639, 7
    %v641 = vsub.s32 6, %v640
    %v642 = vrot.slane %v289, %v641
    %643 = vrot.lane.b32.xlu0 %v284, 113
    %v644 = vpop.permute.xlu0 %643
    %645 = vrot.lane.b32.xlu0 %v272, 113
    %v646 = vpop.permute.xlu0 %645
    %647 = vrot.lane.b32.xlu0 %v285, 113
    %v648 = vpop.permute.xlu0 %647
    %649 = vrot.lane.b32.xlu0 %v275, 113
    %v650 = vpop.permute.xlu0 %649
    %v655 = vmul.f32 %v642, %v644
    %v656 = vmul.f32 %v642, %v646
    %v657 = vmul.f32 %v642, %v648
    %v658 = vmul.f32 %v642, %v650
    %v659 = vadd.f32 %v635, %v655
    %v660 = vadd.f32 %v636, %v656
    %v661 = vadd.f32 %v637, %v657
    %v662 = vadd.f32 %v638, %v658
    %v663 = vlaneseq
    %v664 = vshrl.u32 %v663, 7
    %v665 = vsub.s32 0, %v664
    %v666 = vrot.slane %v290, %v665
    %vm669 = vcmask 1046528
    %v670 = vrot.slane %v284, 1
    %v671 = vrot.slane %v272, 1
    %v672 = vsel %vm669, %v670, %v671
    %v673 = vrot.slane %v286, 1
    %v674 = vsel %vm669, %v671, %v673
    %v675 = vrot.slane %v285, 1
    %v676 = vrot.slane %v275, 1
    %v677 = vsel %vm669, %v675, %v676
    %v678 = vrot.slane %v287, 1
    %v679 = vsel %vm669, %v676, %v678
    %680 = vrot.lane.b32.xlu0 %v672, 127
    %v681 = vpop.permute.xlu0 %680
    %682 = vrot.lane.b32.xlu0 %v674, 127
    %v683 = vpop.permute.xlu0 %682
    %684 = vrot.lane.b32.xlu0 %v677, 127
    %v685 = vpop.permute.xlu0 %684
    %686 = vrot.lane.b32.xlu0 %v679, 127
    %v687 = vpop.permute.xlu0 %686
    %v692 = vmul.f32 %v666, %v681
    %v693 = vmul.f32 %v666, %v683
    %v694 = vmul.f32 %v666, %v685
    %v695 = vmul.f32 %v666, %v687
    %v696 = vadd.f32 %v659, %v692
    %v697 = vadd.f32 %v660, %v693
    %v698 = vadd.f32 %v661, %v694
    %v699 = vadd.f32 %v662, %v695
    %v700 = vlaneseq
    %v701 = vshrl.u32 %v700, 7
    %v702 = vsub.s32 1, %v701
    %v703 = vrot.slane %v290, %v702
    %704 = vrot.lane.b32.xlu0 %v672, 126
    %v705 = vpop.permute.xlu0 %704
    %706 = vrot.lane.b32.xlu0 %v674, 126
    %v707 = vpop.permute.xlu0 %706
    %708 = vrot.lane.b32.xlu0 %v677, 126
    %v709 = vpop.permute.xlu0 %708
    %710 = vrot.lane.b32.xlu0 %v679, 126
    %v711 = vpop.permute.xlu0 %710
    %v716 = vmul.f32 %v703, %v705
    %v717 = vmul.f32 %v703, %v707
    %v718 = vmul.f32 %v703, %v709
    %v719 = vmul.f32 %v703, %v711
    %v720 = vadd.f32 %v696, %v716
    %v721 = vadd.f32 %v697, %v717
    %v722 = vadd.f32 %v698, %v718
    %v723 = vadd.f32 %v699, %v719
    %v724 = vlaneseq
    %v725 = vshrl.u32 %v724, 7
    %v726 = vsub.s32 2, %v725
    %v727 = vrot.slane %v290, %v726
    %728 = vrot.lane.b32.xlu0 %v672, 125
    %v729 = vpop.permute.xlu0 %728
    %730 = vrot.lane.b32.xlu0 %v674, 125
    %v731 = vpop.permute.xlu0 %730
    %732 = vrot.lane.b32.xlu0 %v677, 125
    %v733 = vpop.permute.xlu0 %732
    %734 = vrot.lane.b32.xlu0 %v679, 125
    %v735 = vpop.permute.xlu0 %734
    %v740 = vmul.f32 %v727, %v729
    %v741 = vmul.f32 %v727, %v731
    %v742 = vmul.f32 %v727, %v733
    %v743 = vmul.f32 %v727, %v735
    %v744 = vadd.f32 %v720, %v740
    %v745 = vadd.f32 %v721, %v741
    %v746 = vadd.f32 %v722, %v742
    %v747 = vadd.f32 %v723, %v743
    %v748 = vlaneseq
    %v749 = vshrl.u32 %v748, 7
    %v750 = vsub.s32 3, %v749
    %v751 = vrot.slane %v290, %v750
    %752 = vrot.lane.b32.xlu0 %v672, 124
    %v753 = vpop.permute.xlu0 %752
    %754 = vrot.lane.b32.xlu0 %v674, 124
    %v755 = vpop.permute.xlu0 %754
    %756 = vrot.lane.b32.xlu0 %v677, 124
    %v757 = vpop.permute.xlu0 %756
    %758 = vrot.lane.b32.xlu0 %v679, 124
    %v759 = vpop.permute.xlu0 %758
    %v764 = vmul.f32 %v751, %v753
    %v765 = vmul.f32 %v751, %v755
    %v766 = vmul.f32 %v751, %v757
    %v767 = vmul.f32 %v751, %v759
    %v768 = vadd.f32 %v744, %v764
    %v769 = vadd.f32 %v745, %v765
    %v770 = vadd.f32 %v746, %v766
    %v771 = vadd.f32 %v747, %v767
    %v772 = vlaneseq
    %v773 = vshrl.u32 %v772, 7
    %v774 = vsub.s32 4, %v773
    %v775 = vrot.slane %v290, %v774
    %776 = vrot.lane.b32.xlu0 %v672, 123
    %v777 = vpop.permute.xlu0 %776
    %778 = vrot.lane.b32.xlu0 %v674, 123
    %v779 = vpop.permute.xlu0 %778
    %780 = vrot.lane.b32.xlu0 %v677, 123
    %v781 = vpop.permute.xlu0 %780
    %782 = vrot.lane.b32.xlu0 %v679, 123
    %v783 = vpop.permute.xlu0 %782
    %v788 = vmul.f32 %v775, %v777
    %v789 = vmul.f32 %v775, %v779
    %v790 = vmul.f32 %v775, %v781
    %v791 = vmul.f32 %v775, %v783
    %v792 = vadd.f32 %v768, %v788
    %v793 = vadd.f32 %v769, %v789
    %v794 = vadd.f32 %v770, %v790
    %v795 = vadd.f32 %v771, %v791
    %v796 = vlaneseq
    %v797 = vshrl.u32 %v796, 7
    %v798 = vsub.s32 5, %v797
    %v799 = vrot.slane %v290, %v798
    %800 = vrot.lane.b32.xlu0 %v672, 122
    %v801 = vpop.permute.xlu0 %800
    %802 = vrot.lane.b32.xlu0 %v674, 122
    %v803 = vpop.permute.xlu0 %802
    %804 = vrot.lane.b32.xlu0 %v677, 122
    %v805 = vpop.permute.xlu0 %804
    %806 = vrot.lane.b32.xlu0 %v679, 122
    %v807 = vpop.permute.xlu0 %806
    %v812 = vmul.f32 %v799, %v801
    %v813 = vmul.f32 %v799, %v803
    %v814 = vmul.f32 %v799, %v805
    %v815 = vmul.f32 %v799, %v807
    %v816 = vadd.f32 %v792, %v812
    %v817 = vadd.f32 %v793, %v813
    %v818 = vadd.f32 %v794, %v814
    %v819 = vadd.f32 %v795, %v815
    %v820 = vlaneseq
    %v821 = vshrl.u32 %v820, 7
    %v822 = vsub.s32 6, %v821
    %v823 = vrot.slane %v290, %v822
    %824 = vrot.lane.b32.xlu0 %v672, 121
    %v825 = vpop.permute.xlu0 %824
    %826 = vrot.lane.b32.xlu0 %v674, 121
    %v827 = vpop.permute.xlu0 %826
    %828 = vrot.lane.b32.xlu0 %v677, 121
    %v829 = vpop.permute.xlu0 %828
    %830 = vrot.lane.b32.xlu0 %v679, 121
    %v831 = vpop.permute.xlu0 %830
    %v836 = vmul.f32 %v823, %v825
    %v837 = vmul.f32 %v823, %v827
    %v838 = vmul.f32 %v823, %v829
    %v839 = vmul.f32 %v823, %v831
    %v840 = vadd.f32 %v816, %v836
    %v841 = vadd.f32 %v817, %v837
    %v842 = vadd.f32 %v818, %v838
    %v843 = vadd.f32 %v819, %v839
    %v844 = vlaneseq
    %v845 = vshrl.u32 %v844, 7
    %v846 = vsub.s32 7, %v845
    %v847 = vrot.slane %v290, %v846
    %848 = vrot.lane.b32.xlu0 %v672, 120
    %v849 = vpop.permute.xlu0 %848
    %850 = vrot.lane.b32.xlu0 %v674, 120
    %v851 = vpop.permute.xlu0 %850
    %852 = vrot.lane.b32.xlu0 %v677, 120
    %v853 = vpop.permute.xlu0 %852
    %854 = vrot.lane.b32.xlu0 %v679, 120
    %v855 = vpop.permute.xlu0 %854
    %v860 = vmul.f32 %v847, %v849
    %v861 = vmul.f32 %v847, %v851
    %v862 = vmul.f32 %v847, %v853
    %v863 = vmul.f32 %v847, %v855
    %v864 = vadd.f32 %v840, %v860
    %v865 = vadd.f32 %v841, %v861
    %v866 = vadd.f32 %v842, %v862
    %v867 = vadd.f32 %v843, %v863
    %v868 = vlaneseq
    %v869 = vshrl.u32 %v868, 7
    %v870 = vsub.s32 0, %v869
    %v871 = vrot.slane %v291, %v870
    %872 = vrot.lane.b32.xlu0 %v672, 119
    %v873 = vpop.permute.xlu0 %872
    %874 = vrot.lane.b32.xlu0 %v674, 119
    %v875 = vpop.permute.xlu0 %874
    %876 = vrot.lane.b32.xlu0 %v677, 119
    %v877 = vpop.permute.xlu0 %876
    %878 = vrot.lane.b32.xlu0 %v679, 119
    %v879 = vpop.permute.xlu0 %878
    %v884 = vmul.f32 %v871, %v873
    %v885 = vmul.f32 %v871, %v875
    %v886 = vmul.f32 %v871, %v877
    %v887 = vmul.f32 %v871, %v879
    %v888 = vadd.f32 %v864, %v884
    %v889 = vadd.f32 %v865, %v885
    %v890 = vadd.f32 %v866, %v886
    %v891 = vadd.f32 %v867, %v887
    %v892 = vlaneseq
    %v893 = vshrl.u32 %v892, 7
    %v894 = vsub.s32 1, %v893
    %v895 = vrot.slane %v291, %v894
    %896 = vrot.lane.b32.xlu0 %v672, 118
    %v897 = vpop.permute.xlu0 %896
    %898 = vrot.lane.b32.xlu0 %v674, 118
    %v899 = vpop.permute.xlu0 %898
    %900 = vrot.lane.b32.xlu0 %v677, 118
    %v901 = vpop.permute.xlu0 %900
    %902 = vrot.lane.b32.xlu0 %v679, 118
    %v903 = vpop.permute.xlu0 %902
    %v908 = vmul.f32 %v895, %v897
    %v909 = vmul.f32 %v895, %v899
    %v910 = vmul.f32 %v895, %v901
    %v911 = vmul.f32 %v895, %v903
    %v912 = vadd.f32 %v888, %v908
    %v913 = vadd.f32 %v889, %v909
    %v914 = vadd.f32 %v890, %v910
    %v915 = vadd.f32 %v891, %v911
    %v916 = vlaneseq
    %v917 = vshrl.u32 %v916, 7
    %v918 = vsub.s32 2, %v917
    %v919 = vrot.slane %v291, %v918
    %920 = vrot.lane.b32.xlu0 %v672, 117
    %v921 = vpop.permute.xlu0 %920
    %922 = vrot.lane.b32.xlu0 %v674, 117
    %v923 = vpop.permute.xlu0 %922
    %924 = vrot.lane.b32.xlu0 %v677, 117
    %v925 = vpop.permute.xlu0 %924
    %926 = vrot.lane.b32.xlu0 %v679, 117
    %v927 = vpop.permute.xlu0 %926
    %v932 = vmul.f32 %v919, %v921
    %v933 = vmul.f32 %v919, %v923
    %v934 = vmul.f32 %v919, %v925
    %v935 = vmul.f32 %v919, %v927
    %v936 = vadd.f32 %v912, %v932
    %v937 = vadd.f32 %v913, %v933
    %v938 = vadd.f32 %v914, %v934
    %v939 = vadd.f32 %v915, %v935
    %v940 = vlaneseq
    %v941 = vshrl.u32 %v940, 7
    %v942 = vsub.s32 3, %v941
    %v943 = vrot.slane %v291, %v942
    %944 = vrot.lane.b32.xlu0 %v672, 116
    %v945 = vpop.permute.xlu0 %944
    %946 = vrot.lane.b32.xlu0 %v674, 116
    %v947 = vpop.permute.xlu0 %946
    %948 = vrot.lane.b32.xlu0 %v677, 116
    %v949 = vpop.permute.xlu0 %948
    %950 = vrot.lane.b32.xlu0 %v679, 116
    %v951 = vpop.permute.xlu0 %950
    %v956 = vmul.f32 %v943, %v945
    %v957 = vmul.f32 %v943, %v947
    %v958 = vmul.f32 %v943, %v949
    %v959 = vmul.f32 %v943, %v951
    %v960 = vadd.f32 %v936, %v956
    %v961 = vadd.f32 %v937, %v957
    %v962 = vadd.f32 %v938, %v958
    %v963 = vadd.f32 %v939, %v959
    %v964 = vlaneseq
    %v965 = vshrl.u32 %v964, 7
    %v966 = vsub.s32 4, %v965
    %v967 = vrot.slane %v291, %v966
    %968 = vrot.lane.b32.xlu0 %v672, 115
    %v969 = vpop.permute.xlu0 %968
    %970 = vrot.lane.b32.xlu0 %v674, 115
    %v971 = vpop.permute.xlu0 %970
    %972 = vrot.lane.b32.xlu0 %v677, 115
    %v973 = vpop.permute.xlu0 %972
    %974 = vrot.lane.b32.xlu0 %v679, 115
    %v975 = vpop.permute.xlu0 %974
    %v980 = vmul.f32 %v967, %v969
    %v981 = vmul.f32 %v967, %v971
    %v982 = vmul.f32 %v967, %v973
    %v983 = vmul.f32 %v967, %v975
    %v984 = vadd.f32 %v960, %v980
    %v985 = vadd.f32 %v961, %v981
    %v986 = vadd.f32 %v962, %v982
    %v987 = vadd.f32 %v963, %v983
    %v988 = vlaneseq
    %v989 = vshrl.u32 %v988, 7
    %v990 = vsub.s32 5, %v989
    %v991 = vrot.slane %v291, %v990
    %992 = vrot.lane.b32.xlu0 %v672, 114
    %v993 = vpop.permute.xlu0 %992
    %994 = vrot.lane.b32.xlu0 %v674, 114
    %v995 = vpop.permute.xlu0 %994
    %996 = vrot.lane.b32.xlu0 %v677, 114
    %v997 = vpop.permute.xlu0 %996
    %998 = vrot.lane.b32.xlu0 %v679, 114
    %v999 = vpop.permute.xlu0 %998
    %v1004 = vmul.f32 %v991, %v993
    %v1005 = vmul.f32 %v991, %v995
    %v1006 = vmul.f32 %v991, %v997
    %v1007 = vmul.f32 %v991, %v999
    %v1008 = vadd.f32 %v984, %v1004
    %v1009 = vadd.f32 %v985, %v1005
    %v1010 = vadd.f32 %v986, %v1006
    %v1011 = vadd.f32 %v987, %v1007
    %v1012 = vlaneseq
    %v1013 = vshrl.u32 %v1012, 7
    %v1014 = vsub.s32 6, %v1013
    %v1015 = vrot.slane %v291, %v1014
    %1016 = vrot.lane.b32.xlu0 %v672, 113
    %v1017 = vpop.permute.xlu0 %1016
    %1018 = vrot.lane.b32.xlu0 %v674, 113
    %v1019 = vpop.permute.xlu0 %1018
    %1020 = vrot.lane.b32.xlu0 %v677, 113
    %v1021 = vpop.permute.xlu0 %1020
    %1022 = vrot.lane.b32.xlu0 %v679, 113
    %v1023 = vpop.permute.xlu0 %1022
    %v1028 = vmul.f32 %v1015, %v1017
    %v1029 = vmul.f32 %v1015, %v1019
    %v1030 = vmul.f32 %v1015, %v1021
    %v1031 = vmul.f32 %v1015, %v1023
    %v1032 = vadd.f32 %v1008, %v1028
    %v1033 = vadd.f32 %v1009, %v1029
    %v1034 = vadd.f32 %v1010, %v1030
    %v1035 = vadd.f32 %v1011, %v1031
    %v1036 = vlaneseq
    %v1037 = vshrl.u32 %v1036, 7
    %v1038 = vsub.s32 0, %v1037
    %v1039 = vrot.slane %v292, %v1038
    %vm1040 = vcmask 1045504
    %v1041 = vrot.slane %v284, 2
    %v1042 = vrot.slane %v272, 2
    %v1043 = vsel %vm1040, %v1041, %v1042
    %v1044 = vrot.slane %v286, 2
    %v1045 = vsel %vm1040, %v1042, %v1044
    %v1046 = vrot.slane %v285, 2
    %v1047 = vrot.slane %v275, 2
    %v1048 = vsel %vm1040, %v1046, %v1047
    %v1049 = vrot.slane %v287, 2
    %v1050 = vsel %vm1040, %v1047, %v1049
    %1051 = vrot.lane.b32.xlu0 %v1043, 127
    %v1052 = vpop.permute.xlu0 %1051
    %1053 = vrot.lane.b32.xlu0 %v1045, 127
    %v1054 = vpop.permute.xlu0 %1053
    %1055 = vrot.lane.b32.xlu0 %v1048, 127
    %v1056 = vpop.permute.xlu0 %1055
    %1057 = vrot.lane.b32.xlu0 %v1050, 127
    %v1058 = vpop.permute.xlu0 %1057
    %v1063 = vmul.f32 %v1039, %v1052
    %v1064 = vmul.f32 %v1039, %v1054
    %v1065 = vmul.f32 %v1039, %v1056
    %v1066 = vmul.f32 %v1039, %v1058
    %v1067 = vadd.f32 %v1032, %v1063
    %v1068 = vadd.f32 %v1033, %v1064
    %v1069 = vadd.f32 %v1034, %v1065
    %v1070 = vadd.f32 %v1035, %v1066
    %v1071 = vlaneseq
    %v1072 = vshrl.u32 %v1071, 7
    %v1073 = vsub.s32 1, %v1072
    %v1074 = vrot.slane %v292, %v1073
    %1075 = vrot.lane.b32.xlu0 %v1043, 126
    %v1076 = vpop.permute.xlu0 %1075
    %1077 = vrot.lane.b32.xlu0 %v1045, 126
    %v1078 = vpop.permute.xlu0 %1077
    %1079 = vrot.lane.b32.xlu0 %v1048, 126
    %v1080 = vpop.permute.xlu0 %1079
    %1081 = vrot.lane.b32.xlu0 %v1050, 126
    %v1082 = vpop.permute.xlu0 %1081
    %v1087 = vmul.f32 %v1074, %v1076
    %v1088 = vmul.f32 %v1074, %v1078
    %v1089 = vmul.f32 %v1074, %v1080
    %v1090 = vmul.f32 %v1074, %v1082
    %v1091 = vadd.f32 %v1067, %v1087
    %v1092 = vadd.f32 %v1068, %v1088
    %v1093 = vadd.f32 %v1069, %v1089
    %v1094 = vadd.f32 %v1070, %v1090
    %v1095 = vlaneseq
    %v1096 = vshrl.u32 %v1095, 7
    %v1097 = vsub.s32 2, %v1096
    %v1098 = vrot.slane %v292, %v1097
    %1099 = vrot.lane.b32.xlu0 %v1043, 125
    %v1100 = vpop.permute.xlu0 %1099
    %1101 = vrot.lane.b32.xlu0 %v1045, 125
    %v1102 = vpop.permute.xlu0 %1101
    %1103 = vrot.lane.b32.xlu0 %v1048, 125
    %v1104 = vpop.permute.xlu0 %1103
    %1105 = vrot.lane.b32.xlu0 %v1050, 125
    %v1106 = vpop.permute.xlu0 %1105
    %v1111 = vmul.f32 %v1098, %v1100
    %v1112 = vmul.f32 %v1098, %v1102
    %v1113 = vmul.f32 %v1098, %v1104
    %v1114 = vmul.f32 %v1098, %v1106
    %v1115 = vadd.f32 %v1091, %v1111
    %v1116 = vadd.f32 %v1092, %v1112
    %v1117 = vadd.f32 %v1093, %v1113
    %v1118 = vadd.f32 %v1094, %v1114
    %v1119 = vlaneseq
    %v1120 = vshrl.u32 %v1119, 7
    %v1121 = vsub.s32 3, %v1120
    %v1122 = vrot.slane %v292, %v1121
    %1123 = vrot.lane.b32.xlu0 %v1043, 124
    %v1124 = vpop.permute.xlu0 %1123
    %1125 = vrot.lane.b32.xlu0 %v1045, 124
    %v1126 = vpop.permute.xlu0 %1125
    %1127 = vrot.lane.b32.xlu0 %v1048, 124
    %v1128 = vpop.permute.xlu0 %1127
    %1129 = vrot.lane.b32.xlu0 %v1050, 124
    %v1130 = vpop.permute.xlu0 %1129
    %v1135 = vmul.f32 %v1122, %v1124
    %v1136 = vmul.f32 %v1122, %v1126
    %v1137 = vmul.f32 %v1122, %v1128
    %v1138 = vmul.f32 %v1122, %v1130
    %v1139 = vadd.f32 %v1115, %v1135
    %v1140 = vadd.f32 %v1116, %v1136
    %v1141 = vadd.f32 %v1117, %v1137
    %v1142 = vadd.f32 %v1118, %v1138
    %v1143 = vlaneseq
    %v1144 = vshrl.u32 %v1143, 7
    %v1145 = vsub.s32 4, %v1144
    %v1146 = vrot.slane %v292, %v1145
    %1147 = vrot.lane.b32.xlu0 %v1043, 123
    %v1148 = vpop.permute.xlu0 %1147
    %1149 = vrot.lane.b32.xlu0 %v1045, 123
    %v1150 = vpop.permute.xlu0 %1149
    %1151 = vrot.lane.b32.xlu0 %v1048, 123
    %v1152 = vpop.permute.xlu0 %1151
    %1153 = vrot.lane.b32.xlu0 %v1050, 123
    %v1154 = vpop.permute.xlu0 %1153
    %v1159 = vmul.f32 %v1146, %v1148
    %v1160 = vmul.f32 %v1146, %v1150
    %v1161 = vmul.f32 %v1146, %v1152
    %v1162 = vmul.f32 %v1146, %v1154
    %v1163 = vadd.f32 %v1139, %v1159
    %v1164 = vadd.f32 %v1140, %v1160
    %v1165 = vadd.f32 %v1141, %v1161
    %v1166 = vadd.f32 %v1142, %v1162
    %v1167 = vlaneseq
    %v1168 = vshrl.u32 %v1167, 7
    %v1169 = vsub.s32 5, %v1168
    %v1170 = vrot.slane %v292, %v1169
    %1171 = vrot.lane.b32.xlu0 %v1043, 122
    %v1172 = vpop.permute.xlu0 %1171
    %1173 = vrot.lane.b32.xlu0 %v1045, 122
    %v1174 = vpop.permute.xlu0 %1173
    %1175 = vrot.lane.b32.xlu0 %v1048, 122
    %v1176 = vpop.permute.xlu0 %1175
    %1177 = vrot.lane.b32.xlu0 %v1050, 122
    %v1178 = vpop.permute.xlu0 %1177
    %v1183 = vmul.f32 %v1170, %v1172
    %v1184 = vmul.f32 %v1170, %v1174
    %v1185 = vmul.f32 %v1170, %v1176
    %v1186 = vmul.f32 %v1170, %v1178
    %v1187 = vadd.f32 %v1163, %v1183
    %v1188 = vadd.f32 %v1164, %v1184
    %v1189 = vadd.f32 %v1165, %v1185
    %v1190 = vadd.f32 %v1166, %v1186
    %v1191 = vlaneseq
    %v1192 = vshrl.u32 %v1191, 7
    %v1193 = vsub.s32 6, %v1192
    %v1194 = vrot.slane %v292, %v1193
    %1195 = vrot.lane.b32.xlu0 %v1043, 121
    %v1196 = vpop.permute.xlu0 %1195
    %1197 = vrot.lane.b32.xlu0 %v1045, 121
    %v1198 = vpop.permute.xlu0 %1197
    %1199 = vrot.lane.b32.xlu0 %v1048, 121
    %v1200 = vpop.permute.xlu0 %1199
    %1201 = vrot.lane.b32.xlu0 %v1050, 121
    %v1202 = vpop.permute.xlu0 %1201
    %v1207 = vmul.f32 %v1194, %v1196
    %v1208 = vmul.f32 %v1194, %v1198
    %v1209 = vmul.f32 %v1194, %v1200
    %v1210 = vmul.f32 %v1194, %v1202
    %v1211 = vadd.f32 %v1187, %v1207
    %v1212 = vadd.f32 %v1188, %v1208
    %v1213 = vadd.f32 %v1189, %v1209
    %v1214 = vadd.f32 %v1190, %v1210
    %v1215 = vlaneseq
    %v1216 = vshrl.u32 %v1215, 7
    %v1217 = vsub.s32 7, %v1216
    %v1218 = vrot.slane %v292, %v1217
    %1219 = vrot.lane.b32.xlu0 %v1043, 120
    %v1220 = vpop.permute.xlu0 %1219
    %1221 = vrot.lane.b32.xlu0 %v1045, 120
    %v1222 = vpop.permute.xlu0 %1221
    %1223 = vrot.lane.b32.xlu0 %v1048, 120
    %v1224 = vpop.permute.xlu0 %1223
    %1225 = vrot.lane.b32.xlu0 %v1050, 120
    %v1226 = vpop.permute.xlu0 %1225
    %v1231 = vmul.f32 %v1218, %v1220
    %v1232 = vmul.f32 %v1218, %v1222
    %v1233 = vmul.f32 %v1218, %v1224
    %v1234 = vmul.f32 %v1218, %v1226
    %v1235 = vadd.f32 %v1211, %v1231
    %v1236 = vadd.f32 %v1212, %v1232
    %v1237 = vadd.f32 %v1213, %v1233
    %v1238 = vadd.f32 %v1214, %v1234
    %v1239 = vlaneseq
    %v1240 = vshrl.u32 %v1239, 7
    %v1241 = vsub.s32 0, %v1240
    %v1242 = vrot.slane %v293, %v1241
    %1243 = vrot.lane.b32.xlu0 %v1043, 119
    %v1244 = vpop.permute.xlu0 %1243
    %1245 = vrot.lane.b32.xlu0 %v1045, 119
    %v1246 = vpop.permute.xlu0 %1245
    %1247 = vrot.lane.b32.xlu0 %v1048, 119
    %v1248 = vpop.permute.xlu0 %1247
    %1249 = vrot.lane.b32.xlu0 %v1050, 119
    %v1250 = vpop.permute.xlu0 %1249
    %v1255 = vmul.f32 %v1242, %v1244
    %v1256 = vmul.f32 %v1242, %v1246
    %v1257 = vmul.f32 %v1242, %v1248
    %v1258 = vmul.f32 %v1242, %v1250
    %v1259 = vadd.f32 %v1235, %v1255
    %v1260 = vadd.f32 %v1236, %v1256
    %v1261 = vadd.f32 %v1237, %v1257
    %v1262 = vadd.f32 %v1238, %v1258
    %v1263 = vlaneseq
    %v1264 = vshrl.u32 %v1263, 7
    %v1265 = vsub.s32 1, %v1264
    %v1266 = vrot.slane %v293, %v1265
    %1267 = vrot.lane.b32.xlu0 %v1043, 118
    %v1268 = vpop.permute.xlu0 %1267
    %1269 = vrot.lane.b32.xlu0 %v1045, 118
    %v1270 = vpop.permute.xlu0 %1269
    %1271 = vrot.lane.b32.xlu0 %v1048, 118
    %v1272 = vpop.permute.xlu0 %1271
    %1273 = vrot.lane.b32.xlu0 %v1050, 118
    %v1274 = vpop.permute.xlu0 %1273
    %v1279 = vmul.f32 %v1266, %v1268
    %v1280 = vmul.f32 %v1266, %v1270
    %v1281 = vmul.f32 %v1266, %v1272
    %v1282 = vmul.f32 %v1266, %v1274
    %v1283 = vadd.f32 %v1259, %v1279
    %v1284 = vadd.f32 %v1260, %v1280
    %v1285 = vadd.f32 %v1261, %v1281
    %v1286 = vadd.f32 %v1262, %v1282
    %v1287 = vlaneseq
    %v1288 = vshrl.u32 %v1287, 7
    %v1289 = vsub.s32 2, %v1288
    %v1290 = vrot.slane %v293, %v1289
    %1291 = vrot.lane.b32.xlu0 %v1043, 117
    %v1292 = vpop.permute.xlu0 %1291
    %1293 = vrot.lane.b32.xlu0 %v1045, 117
    %v1294 = vpop.permute.xlu0 %1293
    %1295 = vrot.lane.b32.xlu0 %v1048, 117
    %v1296 = vpop.permute.xlu0 %1295
    %1297 = vrot.lane.b32.xlu0 %v1050, 117
    %v1298 = vpop.permute.xlu0 %1297
    %v1303 = vmul.f32 %v1290, %v1292
    %v1304 = vmul.f32 %v1290, %v1294
    %v1305 = vmul.f32 %v1290, %v1296
    %v1306 = vmul.f32 %v1290, %v1298
    %v1307 = vadd.f32 %v1283, %v1303
    %v1308 = vadd.f32 %v1284, %v1304
    %v1309 = vadd.f32 %v1285, %v1305
    %v1310 = vadd.f32 %v1286, %v1306
    %v1311 = vlaneseq
    %v1312 = vshrl.u32 %v1311, 7
    %v1313 = vsub.s32 3, %v1312
    %v1314 = vrot.slane %v293, %v1313
    %1315 = vrot.lane.b32.xlu0 %v1043, 116
    %v1316 = vpop.permute.xlu0 %1315
    %1317 = vrot.lane.b32.xlu0 %v1045, 116
    %v1318 = vpop.permute.xlu0 %1317
    %1319 = vrot.lane.b32.xlu0 %v1048, 116
    %v1320 = vpop.permute.xlu0 %1319
    %1321 = vrot.lane.b32.xlu0 %v1050, 116
    %v1322 = vpop.permute.xlu0 %1321
    %v1327 = vmul.f32 %v1314, %v1316
    %v1328 = vmul.f32 %v1314, %v1318
    %v1329 = vmul.f32 %v1314, %v1320
    %v1330 = vmul.f32 %v1314, %v1322
    %v1331 = vadd.f32 %v1307, %v1327
    %v1332 = vadd.f32 %v1308, %v1328
    %v1333 = vadd.f32 %v1309, %v1329
    %v1334 = vadd.f32 %v1310, %v1330
    %v1335 = vlaneseq
    %v1336 = vshrl.u32 %v1335, 7
    %v1337 = vsub.s32 4, %v1336
    %v1338 = vrot.slane %v293, %v1337
    %1339 = vrot.lane.b32.xlu0 %v1043, 115
    %v1340 = vpop.permute.xlu0 %1339
    %1341 = vrot.lane.b32.xlu0 %v1045, 115
    %v1342 = vpop.permute.xlu0 %1341
    %1343 = vrot.lane.b32.xlu0 %v1048, 115
    %v1344 = vpop.permute.xlu0 %1343
    %1345 = vrot.lane.b32.xlu0 %v1050, 115
    %v1346 = vpop.permute.xlu0 %1345
    %v1351 = vmul.f32 %v1338, %v1340
    %v1352 = vmul.f32 %v1338, %v1342
    %v1353 = vmul.f32 %v1338, %v1344
    %v1354 = vmul.f32 %v1338, %v1346
    %v1355 = vadd.f32 %v1331, %v1351
    %v1356 = vadd.f32 %v1332, %v1352
    %v1357 = vadd.f32 %v1333, %v1353
    %v1358 = vadd.f32 %v1334, %v1354
    %v1359 = vlaneseq
    %v1360 = vshrl.u32 %v1359, 7
    %v1361 = vsub.s32 5, %v1360
    %v1362 = vrot.slane %v293, %v1361
    %1363 = vrot.lane.b32.xlu0 %v1043, 114
    %v1364 = vpop.permute.xlu0 %1363
    %1365 = vrot.lane.b32.xlu0 %v1045, 114
    %v1366 = vpop.permute.xlu0 %1365
    %1367 = vrot.lane.b32.xlu0 %v1048, 114
    %v1368 = vpop.permute.xlu0 %1367
    %1369 = vrot.lane.b32.xlu0 %v1050, 114
    %v1370 = vpop.permute.xlu0 %1369
    %v1375 = vmul.f32 %v1362, %v1364
    %v1376 = vmul.f32 %v1362, %v1366
    %v1377 = vmul.f32 %v1362, %v1368
    %v1378 = vmul.f32 %v1362, %v1370
    %v1379 = vadd.f32 %v1355, %v1375
    %v1380 = vadd.f32 %v1356, %v1376
    %v1381 = vadd.f32 %v1357, %v1377
    %v1382 = vadd.f32 %v1358, %v1378
    %v1383 = vlaneseq
    %v1384 = vshrl.u32 %v1383, 7
    %v1385 = vsub.s32 6, %v1384
    %v1386 = vrot.slane %v293, %v1385
    %1387 = vrot.lane.b32.xlu0 %v1043, 113
    %v1388 = vpop.permute.xlu0 %1387
    %1389 = vrot.lane.b32.xlu0 %v1045, 113
    %v1390 = vpop.permute.xlu0 %1389
    %1391 = vrot.lane.b32.xlu0 %v1048, 113
    %v1392 = vpop.permute.xlu0 %1391
    %1393 = vrot.lane.b32.xlu0 %v1050, 113
    %v1394 = vpop.permute.xlu0 %1393
    %v1399 = vmul.f32 %v1386, %v1388
    %v1400 = vmul.f32 %v1386, %v1390
    %v1401 = vmul.f32 %v1386, %v1392
    %v1402 = vmul.f32 %v1386, %v1394
    %v1403 = vadd.f32 %v1379, %v1399
    %v1404 = vadd.f32 %v1380, %v1400
    %v1405 = vadd.f32 %v1381, %v1401
    %v1406 = vadd.f32 %v1382, %v1402
    %v1407 = vmax.f32 %v1403, 0.0
    %v1408 = vmax.f32 %v1404, 0.0
    %v1409 = vmax.f32 %v1405, 0.0
    %v1410 = vmax.f32 %v1406, 0.0
    %v1411 = vsel %vm101, %v1407, 0.0
    %v1412 = vsel %vm101, %v1409, 0.0
    %v1413 = vadd.f32 %v1411, %v1412
    %v1414 = vsel %vm101, %v1408, 0.0
    %v1415 = vsel %vm101, %v1410, 0.0
    %v1416 = vadd.f32 %v1414, %v1415
    %v1417 = vsel %vm101, %v1413, 0.0
    %v1418 = vsel %vm101, %v1416, 0.0
    %v1419 = vadd.f32 %v1417, %v1418
    %v1420 = vrot.slane %v1419, 4
    %v1421 = vadd.f32 %v1419, %v1420
    %v1422 = vrot.slane %v1421, 2
    %v1423 = vadd.f32 %v1421, %v1422
    %v1424 = vrot.slane %v1423, 1
    %v1425 = vadd.f32 %v1423, %v1424
    %v1426 = vmul.f32 %v1407, %v1407
    %v1427 = vmul.f32 %v1408, %v1408
    %v1428 = vmul.f32 %v1409, %v1409
    %v1429 = vmul.f32 %v1410, %v1410
    %v1430 = vsel %vm101, %v1426, 0.0
    %v1431 = vsel %vm101, %v1428, 0.0
    %v1432 = vadd.f32 %v1430, %v1431
    %v1433 = vsel %vm101, %v1427, 0.0
    %v1434 = vsel %vm101, %v1429, 0.0
    %v1435 = vadd.f32 %v1433, %v1434
    %v1436 = vsel %vm101, %v1432, 0.0
    %v1437 = vsel %vm101, %v1435, 0.0
    %v1438 = vadd.f32 %v1436, %v1437
    %v1439 = vrot.slane %v1438, 4
    %v1440 = vadd.f32 %v1438, %v1439
    %v1441 = vrot.slane %v1440, 2
    %v1442 = vadd.f32 %v1440, %v1441
    %v1443 = vrot.slane %v1442, 1
    %v1444 = vadd.f32 %v1442, %v1443
    %v1445 = vmul.f32 %v96, %v1425
    %v1446 = vsel %vm137, %v1445, 0.0
    %1447 = vadd.xlane.f32.xlu0 %v1446
    %v1448 = vpop.xlane.xlu0 %1447
    %v1449 = vmul.f32 %v96, %v1444
    %v1450 = vsel %vm137, %v1449, 0.0
    %1451 = vadd.xlane.f32.xlu0 %v1450
    %v1452 = vpop.xlane.xlu0 %1451
    %v1453 = vmul.f32 %v1448, 0.001953125
    %v1454 = vmul.f32 %v1452, 0.001953125
    %v1455 = vmul.f32 %v1453, %v1453
    %v1456 = vsub.f32 %v1454, %v1455
    %v1457 = vld [vmem:[%s6] sm:$0xf]
    %v1458 = vadd.f32 %v1456, 1e-05
    %v1459 = vrsqrt.pop %v1458
    %v1460 = vmul.f32 %v1457, %v1459
    %v1461 = vld [vmem:[%s7] sm:$0xf]
    %v1462 = vmul.f32 %v1453, %v1460
    %v1463 = vsub.f32 %v1461, %v1462
    %1465 = vset.pattern.permute.xlu0 0
    %1466 = vperm.xlu0 %1465, %v1460
    %v1467 = vpop.permute.xlu0 %1466
    %v1469 = vmul.f32 %v96, %v1467
    %v1470 = vsel %vm137, %v1469, 0.0
    %v1471 = vrot.slane %v1470, 4
    %v1472 = vadd.f32 %v1470, %v1471
    %v1473 = vrot.slane %v1472, 2
    %v1474 = vadd.f32 %v1472, %v1473
    %v1475 = vrot.slane %v1474, 1
    %v1476 = vadd.f32 %v1474, %v1475
    %v1477 = vld [vmem:[%s10] sm:$0x1]
    %v1478 = vld [vmem:[%s9] sm:$0xf]
    %1480 = vset.pattern.permute.xlu0 0
    %1481 = vperm.xlu0 %1480, %v1463
    %v1482 = vpop.permute.xlu0 %1481
    %v1484 = vmul.f32 %v1478, %v1482
    %v1485 = vsel %vm137, %v1484, 0.0
    %v1486 = vrot.slane %v1485, 4
    %v1487 = vadd.f32 %v1485, %v1486
    %v1488 = vrot.slane %v1487, 2
    %v1489 = vadd.f32 %v1487, %v1488
    %v1490 = vrot.slane %v1489, 1
    %v1491 = vadd.f32 %v1489, %v1490
    %v1492 = vadd.f32 %v1477, %v1491
    %v1493 = vmul.f32 %v1407, %v1476
    %v1494 = vmul.f32 %v1408, %v1476
    %v1495 = vmul.f32 %v1409, %v1476
    %v1496 = vmul.f32 %v1410, %v1476
    %1501 = vrot.lane.b32.xlu0 %v1493, 124
    %v1502 = vpop.permute.xlu0 %1501
    %1503 = vrot.lane.b32.xlu0 %v1494, 124
    %v1504 = vpop.permute.xlu0 %1503
    %1505 = vrot.lane.b32.xlu0 %v1495, 124
    %v1506 = vpop.permute.xlu0 %1505
    %1507 = vrot.lane.b32.xlu0 %v1496, 124
    %v1508 = vpop.permute.xlu0 %1507
    %1513 = vrot.lane.b32.xlu0 %v1493, 8
    %v1514 = vpop.permute.xlu0 %1513
    %1515 = vrot.lane.b32.xlu0 %v1494, 8
    %v1516 = vpop.permute.xlu0 %1515
    %1517 = vrot.lane.b32.xlu0 %v1495, 8
    %v1518 = vpop.permute.xlu0 %1517
    %1519 = vrot.lane.b32.xlu0 %v1496, 8
    %v1520 = vpop.permute.xlu0 %1519
    %1525 = vrot.lane.b32.xlu0 %v1493, 16
    %v1526 = vpop.permute.xlu0 %1525
    %1527 = vrot.lane.b32.xlu0 %v1494, 16
    %v1528 = vpop.permute.xlu0 %1527
    %1529 = vrot.lane.b32.xlu0 %v1495, 16
    %v1530 = vpop.permute.xlu0 %1529
    %1531 = vrot.lane.b32.xlu0 %v1496, 16
    %v1532 = vpop.permute.xlu0 %1531
    %1537 = vrot.lane.b32.xlu0 %v1493, 20
    %v1538 = vpop.permute.xlu0 %1537
    %1539 = vrot.lane.b32.xlu0 %v1494, 20
    %v1540 = vpop.permute.xlu0 %1539
    %1541 = vrot.lane.b32.xlu0 %v1495, 20
    %v1542 = vpop.permute.xlu0 %1541
    %1543 = vrot.lane.b32.xlu0 %v1496, 20
    %v1544 = vpop.permute.xlu0 %1543
    %v1549 = vsel %vm241, %v1502, %v1493
    %v1550 = vsel %vm241, %v1504, %v1494
    %v1551 = vsel %vm241, %v1506, %v1495
    %v1552 = vsel %vm241, %v1508, %v1496
    %v1553 = vsel %vm246, %v1549, %v1514
    %v1554 = vsel %vm246, %v1550, %v1516
    %v1555 = vsel %vm246, %v1551, %v1518
    %v1556 = vsel %vm246, %v1552, %v1520
    %v1557 = vsel %vm251, %v1553, %v1526
    %v1558 = vsel %vm251, %v1554, %v1528
    %v1559 = vsel %vm251, %v1555, %v1530
    %v1560 = vsel %vm251, %v1556, %v1532
    %v1561 = vsel %vm256, %v1557, %v1538
    %v1562 = vsel %vm256, %v1558, %v1540
    %v1563 = vsel %vm256, %v1559, %v1542
    %v1564 = vsel %vm256, %v1560, %v1544
    %v1567 = vrot.slane %v1561, 1
    %v1568 = vrot.slane %v1563, 1
    %v1573 = vrot.slane %v1561, 7
    %v1574 = vrot.slane %v1562, 7
    %v1575 = vsel %vm269, %v1573, %v1574
    %v1576 = vrot.slane %v1563, 7
    %v1577 = vrot.slane %v1564, 7
    %v1578 = vsel %vm269, %v1576, %v1577
    %v1583 = vrot.slane %v1562, 5
    %v1584 = vrot.slane %v1564, 5
    %v1587 = vsel %vm269, %v1567, %v1573
    %v1588 = vsel %vm269, %v1568, %v1576
    %v1589 = vsel %vm269, %v1574, %v1583
    %v1590 = vsel %vm269, %v1577, %v1584
    %v1591 = vld [vmem:[%s8] sm:$0xff]
    %v1592 = vld [vmem:[%s8 + $0x8] sm:$0x7f]
    %v1593 = vld [vmem:[%s8 + $0x10] sm:$0xff]
    %v1594 = vld [vmem:[%s8 + $0x18] sm:$0x7f]
    %v1595 = vld [vmem:[%s8 + $0x20] sm:$0xff]
    %v1596 = vld [vmem:[%s8 + $0x28] sm:$0x7f]
    %v1598 = vlaneseq
    %v1599 = vshrl.u32 %v1598, 7
    %v1600 = vsub.s32 0, %v1599
    %v1601 = vrot.slane %v1492, %v1600
    %v1603 = vadd.f32 %v1601, 0.0
    %v1604 = vlaneseq
    %v1605 = vshrl.u32 %v1604, 7
    %v1606 = vsub.s32 0, %v1605
    %v1607 = vrot.slane %v1591, %v1606
    %1610 = vrot.lane.b32.xlu0 %v1587, 127
    %v1611 = vpop.permute.xlu0 %1610
    %1612 = vrot.lane.b32.xlu0 %v1575, 127
    %v1613 = vpop.permute.xlu0 %1612
    %1614 = vrot.lane.b32.xlu0 %v1588, 127
    %v1615 = vpop.permute.xlu0 %1614
    %1616 = vrot.lane.b32.xlu0 %v1578, 127
    %v1617 = vpop.permute.xlu0 %1616
    %v1622 = vmul.f32 %v1607, %v1611
    %v1623 = vmul.f32 %v1607, %v1613
    %v1624 = vmul.f32 %v1607, %v1615
    %v1625 = vmul.f32 %v1607, %v1617
    %v1626 = vadd.f32 %v1603, %v1622
    %v1627 = vadd.f32 %v1603, %v1623
    %v1628 = vadd.f32 %v1603, %v1624
    %v1629 = vadd.f32 %v1603, %v1625
    %v1630 = vlaneseq
    %v1631 = vshrl.u32 %v1630, 7
    %v1632 = vsub.s32 1, %v1631
    %v1633 = vrot.slane %v1591, %v1632
    %1634 = vrot.lane.b32.xlu0 %v1587, 126
    %v1635 = vpop.permute.xlu0 %1634
    %1636 = vrot.lane.b32.xlu0 %v1575, 126
    %v1637 = vpop.permute.xlu0 %1636
    %1638 = vrot.lane.b32.xlu0 %v1588, 126
    %v1639 = vpop.permute.xlu0 %1638
    %1640 = vrot.lane.b32.xlu0 %v1578, 126
    %v1641 = vpop.permute.xlu0 %1640
    %v1646 = vmul.f32 %v1633, %v1635
    %v1647 = vmul.f32 %v1633, %v1637
    %v1648 = vmul.f32 %v1633, %v1639
    %v1649 = vmul.f32 %v1633, %v1641
    %v1650 = vadd.f32 %v1626, %v1646
    %v1651 = vadd.f32 %v1627, %v1647
    %v1652 = vadd.f32 %v1628, %v1648
    %v1653 = vadd.f32 %v1629, %v1649
    %v1654 = vlaneseq
    %v1655 = vshrl.u32 %v1654, 7
    %v1656 = vsub.s32 2, %v1655
    %v1657 = vrot.slane %v1591, %v1656
    %1658 = vrot.lane.b32.xlu0 %v1587, 125
    %v1659 = vpop.permute.xlu0 %1658
    %1660 = vrot.lane.b32.xlu0 %v1575, 125
    %v1661 = vpop.permute.xlu0 %1660
    %1662 = vrot.lane.b32.xlu0 %v1588, 125
    %v1663 = vpop.permute.xlu0 %1662
    %1664 = vrot.lane.b32.xlu0 %v1578, 125
    %v1665 = vpop.permute.xlu0 %1664
    %v1670 = vmul.f32 %v1657, %v1659
    %v1671 = vmul.f32 %v1657, %v1661
    %v1672 = vmul.f32 %v1657, %v1663
    %v1673 = vmul.f32 %v1657, %v1665
    %v1674 = vadd.f32 %v1650, %v1670
    %v1675 = vadd.f32 %v1651, %v1671
    %v1676 = vadd.f32 %v1652, %v1672
    %v1677 = vadd.f32 %v1653, %v1673
    %v1678 = vlaneseq
    %v1679 = vshrl.u32 %v1678, 7
    %v1680 = vsub.s32 3, %v1679
    %v1681 = vrot.slane %v1591, %v1680
    %1682 = vrot.lane.b32.xlu0 %v1587, 124
    %v1683 = vpop.permute.xlu0 %1682
    %1684 = vrot.lane.b32.xlu0 %v1575, 124
    %v1685 = vpop.permute.xlu0 %1684
    %1686 = vrot.lane.b32.xlu0 %v1588, 124
    %v1687 = vpop.permute.xlu0 %1686
    %1688 = vrot.lane.b32.xlu0 %v1578, 124
    %v1689 = vpop.permute.xlu0 %1688
    %v1694 = vmul.f32 %v1681, %v1683
    %v1695 = vmul.f32 %v1681, %v1685
    %v1696 = vmul.f32 %v1681, %v1687
    %v1697 = vmul.f32 %v1681, %v1689
    %v1698 = vadd.f32 %v1674, %v1694
    %v1699 = vadd.f32 %v1675, %v1695
    %v1700 = vadd.f32 %v1676, %v1696
    %v1701 = vadd.f32 %v1677, %v1697
    %v1702 = vlaneseq
    %v1703 = vshrl.u32 %v1702, 7
    %v1704 = vsub.s32 4, %v1703
    %v1705 = vrot.slane %v1591, %v1704
    %1706 = vrot.lane.b32.xlu0 %v1587, 123
    %v1707 = vpop.permute.xlu0 %1706
    %1708 = vrot.lane.b32.xlu0 %v1575, 123
    %v1709 = vpop.permute.xlu0 %1708
    %1710 = vrot.lane.b32.xlu0 %v1588, 123
    %v1711 = vpop.permute.xlu0 %1710
    %1712 = vrot.lane.b32.xlu0 %v1578, 123
    %v1713 = vpop.permute.xlu0 %1712
    %v1718 = vmul.f32 %v1705, %v1707
    %v1719 = vmul.f32 %v1705, %v1709
    %v1720 = vmul.f32 %v1705, %v1711
    %v1721 = vmul.f32 %v1705, %v1713
    %v1722 = vadd.f32 %v1698, %v1718
    %v1723 = vadd.f32 %v1699, %v1719
    %v1724 = vadd.f32 %v1700, %v1720
    %v1725 = vadd.f32 %v1701, %v1721
    %v1726 = vlaneseq
    %v1727 = vshrl.u32 %v1726, 7
    %v1728 = vsub.s32 5, %v1727
    %v1729 = vrot.slane %v1591, %v1728
    %1730 = vrot.lane.b32.xlu0 %v1587, 122
    %v1731 = vpop.permute.xlu0 %1730
    %1732 = vrot.lane.b32.xlu0 %v1575, 122
    %v1733 = vpop.permute.xlu0 %1732
    %1734 = vrot.lane.b32.xlu0 %v1588, 122
    %v1735 = vpop.permute.xlu0 %1734
    %1736 = vrot.lane.b32.xlu0 %v1578, 122
    %v1737 = vpop.permute.xlu0 %1736
    %v1742 = vmul.f32 %v1729, %v1731
    %v1743 = vmul.f32 %v1729, %v1733
    %v1744 = vmul.f32 %v1729, %v1735
    %v1745 = vmul.f32 %v1729, %v1737
    %v1746 = vadd.f32 %v1722, %v1742
    %v1747 = vadd.f32 %v1723, %v1743
    %v1748 = vadd.f32 %v1724, %v1744
    %v1749 = vadd.f32 %v1725, %v1745
    %v1750 = vlaneseq
    %v1751 = vshrl.u32 %v1750, 7
    %v1752 = vsub.s32 6, %v1751
    %v1753 = vrot.slane %v1591, %v1752
    %1754 = vrot.lane.b32.xlu0 %v1587, 121
    %v1755 = vpop.permute.xlu0 %1754
    %1756 = vrot.lane.b32.xlu0 %v1575, 121
    %v1757 = vpop.permute.xlu0 %1756
    %1758 = vrot.lane.b32.xlu0 %v1588, 121
    %v1759 = vpop.permute.xlu0 %1758
    %1760 = vrot.lane.b32.xlu0 %v1578, 121
    %v1761 = vpop.permute.xlu0 %1760
    %v1766 = vmul.f32 %v1753, %v1755
    %v1767 = vmul.f32 %v1753, %v1757
    %v1768 = vmul.f32 %v1753, %v1759
    %v1769 = vmul.f32 %v1753, %v1761
    %v1770 = vadd.f32 %v1746, %v1766
    %v1771 = vadd.f32 %v1747, %v1767
    %v1772 = vadd.f32 %v1748, %v1768
    %v1773 = vadd.f32 %v1749, %v1769
    %v1774 = vlaneseq
    %v1775 = vshrl.u32 %v1774, 7
    %v1776 = vsub.s32 7, %v1775
    %v1777 = vrot.slane %v1591, %v1776
    %1778 = vrot.lane.b32.xlu0 %v1587, 120
    %v1779 = vpop.permute.xlu0 %1778
    %1780 = vrot.lane.b32.xlu0 %v1575, 120
    %v1781 = vpop.permute.xlu0 %1780
    %1782 = vrot.lane.b32.xlu0 %v1588, 120
    %v1783 = vpop.permute.xlu0 %1782
    %1784 = vrot.lane.b32.xlu0 %v1578, 120
    %v1785 = vpop.permute.xlu0 %1784
    %v1790 = vmul.f32 %v1777, %v1779
    %v1791 = vmul.f32 %v1777, %v1781
    %v1792 = vmul.f32 %v1777, %v1783
    %v1793 = vmul.f32 %v1777, %v1785
    %v1794 = vadd.f32 %v1770, %v1790
    %v1795 = vadd.f32 %v1771, %v1791
    %v1796 = vadd.f32 %v1772, %v1792
    %v1797 = vadd.f32 %v1773, %v1793
    %v1798 = vlaneseq
    %v1799 = vshrl.u32 %v1798, 7
    %v1800 = vsub.s32 0, %v1799
    %v1801 = vrot.slane %v1592, %v1800
    %1802 = vrot.lane.b32.xlu0 %v1587, 119
    %v1803 = vpop.permute.xlu0 %1802
    %1804 = vrot.lane.b32.xlu0 %v1575, 119
    %v1805 = vpop.permute.xlu0 %1804
    %1806 = vrot.lane.b32.xlu0 %v1588, 119
    %v1807 = vpop.permute.xlu0 %1806
    %1808 = vrot.lane.b32.xlu0 %v1578, 119
    %v1809 = vpop.permute.xlu0 %1808
    %v1814 = vmul.f32 %v1801, %v1803
    %v1815 = vmul.f32 %v1801, %v1805
    %v1816 = vmul.f32 %v1801, %v1807
    %v1817 = vmul.f32 %v1801, %v1809
    %v1818 = vadd.f32 %v1794, %v1814
    %v1819 = vadd.f32 %v1795, %v1815
    %v1820 = vadd.f32 %v1796, %v1816
    %v1821 = vadd.f32 %v1797, %v1817
    %v1822 = vlaneseq
    %v1823 = vshrl.u32 %v1822, 7
    %v1824 = vsub.s32 1, %v1823
    %v1825 = vrot.slane %v1592, %v1824
    %1826 = vrot.lane.b32.xlu0 %v1587, 118
    %v1827 = vpop.permute.xlu0 %1826
    %1828 = vrot.lane.b32.xlu0 %v1575, 118
    %v1829 = vpop.permute.xlu0 %1828
    %1830 = vrot.lane.b32.xlu0 %v1588, 118
    %v1831 = vpop.permute.xlu0 %1830
    %1832 = vrot.lane.b32.xlu0 %v1578, 118
    %v1833 = vpop.permute.xlu0 %1832
    %v1838 = vmul.f32 %v1825, %v1827
    %v1839 = vmul.f32 %v1825, %v1829
    %v1840 = vmul.f32 %v1825, %v1831
    %v1841 = vmul.f32 %v1825, %v1833
    %v1842 = vadd.f32 %v1818, %v1838
    %v1843 = vadd.f32 %v1819, %v1839
    %v1844 = vadd.f32 %v1820, %v1840
    %v1845 = vadd.f32 %v1821, %v1841
    %v1846 = vlaneseq
    %v1847 = vshrl.u32 %v1846, 7
    %v1848 = vsub.s32 2, %v1847
    %v1849 = vrot.slane %v1592, %v1848
    %1850 = vrot.lane.b32.xlu0 %v1587, 117
    %v1851 = vpop.permute.xlu0 %1850
    %1852 = vrot.lane.b32.xlu0 %v1575, 117
    %v1853 = vpop.permute.xlu0 %1852
    %1854 = vrot.lane.b32.xlu0 %v1588, 117
    %v1855 = vpop.permute.xlu0 %1854
    %1856 = vrot.lane.b32.xlu0 %v1578, 117
    %v1857 = vpop.permute.xlu0 %1856
    %v1862 = vmul.f32 %v1849, %v1851
    %v1863 = vmul.f32 %v1849, %v1853
    %v1864 = vmul.f32 %v1849, %v1855
    %v1865 = vmul.f32 %v1849, %v1857
    %v1866 = vadd.f32 %v1842, %v1862
    %v1867 = vadd.f32 %v1843, %v1863
    %v1868 = vadd.f32 %v1844, %v1864
    %v1869 = vadd.f32 %v1845, %v1865
    %v1870 = vlaneseq
    %v1871 = vshrl.u32 %v1870, 7
    %v1872 = vsub.s32 3, %v1871
    %v1873 = vrot.slane %v1592, %v1872
    %1874 = vrot.lane.b32.xlu0 %v1587, 116
    %v1875 = vpop.permute.xlu0 %1874
    %1876 = vrot.lane.b32.xlu0 %v1575, 116
    %v1877 = vpop.permute.xlu0 %1876
    %1878 = vrot.lane.b32.xlu0 %v1588, 116
    %v1879 = vpop.permute.xlu0 %1878
    %1880 = vrot.lane.b32.xlu0 %v1578, 116
    %v1881 = vpop.permute.xlu0 %1880
    %v1886 = vmul.f32 %v1873, %v1875
    %v1887 = vmul.f32 %v1873, %v1877
    %v1888 = vmul.f32 %v1873, %v1879
    %v1889 = vmul.f32 %v1873, %v1881
    %v1890 = vadd.f32 %v1866, %v1886
    %v1891 = vadd.f32 %v1867, %v1887
    %v1892 = vadd.f32 %v1868, %v1888
    %v1893 = vadd.f32 %v1869, %v1889
    %v1894 = vlaneseq
    %v1895 = vshrl.u32 %v1894, 7
    %v1896 = vsub.s32 4, %v1895
    %v1897 = vrot.slane %v1592, %v1896
    %1898 = vrot.lane.b32.xlu0 %v1587, 115
    %v1899 = vpop.permute.xlu0 %1898
    %1900 = vrot.lane.b32.xlu0 %v1575, 115
    %v1901 = vpop.permute.xlu0 %1900
    %1902 = vrot.lane.b32.xlu0 %v1588, 115
    %v1903 = vpop.permute.xlu0 %1902
    %1904 = vrot.lane.b32.xlu0 %v1578, 115
    %v1905 = vpop.permute.xlu0 %1904
    %v1910 = vmul.f32 %v1897, %v1899
    %v1911 = vmul.f32 %v1897, %v1901
    %v1912 = vmul.f32 %v1897, %v1903
    %v1913 = vmul.f32 %v1897, %v1905
    %v1914 = vadd.f32 %v1890, %v1910
    %v1915 = vadd.f32 %v1891, %v1911
    %v1916 = vadd.f32 %v1892, %v1912
    %v1917 = vadd.f32 %v1893, %v1913
    %v1918 = vlaneseq
    %v1919 = vshrl.u32 %v1918, 7
    %v1920 = vsub.s32 5, %v1919
    %v1921 = vrot.slane %v1592, %v1920
    %1922 = vrot.lane.b32.xlu0 %v1587, 114
    %v1923 = vpop.permute.xlu0 %1922
    %1924 = vrot.lane.b32.xlu0 %v1575, 114
    %v1925 = vpop.permute.xlu0 %1924
    %1926 = vrot.lane.b32.xlu0 %v1588, 114
    %v1927 = vpop.permute.xlu0 %1926
    %1928 = vrot.lane.b32.xlu0 %v1578, 114
    %v1929 = vpop.permute.xlu0 %1928
    %v1934 = vmul.f32 %v1921, %v1923
    %v1935 = vmul.f32 %v1921, %v1925
    %v1936 = vmul.f32 %v1921, %v1927
    %v1937 = vmul.f32 %v1921, %v1929
    %v1938 = vadd.f32 %v1914, %v1934
    %v1939 = vadd.f32 %v1915, %v1935
    %v1940 = vadd.f32 %v1916, %v1936
    %v1941 = vadd.f32 %v1917, %v1937
    %v1942 = vlaneseq
    %v1943 = vshrl.u32 %v1942, 7
    %v1944 = vsub.s32 6, %v1943
    %v1945 = vrot.slane %v1592, %v1944
    %1946 = vrot.lane.b32.xlu0 %v1587, 113
    %v1947 = vpop.permute.xlu0 %1946
    %1948 = vrot.lane.b32.xlu0 %v1575, 113
    %v1949 = vpop.permute.xlu0 %1948
    %1950 = vrot.lane.b32.xlu0 %v1588, 113
    %v1951 = vpop.permute.xlu0 %1950
    %1952 = vrot.lane.b32.xlu0 %v1578, 113
    %v1953 = vpop.permute.xlu0 %1952
    %v1958 = vmul.f32 %v1945, %v1947
    %v1959 = vmul.f32 %v1945, %v1949
    %v1960 = vmul.f32 %v1945, %v1951
    %v1961 = vmul.f32 %v1945, %v1953
    %v1962 = vadd.f32 %v1938, %v1958
    %v1963 = vadd.f32 %v1939, %v1959
    %v1964 = vadd.f32 %v1940, %v1960
    %v1965 = vadd.f32 %v1941, %v1961
    %v1966 = vlaneseq
    %v1967 = vshrl.u32 %v1966, 7
    %v1968 = vsub.s32 0, %v1967
    %v1969 = vrot.slane %v1593, %v1968
    %v1972 = vrot.slane %v1587, 1
    %v1973 = vrot.slane %v1575, 1
    %v1974 = vsel %vm669, %v1972, %v1973
    %v1975 = vrot.slane %v1589, 1
    %v1976 = vsel %vm669, %v1973, %v1975
    %v1977 = vrot.slane %v1588, 1
    %v1978 = vrot.slane %v1578, 1
    %v1979 = vsel %vm669, %v1977, %v1978
    %v1980 = vrot.slane %v1590, 1
    %v1981 = vsel %vm669, %v1978, %v1980
    %1982 = vrot.lane.b32.xlu0 %v1974, 127
    %v1983 = vpop.permute.xlu0 %1982
    %1984 = vrot.lane.b32.xlu0 %v1976, 127
    %v1985 = vpop.permute.xlu0 %1984
    %1986 = vrot.lane.b32.xlu0 %v1979, 127
    %v1987 = vpop.permute.xlu0 %1986
    %1988 = vrot.lane.b32.xlu0 %v1981, 127
    %v1989 = vpop.permute.xlu0 %1988
    %v1994 = vmul.f32 %v1969, %v1983
    %v1995 = vmul.f32 %v1969, %v1985
    %v1996 = vmul.f32 %v1969, %v1987
    %v1997 = vmul.f32 %v1969, %v1989
    %v1998 = vadd.f32 %v1962, %v1994
    %v1999 = vadd.f32 %v1963, %v1995
    %v2000 = vadd.f32 %v1964, %v1996
    %v2001 = vadd.f32 %v1965, %v1997
    %v2002 = vlaneseq
    %v2003 = vshrl.u32 %v2002, 7
    %v2004 = vsub.s32 1, %v2003
    %v2005 = vrot.slane %v1593, %v2004
    %2006 = vrot.lane.b32.xlu0 %v1974, 126
    %v2007 = vpop.permute.xlu0 %2006
    %2008 = vrot.lane.b32.xlu0 %v1976, 126
    %v2009 = vpop.permute.xlu0 %2008
    %2010 = vrot.lane.b32.xlu0 %v1979, 126
    %v2011 = vpop.permute.xlu0 %2010
    %2012 = vrot.lane.b32.xlu0 %v1981, 126
    %v2013 = vpop.permute.xlu0 %2012
    %v2018 = vmul.f32 %v2005, %v2007
    %v2019 = vmul.f32 %v2005, %v2009
    %v2020 = vmul.f32 %v2005, %v2011
    %v2021 = vmul.f32 %v2005, %v2013
    %v2022 = vadd.f32 %v1998, %v2018
    %v2023 = vadd.f32 %v1999, %v2019
    %v2024 = vadd.f32 %v2000, %v2020
    %v2025 = vadd.f32 %v2001, %v2021
    %v2026 = vlaneseq
    %v2027 = vshrl.u32 %v2026, 7
    %v2028 = vsub.s32 2, %v2027
    %v2029 = vrot.slane %v1593, %v2028
    %2030 = vrot.lane.b32.xlu0 %v1974, 125
    %v2031 = vpop.permute.xlu0 %2030
    %2032 = vrot.lane.b32.xlu0 %v1976, 125
    %v2033 = vpop.permute.xlu0 %2032
    %2034 = vrot.lane.b32.xlu0 %v1979, 125
    %v2035 = vpop.permute.xlu0 %2034
    %2036 = vrot.lane.b32.xlu0 %v1981, 125
    %v2037 = vpop.permute.xlu0 %2036
    %v2042 = vmul.f32 %v2029, %v2031
    %v2043 = vmul.f32 %v2029, %v2033
    %v2044 = vmul.f32 %v2029, %v2035
    %v2045 = vmul.f32 %v2029, %v2037
    %v2046 = vadd.f32 %v2022, %v2042
    %v2047 = vadd.f32 %v2023, %v2043
    %v2048 = vadd.f32 %v2024, %v2044
    %v2049 = vadd.f32 %v2025, %v2045
    %v2050 = vlaneseq
    %v2051 = vshrl.u32 %v2050, 7
    %v2052 = vsub.s32 3, %v2051
    %v2053 = vrot.slane %v1593, %v2052
    %2054 = vrot.lane.b32.xlu0 %v1974, 124
    %v2055 = vpop.permute.xlu0 %2054
    %2056 = vrot.lane.b32.xlu0 %v1976, 124
    %v2057 = vpop.permute.xlu0 %2056
    %2058 = vrot.lane.b32.xlu0 %v1979, 124
    %v2059 = vpop.permute.xlu0 %2058
    %2060 = vrot.lane.b32.xlu0 %v1981, 124
    %v2061 = vpop.permute.xlu0 %2060
    %v2066 = vmul.f32 %v2053, %v2055
    %v2067 = vmul.f32 %v2053, %v2057
    %v2068 = vmul.f32 %v2053, %v2059
    %v2069 = vmul.f32 %v2053, %v2061
    %v2070 = vadd.f32 %v2046, %v2066
    %v2071 = vadd.f32 %v2047, %v2067
    %v2072 = vadd.f32 %v2048, %v2068
    %v2073 = vadd.f32 %v2049, %v2069
    %v2074 = vlaneseq
    %v2075 = vshrl.u32 %v2074, 7
    %v2076 = vsub.s32 4, %v2075
    %v2077 = vrot.slane %v1593, %v2076
    %2078 = vrot.lane.b32.xlu0 %v1974, 123
    %v2079 = vpop.permute.xlu0 %2078
    %2080 = vrot.lane.b32.xlu0 %v1976, 123
    %v2081 = vpop.permute.xlu0 %2080
    %2082 = vrot.lane.b32.xlu0 %v1979, 123
    %v2083 = vpop.permute.xlu0 %2082
    %2084 = vrot.lane.b32.xlu0 %v1981, 123
    %v2085 = vpop.permute.xlu0 %2084
    %v2090 = vmul.f32 %v2077, %v2079
    %v2091 = vmul.f32 %v2077, %v2081
    %v2092 = vmul.f32 %v2077, %v2083
    %v2093 = vmul.f32 %v2077, %v2085
    %v2094 = vadd.f32 %v2070, %v2090
    %v2095 = vadd.f32 %v2071, %v2091
    %v2096 = vadd.f32 %v2072, %v2092
    %v2097 = vadd.f32 %v2073, %v2093
    %v2098 = vlaneseq
    %v2099 = vshrl.u32 %v2098, 7
    %v2100 = vsub.s32 5, %v2099
    %v2101 = vrot.slane %v1593, %v2100
    %2102 = vrot.lane.b32.xlu0 %v1974, 122
    %v2103 = vpop.permute.xlu0 %2102
    %2104 = vrot.lane.b32.xlu0 %v1976, 122
    %v2105 = vpop.permute.xlu0 %2104
    %2106 = vrot.lane.b32.xlu0 %v1979, 122
    %v2107 = vpop.permute.xlu0 %2106
    %2108 = vrot.lane.b32.xlu0 %v1981, 122
    %v2109 = vpop.permute.xlu0 %2108
    %v2114 = vmul.f32 %v2101, %v2103
    %v2115 = vmul.f32 %v2101, %v2105
    %v2116 = vmul.f32 %v2101, %v2107
    %v2117 = vmul.f32 %v2101, %v2109
    %v2118 = vadd.f32 %v2094, %v2114
    %v2119 = vadd.f32 %v2095, %v2115
    %v2120 = vadd.f32 %v2096, %v2116
    %v2121 = vadd.f32 %v2097, %v2117
    %v2122 = vlaneseq
    %v2123 = vshrl.u32 %v2122, 7
    %v2124 = vsub.s32 6, %v2123
    %v2125 = vrot.slane %v1593, %v2124
    %2126 = vrot.lane.b32.xlu0 %v1974, 121
    %v2127 = vpop.permute.xlu0 %2126
    %2128 = vrot.lane.b32.xlu0 %v1976, 121
    %v2129 = vpop.permute.xlu0 %2128
    %2130 = vrot.lane.b32.xlu0 %v1979, 121
    %v2131 = vpop.permute.xlu0 %2130
    %2132 = vrot.lane.b32.xlu0 %v1981, 121
    %v2133 = vpop.permute.xlu0 %2132
    %v2138 = vmul.f32 %v2125, %v2127
    %v2139 = vmul.f32 %v2125, %v2129
    %v2140 = vmul.f32 %v2125, %v2131
    %v2141 = vmul.f32 %v2125, %v2133
    %v2142 = vadd.f32 %v2118, %v2138
    %v2143 = vadd.f32 %v2119, %v2139
    %v2144 = vadd.f32 %v2120, %v2140
    %v2145 = vadd.f32 %v2121, %v2141
    %v2146 = vlaneseq
    %v2147 = vshrl.u32 %v2146, 7
    %v2148 = vsub.s32 7, %v2147
    %v2149 = vrot.slane %v1593, %v2148
    %2150 = vrot.lane.b32.xlu0 %v1974, 120
    %v2151 = vpop.permute.xlu0 %2150
    %2152 = vrot.lane.b32.xlu0 %v1976, 120
    %v2153 = vpop.permute.xlu0 %2152
    %2154 = vrot.lane.b32.xlu0 %v1979, 120
    %v2155 = vpop.permute.xlu0 %2154
    %2156 = vrot.lane.b32.xlu0 %v1981, 120
    %v2157 = vpop.permute.xlu0 %2156
    %v2162 = vmul.f32 %v2149, %v2151
    %v2163 = vmul.f32 %v2149, %v2153
    %v2164 = vmul.f32 %v2149, %v2155
    %v2165 = vmul.f32 %v2149, %v2157
    %v2166 = vadd.f32 %v2142, %v2162
    %v2167 = vadd.f32 %v2143, %v2163
    %v2168 = vadd.f32 %v2144, %v2164
    %v2169 = vadd.f32 %v2145, %v2165
    %v2170 = vlaneseq
    %v2171 = vshrl.u32 %v2170, 7
    %v2172 = vsub.s32 0, %v2171
    %v2173 = vrot.slane %v1594, %v2172
    %2174 = vrot.lane.b32.xlu0 %v1974, 119
    %v2175 = vpop.permute.xlu0 %2174
    %2176 = vrot.lane.b32.xlu0 %v1976, 119
    %v2177 = vpop.permute.xlu0 %2176
    %2178 = vrot.lane.b32.xlu0 %v1979, 119
    %v2179 = vpop.permute.xlu0 %2178
    %2180 = vrot.lane.b32.xlu0 %v1981, 119
    %v2181 = vpop.permute.xlu0 %2180
    %v2186 = vmul.f32 %v2173, %v2175
    %v2187 = vmul.f32 %v2173, %v2177
    %v2188 = vmul.f32 %v2173, %v2179
    %v2189 = vmul.f32 %v2173, %v2181
    %v2190 = vadd.f32 %v2166, %v2186
    %v2191 = vadd.f32 %v2167, %v2187
    %v2192 = vadd.f32 %v2168, %v2188
    %v2193 = vadd.f32 %v2169, %v2189
    %v2194 = vlaneseq
    %v2195 = vshrl.u32 %v2194, 7
    %v2196 = vsub.s32 1, %v2195
    %v2197 = vrot.slane %v1594, %v2196
    %2198 = vrot.lane.b32.xlu0 %v1974, 118
    %v2199 = vpop.permute.xlu0 %2198
    %2200 = vrot.lane.b32.xlu0 %v1976, 118
    %v2201 = vpop.permute.xlu0 %2200
    %2202 = vrot.lane.b32.xlu0 %v1979, 118
    %v2203 = vpop.permute.xlu0 %2202
    %2204 = vrot.lane.b32.xlu0 %v1981, 118
    %v2205 = vpop.permute.xlu0 %2204
    %v2210 = vmul.f32 %v2197, %v2199
    %v2211 = vmul.f32 %v2197, %v2201
    %v2212 = vmul.f32 %v2197, %v2203
    %v2213 = vmul.f32 %v2197, %v2205
    %v2214 = vadd.f32 %v2190, %v2210
    %v2215 = vadd.f32 %v2191, %v2211
    %v2216 = vadd.f32 %v2192, %v2212
    %v2217 = vadd.f32 %v2193, %v2213
    %v2218 = vlaneseq
    %v2219 = vshrl.u32 %v2218, 7
    %v2220 = vsub.s32 2, %v2219
    %v2221 = vrot.slane %v1594, %v2220
    %2222 = vrot.lane.b32.xlu0 %v1974, 117
    %v2223 = vpop.permute.xlu0 %2222
    %2224 = vrot.lane.b32.xlu0 %v1976, 117
    %v2225 = vpop.permute.xlu0 %2224
    %2226 = vrot.lane.b32.xlu0 %v1979, 117
    %v2227 = vpop.permute.xlu0 %2226
    %2228 = vrot.lane.b32.xlu0 %v1981, 117
    %v2229 = vpop.permute.xlu0 %2228
    %v2234 = vmul.f32 %v2221, %v2223
    %v2235 = vmul.f32 %v2221, %v2225
    %v2236 = vmul.f32 %v2221, %v2227
    %v2237 = vmul.f32 %v2221, %v2229
    %v2238 = vadd.f32 %v2214, %v2234
    %v2239 = vadd.f32 %v2215, %v2235
    %v2240 = vadd.f32 %v2216, %v2236
    %v2241 = vadd.f32 %v2217, %v2237
    %v2242 = vlaneseq
    %v2243 = vshrl.u32 %v2242, 7
    %v2244 = vsub.s32 3, %v2243
    %v2245 = vrot.slane %v1594, %v2244
    %2246 = vrot.lane.b32.xlu0 %v1974, 116
    %v2247 = vpop.permute.xlu0 %2246
    %2248 = vrot.lane.b32.xlu0 %v1976, 116
    %v2249 = vpop.permute.xlu0 %2248
    %2250 = vrot.lane.b32.xlu0 %v1979, 116
    %v2251 = vpop.permute.xlu0 %2250
    %2252 = vrot.lane.b32.xlu0 %v1981, 116
    %v2253 = vpop.permute.xlu0 %2252
    %v2258 = vmul.f32 %v2245, %v2247
    %v2259 = vmul.f32 %v2245, %v2249
    %v2260 = vmul.f32 %v2245, %v2251
    %v2261 = vmul.f32 %v2245, %v2253
    %v2262 = vadd.f32 %v2238, %v2258
    %v2263 = vadd.f32 %v2239, %v2259
    %v2264 = vadd.f32 %v2240, %v2260
    %v2265 = vadd.f32 %v2241, %v2261
    %v2266 = vlaneseq
    %v2267 = vshrl.u32 %v2266, 7
    %v2268 = vsub.s32 4, %v2267
    %v2269 = vrot.slane %v1594, %v2268
    %2270 = vrot.lane.b32.xlu0 %v1974, 115
    %v2271 = vpop.permute.xlu0 %2270
    %2272 = vrot.lane.b32.xlu0 %v1976, 115
    %v2273 = vpop.permute.xlu0 %2272
    %2274 = vrot.lane.b32.xlu0 %v1979, 115
    %v2275 = vpop.permute.xlu0 %2274
    %2276 = vrot.lane.b32.xlu0 %v1981, 115
    %v2277 = vpop.permute.xlu0 %2276
    %v2282 = vmul.f32 %v2269, %v2271
    %v2283 = vmul.f32 %v2269, %v2273
    %v2284 = vmul.f32 %v2269, %v2275
    %v2285 = vmul.f32 %v2269, %v2277
    %v2286 = vadd.f32 %v2262, %v2282
    %v2287 = vadd.f32 %v2263, %v2283
    %v2288 = vadd.f32 %v2264, %v2284
    %v2289 = vadd.f32 %v2265, %v2285
    %v2290 = vlaneseq
    %v2291 = vshrl.u32 %v2290, 7
    %v2292 = vsub.s32 5, %v2291
    %v2293 = vrot.slane %v1594, %v2292
    %2294 = vrot.lane.b32.xlu0 %v1974, 114
    %v2295 = vpop.permute.xlu0 %2294
    %2296 = vrot.lane.b32.xlu0 %v1976, 114
    %v2297 = vpop.permute.xlu0 %2296
    %2298 = vrot.lane.b32.xlu0 %v1979, 114
    %v2299 = vpop.permute.xlu0 %2298
    %2300 = vrot.lane.b32.xlu0 %v1981, 114
    %v2301 = vpop.permute.xlu0 %2300
    %v2306 = vmul.f32 %v2293, %v2295
    %v2307 = vmul.f32 %v2293, %v2297
    %v2308 = vmul.f32 %v2293, %v2299
    %v2309 = vmul.f32 %v2293, %v2301
    %v2310 = vadd.f32 %v2286, %v2306
    %v2311 = vadd.f32 %v2287, %v2307
    %v2312 = vadd.f32 %v2288, %v2308
    %v2313 = vadd.f32 %v2289, %v2309
    %v2314 = vlaneseq
    %v2315 = vshrl.u32 %v2314, 7
    %v2316 = vsub.s32 6, %v2315
    %v2317 = vrot.slane %v1594, %v2316
    %2318 = vrot.lane.b32.xlu0 %v1974, 113
    %v2319 = vpop.permute.xlu0 %2318
    %2320 = vrot.lane.b32.xlu0 %v1976, 113
    %v2321 = vpop.permute.xlu0 %2320
    %2322 = vrot.lane.b32.xlu0 %v1979, 113
    %v2323 = vpop.permute.xlu0 %2322
    %2324 = vrot.lane.b32.xlu0 %v1981, 113
    %v2325 = vpop.permute.xlu0 %2324
    %v2330 = vmul.f32 %v2317, %v2319
    %v2331 = vmul.f32 %v2317, %v2321
    %v2332 = vmul.f32 %v2317, %v2323
    %v2333 = vmul.f32 %v2317, %v2325
    %v2334 = vadd.f32 %v2310, %v2330
    %v2335 = vadd.f32 %v2311, %v2331
    %v2336 = vadd.f32 %v2312, %v2332
    %v2337 = vadd.f32 %v2313, %v2333
    %v2338 = vlaneseq
    %v2339 = vshrl.u32 %v2338, 7
    %v2340 = vsub.s32 0, %v2339
    %v2341 = vrot.slane %v1595, %v2340
    %v2342 = vrot.slane %v1587, 2
    %v2343 = vrot.slane %v1575, 2
    %v2344 = vsel %vm1040, %v2342, %v2343
    %v2345 = vrot.slane %v1589, 2
    %v2346 = vsel %vm1040, %v2343, %v2345
    %v2347 = vrot.slane %v1588, 2
    %v2348 = vrot.slane %v1578, 2
    %v2349 = vsel %vm1040, %v2347, %v2348
    %v2350 = vrot.slane %v1590, 2
    %v2351 = vsel %vm1040, %v2348, %v2350
    %2352 = vrot.lane.b32.xlu0 %v2344, 127
    %v2353 = vpop.permute.xlu0 %2352
    %2354 = vrot.lane.b32.xlu0 %v2346, 127
    %v2355 = vpop.permute.xlu0 %2354
    %2356 = vrot.lane.b32.xlu0 %v2349, 127
    %v2357 = vpop.permute.xlu0 %2356
    %2358 = vrot.lane.b32.xlu0 %v2351, 127
    %v2359 = vpop.permute.xlu0 %2358
    %v2364 = vmul.f32 %v2341, %v2353
    %v2365 = vmul.f32 %v2341, %v2355
    %v2366 = vmul.f32 %v2341, %v2357
    %v2367 = vmul.f32 %v2341, %v2359
    %v2368 = vadd.f32 %v2334, %v2364
    %v2369 = vadd.f32 %v2335, %v2365
    %v2370 = vadd.f32 %v2336, %v2366
    %v2371 = vadd.f32 %v2337, %v2367
    %v2372 = vlaneseq
    %v2373 = vshrl.u32 %v2372, 7
    %v2374 = vsub.s32 1, %v2373
    %v2375 = vrot.slane %v1595, %v2374
    %2376 = vrot.lane.b32.xlu0 %v2344, 126
    %v2377 = vpop.permute.xlu0 %2376
    %2378 = vrot.lane.b32.xlu0 %v2346, 126
    %v2379 = vpop.permute.xlu0 %2378
    %2380 = vrot.lane.b32.xlu0 %v2349, 126
    %v2381 = vpop.permute.xlu0 %2380
    %2382 = vrot.lane.b32.xlu0 %v2351, 126
    %v2383 = vpop.permute.xlu0 %2382
    %v2388 = vmul.f32 %v2375, %v2377
    %v2389 = vmul.f32 %v2375, %v2379
    %v2390 = vmul.f32 %v2375, %v2381
    %v2391 = vmul.f32 %v2375, %v2383
    %v2392 = vadd.f32 %v2368, %v2388
    %v2393 = vadd.f32 %v2369, %v2389
    %v2394 = vadd.f32 %v2370, %v2390
    %v2395 = vadd.f32 %v2371, %v2391
    %v2396 = vlaneseq
    %v2397 = vshrl.u32 %v2396, 7
    %v2398 = vsub.s32 2, %v2397
    %v2399 = vrot.slane %v1595, %v2398
    %2400 = vrot.lane.b32.xlu0 %v2344, 125
    %v2401 = vpop.permute.xlu0 %2400
    %2402 = vrot.lane.b32.xlu0 %v2346, 125
    %v2403 = vpop.permute.xlu0 %2402
    %2404 = vrot.lane.b32.xlu0 %v2349, 125
    %v2405 = vpop.permute.xlu0 %2404
    %2406 = vrot.lane.b32.xlu0 %v2351, 125
    %v2407 = vpop.permute.xlu0 %2406
    %v2412 = vmul.f32 %v2399, %v2401
    %v2413 = vmul.f32 %v2399, %v2403
    %v2414 = vmul.f32 %v2399, %v2405
    %v2415 = vmul.f32 %v2399, %v2407
    %v2416 = vadd.f32 %v2392, %v2412
    %v2417 = vadd.f32 %v2393, %v2413
    %v2418 = vadd.f32 %v2394, %v2414
    %v2419 = vadd.f32 %v2395, %v2415
    %v2420 = vlaneseq
    %v2421 = vshrl.u32 %v2420, 7
    %v2422 = vsub.s32 3, %v2421
    %v2423 = vrot.slane %v1595, %v2422
    %2424 = vrot.lane.b32.xlu0 %v2344, 124
    %v2425 = vpop.permute.xlu0 %2424
    %2426 = vrot.lane.b32.xlu0 %v2346, 124
    %v2427 = vpop.permute.xlu0 %2426
    %2428 = vrot.lane.b32.xlu0 %v2349, 124
    %v2429 = vpop.permute.xlu0 %2428
    %2430 = vrot.lane.b32.xlu0 %v2351, 124
    %v2431 = vpop.permute.xlu0 %2430
    %v2436 = vmul.f32 %v2423, %v2425
    %v2437 = vmul.f32 %v2423, %v2427
    %v2438 = vmul.f32 %v2423, %v2429
    %v2439 = vmul.f32 %v2423, %v2431
    %v2440 = vadd.f32 %v2416, %v2436
    %v2441 = vadd.f32 %v2417, %v2437
    %v2442 = vadd.f32 %v2418, %v2438
    %v2443 = vadd.f32 %v2419, %v2439
    %v2444 = vlaneseq
    %v2445 = vshrl.u32 %v2444, 7
    %v2446 = vsub.s32 4, %v2445
    %v2447 = vrot.slane %v1595, %v2446
    %2448 = vrot.lane.b32.xlu0 %v2344, 123
    %v2449 = vpop.permute.xlu0 %2448
    %2450 = vrot.lane.b32.xlu0 %v2346, 123
    %v2451 = vpop.permute.xlu0 %2450
    %2452 = vrot.lane.b32.xlu0 %v2349, 123
    %v2453 = vpop.permute.xlu0 %2452
    %2454 = vrot.lane.b32.xlu0 %v2351, 123
    %v2455 = vpop.permute.xlu0 %2454
    %v2460 = vmul.f32 %v2447, %v2449
    %v2461 = vmul.f32 %v2447, %v2451
    %v2462 = vmul.f32 %v2447, %v2453
    %v2463 = vmul.f32 %v2447, %v2455
    %v2464 = vadd.f32 %v2440, %v2460
    %v2465 = vadd.f32 %v2441, %v2461
    %v2466 = vadd.f32 %v2442, %v2462
    %v2467 = vadd.f32 %v2443, %v2463
    %v2468 = vlaneseq
    %v2469 = vshrl.u32 %v2468, 7
    %v2470 = vsub.s32 5, %v2469
    %v2471 = vrot.slane %v1595, %v2470
    %2472 = vrot.lane.b32.xlu0 %v2344, 122
    %v2473 = vpop.permute.xlu0 %2472
    %2474 = vrot.lane.b32.xlu0 %v2346, 122
    %v2475 = vpop.permute.xlu0 %2474
    %2476 = vrot.lane.b32.xlu0 %v2349, 122
    %v2477 = vpop.permute.xlu0 %2476
    %2478 = vrot.lane.b32.xlu0 %v2351, 122
    %v2479 = vpop.permute.xlu0 %2478
    %v2484 = vmul.f32 %v2471, %v2473
    %v2485 = vmul.f32 %v2471, %v2475
    %v2486 = vmul.f32 %v2471, %v2477
    %v2487 = vmul.f32 %v2471, %v2479
    %v2488 = vadd.f32 %v2464, %v2484
    %v2489 = vadd.f32 %v2465, %v2485
    %v2490 = vadd.f32 %v2466, %v2486
    %v2491 = vadd.f32 %v2467, %v2487
    %v2492 = vlaneseq
    %v2493 = vshrl.u32 %v2492, 7
    %v2494 = vsub.s32 6, %v2493
    %v2495 = vrot.slane %v1595, %v2494
    %2496 = vrot.lane.b32.xlu0 %v2344, 121
    %v2497 = vpop.permute.xlu0 %2496
    %2498 = vrot.lane.b32.xlu0 %v2346, 121
    %v2499 = vpop.permute.xlu0 %2498
    %2500 = vrot.lane.b32.xlu0 %v2349, 121
    %v2501 = vpop.permute.xlu0 %2500
    %2502 = vrot.lane.b32.xlu0 %v2351, 121
    %v2503 = vpop.permute.xlu0 %2502
    %v2508 = vmul.f32 %v2495, %v2497
    %v2509 = vmul.f32 %v2495, %v2499
    %v2510 = vmul.f32 %v2495, %v2501
    %v2511 = vmul.f32 %v2495, %v2503
    %v2512 = vadd.f32 %v2488, %v2508
    %v2513 = vadd.f32 %v2489, %v2509
    %v2514 = vadd.f32 %v2490, %v2510
    %v2515 = vadd.f32 %v2491, %v2511
    %v2516 = vlaneseq
    %v2517 = vshrl.u32 %v2516, 7
    %v2518 = vsub.s32 7, %v2517
    %v2519 = vrot.slane %v1595, %v2518
    %2520 = vrot.lane.b32.xlu0 %v2344, 120
    %v2521 = vpop.permute.xlu0 %2520
    %2522 = vrot.lane.b32.xlu0 %v2346, 120
    %v2523 = vpop.permute.xlu0 %2522
    %2524 = vrot.lane.b32.xlu0 %v2349, 120
    %v2525 = vpop.permute.xlu0 %2524
    %2526 = vrot.lane.b32.xlu0 %v2351, 120
    %v2527 = vpop.permute.xlu0 %2526
    %v2532 = vmul.f32 %v2519, %v2521
    %v2533 = vmul.f32 %v2519, %v2523
    %v2534 = vmul.f32 %v2519, %v2525
    %v2535 = vmul.f32 %v2519, %v2527
    %v2536 = vadd.f32 %v2512, %v2532
    %v2537 = vadd.f32 %v2513, %v2533
    %v2538 = vadd.f32 %v2514, %v2534
    %v2539 = vadd.f32 %v2515, %v2535
    %v2540 = vlaneseq
    %v2541 = vshrl.u32 %v2540, 7
    %v2542 = vsub.s32 0, %v2541
    %v2543 = vrot.slane %v1596, %v2542
    %2544 = vrot.lane.b32.xlu0 %v2344, 119
    %v2545 = vpop.permute.xlu0 %2544
    %2546 = vrot.lane.b32.xlu0 %v2346, 119
    %v2547 = vpop.permute.xlu0 %2546
    %2548 = vrot.lane.b32.xlu0 %v2349, 119
    %v2549 = vpop.permute.xlu0 %2548
    %2550 = vrot.lane.b32.xlu0 %v2351, 119
    %v2551 = vpop.permute.xlu0 %2550
    %v2556 = vmul.f32 %v2543, %v2545
    %v2557 = vmul.f32 %v2543, %v2547
    %v2558 = vmul.f32 %v2543, %v2549
    %v2559 = vmul.f32 %v2543, %v2551
    %v2560 = vadd.f32 %v2536, %v2556
    %v2561 = vadd.f32 %v2537, %v2557
    %v2562 = vadd.f32 %v2538, %v2558
    %v2563 = vadd.f32 %v2539, %v2559
    %v2564 = vlaneseq
    %v2565 = vshrl.u32 %v2564, 7
    %v2566 = vsub.s32 1, %v2565
    %v2567 = vrot.slane %v1596, %v2566
    %2568 = vrot.lane.b32.xlu0 %v2344, 118
    %v2569 = vpop.permute.xlu0 %2568
    %2570 = vrot.lane.b32.xlu0 %v2346, 118
    %v2571 = vpop.permute.xlu0 %2570
    %2572 = vrot.lane.b32.xlu0 %v2349, 118
    %v2573 = vpop.permute.xlu0 %2572
    %2574 = vrot.lane.b32.xlu0 %v2351, 118
    %v2575 = vpop.permute.xlu0 %2574
    %v2580 = vmul.f32 %v2567, %v2569
    %v2581 = vmul.f32 %v2567, %v2571
    %v2582 = vmul.f32 %v2567, %v2573
    %v2583 = vmul.f32 %v2567, %v2575
    %v2584 = vadd.f32 %v2560, %v2580
    %v2585 = vadd.f32 %v2561, %v2581
    %v2586 = vadd.f32 %v2562, %v2582
    %v2587 = vadd.f32 %v2563, %v2583
    %v2588 = vlaneseq
    %v2589 = vshrl.u32 %v2588, 7
    %v2590 = vsub.s32 2, %v2589
    %v2591 = vrot.slane %v1596, %v2590
    %2592 = vrot.lane.b32.xlu0 %v2344, 117
    %v2593 = vpop.permute.xlu0 %2592
    %2594 = vrot.lane.b32.xlu0 %v2346, 117
    %v2595 = vpop.permute.xlu0 %2594
    %2596 = vrot.lane.b32.xlu0 %v2349, 117
    %v2597 = vpop.permute.xlu0 %2596
    %2598 = vrot.lane.b32.xlu0 %v2351, 117
    %v2599 = vpop.permute.xlu0 %2598
    %v2604 = vmul.f32 %v2591, %v2593
    %v2605 = vmul.f32 %v2591, %v2595
    %v2606 = vmul.f32 %v2591, %v2597
    %v2607 = vmul.f32 %v2591, %v2599
    %v2608 = vadd.f32 %v2584, %v2604
    %v2609 = vadd.f32 %v2585, %v2605
    %v2610 = vadd.f32 %v2586, %v2606
    %v2611 = vadd.f32 %v2587, %v2607
    %v2612 = vlaneseq
    %v2613 = vshrl.u32 %v2612, 7
    %v2614 = vsub.s32 3, %v2613
    %v2615 = vrot.slane %v1596, %v2614
    %2616 = vrot.lane.b32.xlu0 %v2344, 116
    %v2617 = vpop.permute.xlu0 %2616
    %2618 = vrot.lane.b32.xlu0 %v2346, 116
    %v2619 = vpop.permute.xlu0 %2618
    %2620 = vrot.lane.b32.xlu0 %v2349, 116
    %v2621 = vpop.permute.xlu0 %2620
    %2622 = vrot.lane.b32.xlu0 %v2351, 116
    %v2623 = vpop.permute.xlu0 %2622
    %v2628 = vmul.f32 %v2615, %v2617
    %v2629 = vmul.f32 %v2615, %v2619
    %v2630 = vmul.f32 %v2615, %v2621
    %v2631 = vmul.f32 %v2615, %v2623
    %v2632 = vadd.f32 %v2608, %v2628
    %v2633 = vadd.f32 %v2609, %v2629
    %v2634 = vadd.f32 %v2610, %v2630
    %v2635 = vadd.f32 %v2611, %v2631
    %v2636 = vlaneseq
    %v2637 = vshrl.u32 %v2636, 7
    %v2638 = vsub.s32 4, %v2637
    %v2639 = vrot.slane %v1596, %v2638
    %2640 = vrot.lane.b32.xlu0 %v2344, 115
    %v2641 = vpop.permute.xlu0 %2640
    %2642 = vrot.lane.b32.xlu0 %v2346, 115
    %v2643 = vpop.permute.xlu0 %2642
    %2644 = vrot.lane.b32.xlu0 %v2349, 115
    %v2645 = vpop.permute.xlu0 %2644
    %2646 = vrot.lane.b32.xlu0 %v2351, 115
    %v2647 = vpop.permute.xlu0 %2646
    %v2652 = vmul.f32 %v2639, %v2641
    %v2653 = vmul.f32 %v2639, %v2643
    %v2654 = vmul.f32 %v2639, %v2645
    %v2655 = vmul.f32 %v2639, %v2647
    %v2656 = vadd.f32 %v2632, %v2652
    %v2657 = vadd.f32 %v2633, %v2653
    %v2658 = vadd.f32 %v2634, %v2654
    %v2659 = vadd.f32 %v2635, %v2655
    %v2660 = vlaneseq
    %v2661 = vshrl.u32 %v2660, 7
    %v2662 = vsub.s32 5, %v2661
    %v2663 = vrot.slane %v1596, %v2662
    %2664 = vrot.lane.b32.xlu0 %v2344, 114
    %v2665 = vpop.permute.xlu0 %2664
    %2666 = vrot.lane.b32.xlu0 %v2346, 114
    %v2667 = vpop.permute.xlu0 %2666
    %2668 = vrot.lane.b32.xlu0 %v2349, 114
    %v2669 = vpop.permute.xlu0 %2668
    %2670 = vrot.lane.b32.xlu0 %v2351, 114
    %v2671 = vpop.permute.xlu0 %2670
    %v2676 = vmul.f32 %v2663, %v2665
    %v2677 = vmul.f32 %v2663, %v2667
    %v2678 = vmul.f32 %v2663, %v2669
    %v2679 = vmul.f32 %v2663, %v2671
    %v2680 = vadd.f32 %v2656, %v2676
    %v2681 = vadd.f32 %v2657, %v2677
    %v2682 = vadd.f32 %v2658, %v2678
    %v2683 = vadd.f32 %v2659, %v2679
    %v2684 = vlaneseq
    %v2685 = vshrl.u32 %v2684, 7
    %v2686 = vsub.s32 6, %v2685
    %v2687 = vrot.slane %v1596, %v2686
    %2688 = vrot.lane.b32.xlu0 %v2344, 113
    %v2689 = vpop.permute.xlu0 %2688
    %2690 = vrot.lane.b32.xlu0 %v2346, 113
    %v2691 = vpop.permute.xlu0 %2690
    %2692 = vrot.lane.b32.xlu0 %v2349, 113
    %v2693 = vpop.permute.xlu0 %2692
    %2694 = vrot.lane.b32.xlu0 %v2351, 113
    %v2695 = vpop.permute.xlu0 %2694
    %v2700 = vmul.f32 %v2687, %v2689
    %v2701 = vmul.f32 %v2687, %v2691
    %v2702 = vmul.f32 %v2687, %v2693
    %v2703 = vmul.f32 %v2687, %v2695
    %v2704 = vadd.f32 %v2680, %v2700
    %v2705 = vadd.f32 %v2681, %v2701
    %v2706 = vadd.f32 %v2682, %v2702
    %v2707 = vadd.f32 %v2683, %v2703
    %v2708 = vmax.f32 %v2704, 0.0
    %v2709 = vmax.f32 %v2705, 0.0
    %v2710 = vmax.f32 %v2706, 0.0
    %v2711 = vmax.f32 %v2707, 0.0
    %v2712 = vadd.f32 %v97, %v2708
    %v2713 = vadd.f32 %v98, %v2709
    %v2714 = vadd.f32 %v99, %v2710
    %v2715 = vadd.f32 %v100, %v2711
    %2716 = vst.msk [vmem:[#allocation8] sm:$0xff] %vm101, %v2712
    %2717 = vst.msk [vmem:[#allocation8 + $0x8] sm:$0xff] %vm101, %v2713
    %2718 = vst.msk [vmem:[#allocation8 + $0x10] sm:$0xff] %vm101, %v2714
    %2719 = vst.msk [vmem:[#allocation8 + $0x18] sm:$0xff] %vm101, %v2715
    // Predicated region
    $region58: #{tpu_custom_call.1} parent=1 // pred_check
      _
    $region59: #{tpu_custom_call.1} parent=1 // pred_check_branch
      %2721 = sbr.rel (0) target = $region61
    $region60: #{tpu_custom_call.1} parent=1 // pred_region
      %s2723 = ssub.s32 512, 512
      %2724 = vsyncadd [#allocation4], %s2723
      %s2725 = sshll.u32 [#allocation8], 4
      %s2726 = int_to_ptr.vmem [resolvable:$true] %s2725
      %2731 = dma.vmem_to_hbm [thread:$0]  %s2726, 512, %s11, [#allocation4], 128, 128, 8
    $region61: #{tpu_custom_call.1} parent=1 // pred_fallthru
      _
    // Predicated region
    $region62: #{tpu_custom_call.1} parent=1 // pred_check
      _
    $region63: #{tpu_custom_call.1} parent=1 // pred_check_branch
      %2733 = sbr.rel (0) target = $region65
    $region64: #{tpu_custom_call.1} parent=1 // pred_region
      %2734 = dma.done [#allocation4], 512
    $region65: #{tpu_custom_call.1} parent=1 // pred_fallthru
      _
    %2735 = vsyncpa [#allocation3], 1
    %2736 = vsyncpa [#allocation6], 1
    %2737 = vsyncpa [#allocation4], 1

</llo_original>
